<compile_context>
chip_gen: v6e
topology: v6e:2x2x1
jax: 0.10.0
libtpu: 0.0.40
codegen_flags: <defaults>
</compile_context>

<pallas_src>
import jax
import jax.numpy as jnp
import numpy as np
from jax.experimental import pallas as pl
from jax.experimental.pallas import tpu as pltpu

IMG_DIM = (1, 28, 28)
FLATTENED_IMG_DIM = int(np.prod(IMG_DIM))   # 784
NUM_CLASSES = 10
PADDED_OUT = 128                            # lane-dense output slab (>= NUM_CLASSES)


def _round_up(x, m):
    return ((x + m - 1) // m) * m


def skip_mlp_kernel(x_ref, w1_ref, b1_ref, w2_ref, b2_ref, w3_ref, b3_ref, o_ref):
    """Fused forward pass over one batch tile.

    x_ref : (TB, 784)  f32   flattened input tile
    w1_ref: (784, 784) bf16  hidden_1 weight (in, out)
    b1_ref: (1, 784)   f32   hidden_1 bias
    w2_ref: (784, 784) bf16  hidden_2 weight (in, out)
    b2_ref: (1, 784)   f32   hidden_2 bias
    w3_ref: (784, 128) bf16  out weight, zero-padded 10 -> 128 columns
    b3_ref: (1, 128)   f32   out bias, zero-padded
    o_ref : (TB, 128)  f32   lane-dense logits slab
    """
    x_f32 = x_ref[...]                       # f32, used for the skip connection
    x_bf16 = x_f32.astype(jnp.bfloat16)      # matmul operand

    # hidden_1 + ReLU  (bf16 operands, f32 accumulate, f32 elementwise)
    h1 = jnp.dot(x_bf16, w1_ref[...], preferred_element_type=jnp.float32)
    h1 = jnp.maximum(h1 + b1_ref[...], 0.0)

    # hidden_2 + skip connection + ReLU
    h2 = jnp.dot(h1.astype(jnp.bfloat16), w2_ref[...],
                 preferred_element_type=jnp.float32)
    h2 = jnp.maximum(h2 + b2_ref[...] + x_f32, 0.0)

    # output projection (lane-dense 128-wide slab)
    logits = jnp.dot(h2.astype(jnp.bfloat16), w3_ref[...],
                     preferred_element_type=jnp.float32)
    o_ref[...] = (logits + b3_ref[...]).astype(o_ref.dtype)


def skip_connection_mlp(x, params, tile_b=256):
    """x: (B, 1, 28, 28).  Returns logits (B, NUM_CLASSES) in f32."""
    w1, b1, w2, b2, w3p, b3p = params
    B = x.shape[0]
    x_flat = x.reshape(B, -1).astype(jnp.float32)   # same as torch reshape(len(x), -1)

    # Batch tiling: pick a tile that is a multiple of 8 sublanes and pad B up to it.
    tb = min(tile_b, _round_up(B, 8))
    B_pad = _round_up(B, tb)
    if B_pad != B:
        x_flat = jnp.pad(x_flat, ((0, B_pad - B), (0, 0)))

    D = FLATTENED_IMG_DIM
    NP = w3p.shape[1]            # 128
    grid = (B_pad // tb,)

    flops = 2 * B_pad * D * (D + D + NP)
    bytes_accessed = ((w1.size + w2.size + w3p.size) * 2          # bf16 weights
                      + (b1.size + b2.size + b3p.size) * 4        # f32 biases
                      + x_flat.size * 4 + B_pad * NP * 4)         # f32 activations

    out = pl.pallas_call(
        skip_mlp_kernel,
        out_shape=jax.ShapeDtypeStruct((B_pad, NP), jnp.float32),
        grid=grid,
        in_specs=[
            pl.BlockSpec((tb, D), lambda i: (i, 0)),    # x tile follows the grid
            pl.BlockSpec((D, D), lambda i: (0, 0)),     # weights/biases: resident
            pl.BlockSpec((1, D), lambda i: (0, 0)),
            pl.BlockSpec((D, D), lambda i: (0, 0)),
            pl.BlockSpec((1, D), lambda i: (0, 0)),
            pl.BlockSpec((D, NP), lambda i: (0, 0)),
            pl.BlockSpec((1, NP), lambda i: (0, 0)),
        ],
        out_specs=pl.BlockSpec((tb, NP), lambda i: (i, 0)),
        compiler_params=pltpu.CompilerParams(
            dimension_semantics=("parallel",),          # megacore-friendly batch axis
            vmem_limit_bytes=24 << 20,                  # v7x-safe, plenty of headroom
        ),
        cost_estimate=pl.CostEstimate(
            flops=flops, transcendentals=0, bytes_accessed=bytes_accessed),
    )(x_flat, w1, b1, w2, b2, w3p, b3p)

    return out[:B, :NUM_CLASSES]


def init_params(key):
    """PyTorch-style nn.Linear init: U(-1/sqrt(fan_in), 1/sqrt(fan_in)).
    Weights stored (in_features, out_features) in bf16; biases in f32.
    The output layer is zero-padded from NUM_CLASSES to PADDED_OUT columns."""
    keys = jax.random.split(key, 6)

    def linear(kw, kb, fan_in, fan_out):
        bound = 1.0 / np.sqrt(fan_in)
        w = jax.random.uniform(kw, (fan_in, fan_out), jnp.float32, -bound, bound)
        b = jax.random.uniform(kb, (1, fan_out), jnp.float32, -bound, bound)
        return w, b

    D = FLATTENED_IMG_DIM
    w1, b1 = linear(keys[0], keys[1], D, D)
    w2, b2 = linear(keys[2], keys[3], D, D)
    w3, b3 = linear(keys[4], keys[5], D, NUM_CLASSES)

    # Lane-dense padding of the output projection (zeros do not change the math).
    w3p = jnp.pad(w3, ((0, 0), (0, PADDED_OUT - NUM_CLASSES)))
    b3p = jnp.pad(b3, ((0, 0), (0, PADDED_OUT - NUM_CLASSES)))

    return (w1.astype(jnp.bfloat16), b1,
            w2.astype(jnp.bfloat16), b2,
            w3p.astype(jnp.bfloat16), b3p)


def reference_forward(x, params):
    """Pure-JAX f32 reference (bf16 weights up-cast) for sanity check."""
    w1, b1, w2, b2, w3p, b3p = params
    w1 = w1.astype(jnp.float32)
    w2 = w2.astype(jnp.float32)
    w3 = w3p[:, :NUM_CLASSES].astype(jnp.float32)
    b3 = b3p[:, :NUM_CLASSES]
    xf = x.reshape(x.shape[0], -1).astype(jnp.float32)
    h1 = jnp.maximum(xf @ w1 + b1, 0.0)
    h2 = jnp.maximum(h1 @ w2 + b2 + xf, 0.0)
    return h2 @ w3 + b3


if __name__ == "__main__":
    key = jax.random.PRNGKey(0)
    k_x, k_p = jax.random.split(key)

    B = 2
    x = jax.random.normal(k_x, (B,) + IMG_DIM, dtype=jnp.float32)  # (2, 1, 28, 28)
    params = init_params(k_p)

    logits = skip_connection_mlp(x, params)
    jax.block_until_ready(logits)

    ref = reference_forward(x, params)
    # bf16 matmul operands -> loosened tolerance vs. f32 reference.
    np.testing.assert_allclose(np.asarray(logits), np.asarray(ref),
                               rtol=3e-2, atol=3e-2)

    assert logits.shape == (B, NUM_CLASSES)
    print("KERNEL_OK")
</pallas_src>

<mosaic_0001>
module attributes {stable_mosaic.version = 11 : i64} {
  func.func @skip_mlp_kernel(%arg0: i32, %arg1: memref<8x784xf32, #tpu.memory_space<vmem>>, %arg2: memref<784x784xbf16, #tpu.memory_space<vmem>>, %arg3: memref<1x784xf32, #tpu.memory_space<vmem>>, %arg4: memref<784x784xbf16, #tpu.memory_space<vmem>>, %arg5: memref<1x784xf32, #tpu.memory_space<vmem>>, %arg6: memref<784x128xbf16, #tpu.memory_space<vmem>>, %arg7: memref<1x128xf32, #tpu.memory_space<vmem>>, %arg8: memref<8x128xf32, #tpu.memory_space<vmem>>) attributes {dimension_semantics = [#tpu.dimension_semantics<parallel>], iteration_bounds = array<i64: 1>, scalar_prefetch = 0 : i64, scratch_operands = 0 : i64, tpu.core_type = #tpu.core_type<tc>, window_params = [{transform_indices = @transform_0, window_bounds = array<i64: 8, 784>}, {pipeline_mode = #tpu.pipeline_mode<synchronous>, transform_indices = @transform_1, window_bounds = array<i64: 784, 784>}, {pipeline_mode = #tpu.pipeline_mode<synchronous>, transform_indices = @transform_2, window_bounds = array<i64: 1, 784>}, {pipeline_mode = #tpu.pipeline_mode<synchronous>, transform_indices = @transform_3, window_bounds = array<i64: 784, 784>}, {pipeline_mode = #tpu.pipeline_mode<synchronous>, transform_indices = @transform_4, window_bounds = array<i64: 1, 784>}, {pipeline_mode = #tpu.pipeline_mode<synchronous>, transform_indices = @transform_5, window_bounds = array<i64: 784, 128>}, {pipeline_mode = #tpu.pipeline_mode<synchronous>, transform_indices = @transform_6, window_bounds = array<i64: 1, 128>}, {transform_indices = @transform_7, window_bounds = array<i64: 8, 128>}]} {
    %c0 = arith.constant 0 : index
    %c0_0 = arith.constant 0 : index
    %0 = vector.load %arg1[%c0, %c0_0] : memref<8x784xf32, #tpu.memory_space<vmem>>, vector<8x784xf32>
    %1 = arith.truncf %0 : vector<8x784xf32> to vector<8x784xbf16>
    %c0_1 = arith.constant 0 : index
    %c0_2 = arith.constant 0 : index
    %2 = vector.load %arg2[%c0_1, %c0_2] : memref<784x784xbf16, #tpu.memory_space<vmem>>, vector<784x784xbf16>
    %cst = arith.constant dense<0.000000e+00> : vector<8x784xf32>
    %3 = tpu.matmul %1, %2, %cst {dimension_numbers = #tpu.dot_dimension_numbers<[1], [0], [0], [1], [0, 0, 1, 1], [], []>} : vector<8x784xbf16>, vector<784x784xbf16>, vector<8x784xf32> -> vector<8x784xf32>
    %c0_3 = arith.constant 0 : index
    %c0_4 = arith.constant 0 : index
    %4 = vector.load %arg3[%c0_3, %c0_4] : memref<1x784xf32, #tpu.memory_space<vmem>>, vector<1x784xf32>
    %5 = vector.broadcast %4 : vector<1x784xf32> to vector<8x784xf32>
    %6 = arith.addf %3, %5 : vector<8x784xf32>
    %cst_5 = arith.constant 0.000000e+00 : f32
    %7 = vector.broadcast %cst_5 : f32 to vector<8x784xf32>
    %8 = arith.maximumf %6, %7 : vector<8x784xf32>
    %9 = arith.truncf %8 : vector<8x784xf32> to vector<8x784xbf16>
    %c0_6 = arith.constant 0 : index
    %c0_7 = arith.constant 0 : index
    %10 = vector.load %arg4[%c0_6, %c0_7] : memref<784x784xbf16, #tpu.memory_space<vmem>>, vector<784x784xbf16>
    %cst_8 = arith.constant dense<0.000000e+00> : vector<8x784xf32>
    %11 = tpu.matmul %9, %10, %cst_8 {dimension_numbers = #tpu.dot_dimension_numbers<[1], [0], [0], [1], [0, 0, 1, 1], [], []>} : vector<8x784xbf16>, vector<784x784xbf16>, vector<8x784xf32> -> vector<8x784xf32>
    %c0_9 = arith.constant 0 : index
    %c0_10 = arith.constant 0 : index
    %12 = vector.load %arg5[%c0_9, %c0_10] : memref<1x784xf32, #tpu.memory_space<vmem>>, vector<1x784xf32>
    %13 = vector.broadcast %12 : vector<1x784xf32> to vector<8x784xf32>
    %14 = arith.addf %11, %13 : vector<8x784xf32>
    %15 = arith.addf %14, %0 : vector<8x784xf32>
    %cst_11 = arith.constant 0.000000e+00 : f32
    %16 = vector.broadcast %cst_11 : f32 to vector<8x784xf32>
    %17 = arith.maximumf %15, %16 : vector<8x784xf32>
    %18 = arith.truncf %17 : vector<8x784xf32> to vector<8x784xbf16>
    %c0_12 = arith.constant 0 : index
    %c0_13 = arith.constant 0 : index
    %19 = vector.load %arg6[%c0_12, %c0_13] : memref<784x128xbf16, #tpu.memory_space<vmem>>, vector<784x128xbf16>
    %cst_14 = arith.constant dense<0.000000e+00> : vector<8x128xf32>
    %20 = tpu.matmul %18, %19, %cst_14 {dimension_numbers = #tpu.dot_dimension_numbers<[1], [0], [0], [1], [0, 0, 1, 1], [], []>} : vector<8x784xbf16>, vector<784x128xbf16>, vector<8x128xf32> -> vector<8x128xf32>
    %c0_15 = arith.constant 0 : index
    %c0_16 = arith.constant 0 : index
    %21 = vector.load %arg7[%c0_15, %c0_16] : memref<1x128xf32, #tpu.memory_space<vmem>>, vector<1x128xf32>
    %22 = vector.broadcast %21 : vector<1x128xf32> to vector<8x128xf32>
    %23 = arith.addf %20, %22 : vector<8x128xf32>
    %c0_17 = arith.constant 0 : index
    %c0_18 = arith.constant 0 : index
    %24 = vector.load %arg8[%c0_17, %c0_18] : memref<8x128xf32, #tpu.memory_space<vmem>>, vector<8x128xf32>
    tpu.vector_store %arg8[%c0_17, %c0_18], %23 {strides = array<i32>} : memref<8x128xf32, #tpu.memory_space<vmem>>, vector<8x128xf32>,
    return
  }
  func.func @transform_0(%arg0: i32) -> (i32, i32) {
    %c0_i32 = arith.constant 0 : i32
    %c0_i32_0 = arith.constant 0 : i32
    return %arg0, %c0_i32 : i32, i32
  }
  func.func @transform_1(%arg0: i32) -> (i32, i32) {
    %c0_i32 = arith.constant 0 : i32
    %c0_i32_0 = arith.constant 0 : i32
    %c0_i32_1 = arith.constant 0 : i32
    return %c0_i32, %c0_i32_0 : i32, i32
  }
  func.func @transform_2(%arg0: i32) -> (i32, i32) {
    %c0_i32 = arith.constant 0 : i32
    %c0_i32_0 = arith.constant 0 : i32
    %c0_i32_1 = arith.constant 0 : i32
    return %c0_i32, %c0_i32_0 : i32, i32
  }
  func.func @transform_3(%arg0: i32) -> (i32, i32) {
    %c0_i32 = arith.constant 0 : i32
    %c0_i32_0 = arith.constant 0 : i32
    %c0_i32_1 = arith.constant 0 : i32
    return %c0_i32, %c0_i32_0 : i32, i32
  }
  func.func @transform_4(%arg0: i32) -> (i32, i32) {
    %c0_i32 = arith.constant 0 : i32
    %c0_i32_0 = arith.constant 0 : i32
    %c0_i32_1 = arith.constant 0 : i32
    return %c0_i32, %c0_i32_0 : i32, i32
  }
  func.func @transform_5(%arg0: i32) -> (i32, i32) {
    %c0_i32 = arith.constant 0 : i32
    %c0_i32_0 = arith.constant 0 : i32
    %c0_i32_1 = arith.constant 0 : i32
    return %c0_i32, %c0_i32_0 : i32, i32
  }
  func.func @transform_6(%arg0: i32) -> (i32, i32) {
    %c0_i32 = arith.constant 0 : i32
    %c0_i32_0 = arith.constant 0 : i32
    %c0_i32_1 = arith.constant 0 : i32
    return %c0_i32, %c0_i32_0 : i32, i32
  }
  func.func @transform_7(%arg0: i32) -> (i32, i32) {
    %c0_i32 = arith.constant 0 : i32
    %c0_i32_0 = arith.constant 0 : i32
    return %arg0, %c0_i32 : i32, i32
  }
}

</mosaic_0001>

<llo_original>
// kernel: tpu_custom_call.1
$region0: #{tpu_custom_call.1}
  #allocation0 [shape = 'u32[]', space=smem, size = 0x4, offset = 0x4, fixed_abs, tag = 'smem constant byte address 0x4 - core index']
  #allocation1 [shape = 'u32[144,128]{1,0:T(1,128)}', space=vmem, size = 0x12000, scoped, tag = 'internal scratch']
  %s0 = inlined_call_operand.hbm [shape: f32[8,784], index: 0, kind: input, shape index: {}]
  %s1 = inlined_call_operand.hbm [shape: bf16[784,784], index: 1, kind: input, shape index: {}]
  %s2 = inlined_call_operand.hbm [shape: f32[1,784], index: 2, kind: input, shape index: {}]
  %s3 = inlined_call_operand.hbm [shape: bf16[784,784], index: 3, kind: input, shape index: {}]
  %s4 = inlined_call_operand.hbm [shape: f32[1,784], index: 4, kind: input, shape index: {}]
  %s5 = inlined_call_operand.hbm [shape: bf16[784,128], index: 5, kind: input, shape index: {}]
  %s6 = inlined_call_operand.hbm [shape: f32[1,128], index: 6, kind: input, shape index: {}]
  %s7 = inlined_call_operand.hbm [shape: f32[8,128], index: 7, kind: output, shape index: {}]
  %s8 = sld [smem:[#allocation0]]
  $region66: #{tpu_custom_call.1} parent=0
    _
  %s10 = ssub.s32 1, %s8
  %s11 = scalar_select 0, %s10, %s8
  $region1: #{tpu_custom_call.1} parent=0
    #allocation2 [shape = 'u8[28672]{0}', space=vmem, size = 0x7000, scoped, tag = 'input window, operand 0, single buffered']
    #allocation3 [shape = 's32[1]{0}', space=sflag, size = 0x4, scoped, tag = 'scoped memory for tpu_custom_call.1']
    #allocation4 [shape = 's32[1]{0}', space=sflag, size = 0x4, scoped, tag = 'scoped memory for tpu_custom_call.1']
    #allocation5 [shape = 'u8[1404928]{0}', space=vmem, size = 0x157000, scoped, tag = 'input window, operand 1, single buffered']
    #allocation6 [shape = 's32[1]{0}', space=sflag, size = 0x4, scoped, tag = 'scoped memory for tpu_custom_call.1']
    #allocation7 [shape = 'u8[3584]{0}', space=vmem, size = 0x1000, scoped, tag = 'input window, operand 2, single buffered']
    #allocation8 [shape = 'u8[1404928]{0}', space=vmem, size = 0x157000, scoped, tag = 'input window, operand 3, single buffered']
    #allocation9 [shape = 's32[1]{0}', space=sflag, size = 0x4, scoped, tag = 'scoped memory for tpu_custom_call.1']
    #allocation10 [shape = 'u8[3584]{0}', space=vmem, size = 0x1000, scoped, tag = 'input window, operand 4, single buffered']
    #allocation11 [shape = 'u8[200704]{0}', space=vmem, size = 0x31000, scoped, tag = 'input window, operand 5, single buffered']
    #allocation12 [shape = 's32[1]{0}', space=sflag, size = 0x4, scoped, tag = 'scoped memory for tpu_custom_call.1']
    #allocation13 [shape = 'u8[512]{0}', space=vmem, size = 0x400, scoped, tag = 'input window, operand 6, single buffered']
    #allocation14 [shape = 'u8[4096]{0}', space=vmem, size = 0x1000, scoped, tag = 'output window, operand 0, single buffered']
    %12 = vsyncpa [#allocation3], 0
    %13 = vsyncpa [#allocation6], 0
    %14 = vsyncpa [#allocation9], 0
    %15 = vsyncpa [#allocation12], 0
    %16 = vsyncpa [#allocation4], 0
    // Predicated region
    $region2: #{tpu_custom_call.1} parent=1 // pred_check
      _
    $region3: #{tpu_custom_call.1} parent=1 // pred_check_branch
      %18 = sbr.rel (0) target = $region5
    $region4: #{tpu_custom_call.1} parent=1 // pred_region
      %s20 = ssub.s32 896, 896
      %21 = vsyncadd [#allocation3], %s20
      %s23 = sshll.u32 [#allocation2], 4
      %s24 = int_to_ptr.vmem [resolvable:$true] %s23
      %26 = dma.hbm_to_vmem [thread:$0]  %s0, 896, %s24, [#allocation3]
    $region5: #{tpu_custom_call.1} parent=1 // pred_fallthru
      _
    // Predicated region
    $region6: #{tpu_custom_call.1} parent=1 // pred_check
      _
    $region7: #{tpu_custom_call.1} parent=1 // pred_check_branch
      %28 = sbr.rel (0) target = $region9
    $region8: #{tpu_custom_call.1} parent=1 // pred_region
      %s30 = ssub.s32 43904, 43904
      %31 = vsyncadd [#allocation6], %s30
      %s32 = sshll.u32 [#allocation5], 4
      %s33 = int_to_ptr.vmem [resolvable:$true] %s32
      %38 = dma.hbm_to_vmem [thread:$0]  %s1, 43904, %s33, [#allocation6], 448, 448, 28
    $region9: #{tpu_custom_call.1} parent=1 // pred_fallthru
      _
    // Predicated region
    $region10: #{tpu_custom_call.1} parent=1 // pred_check
      _
    $region11: #{tpu_custom_call.1} parent=1 // pred_check_branch
      %40 = sbr.rel (0) target = $region13
    $region12: #{tpu_custom_call.1} parent=1 // pred_region
      %s42 = ssub.s32 112, 112
      %43 = vsyncadd [#allocation6], %s42
      %s45 = sshll.u32 [#allocation7], 4
      %s46 = int_to_ptr.vmem [resolvable:$true] %s45
      %48 = dma.hbm_to_vmem [thread:$0]  %s2, 112, %s46, [#allocation6]
    $region13: #{tpu_custom_call.1} parent=1 // pred_fallthru
      _
    // Predicated region
    $region14: #{tpu_custom_call.1} parent=1 // pred_check
      _
    $region15: #{tpu_custom_call.1} parent=1 // pred_check_branch
      %50 = sbr.rel (0) target = $region17
    $region16: #{tpu_custom_call.1} parent=1 // pred_region
      %s52 = ssub.s32 43904, 43904
      %53 = vsyncadd [#allocation9], %s52
      %s54 = sshll.u32 [#allocation8], 4
      %s55 = int_to_ptr.vmem [resolvable:$true] %s54
      %60 = dma.hbm_to_vmem [thread:$0]  %s3, 43904, %s55, [#allocation9], 448, 448, 28
    $region17: #{tpu_custom_call.1} parent=1 // pred_fallthru
      _
    // Predicated region
    $region18: #{tpu_custom_call.1} parent=1 // pred_check
      _
    $region19: #{tpu_custom_call.1} parent=1 // pred_check_branch
      %62 = sbr.rel (0) target = $region21
    $region20: #{tpu_custom_call.1} parent=1 // pred_region
      %s64 = ssub.s32 112, 112
      %65 = vsyncadd [#allocation9], %s64
      %s67 = sshll.u32 [#allocation10], 4
      %s68 = int_to_ptr.vmem [resolvable:$true] %s67
      %70 = dma.hbm_to_vmem [thread:$0]  %s4, 112, %s68, [#allocation9]
    $region21: #{tpu_custom_call.1} parent=1 // pred_fallthru
      _
    // Predicated region
    $region22: #{tpu_custom_call.1} parent=1 // pred_check
      _
    $region23: #{tpu_custom_call.1} parent=1 // pred_check_branch
      %72 = sbr.rel (0) target = $region25
    $region24: #{tpu_custom_call.1} parent=1 // pred_region
      %s74 = ssub.s32 6272, 6272
      %75 = vsyncadd [#allocation12], %s74
      %s76 = sshll.u32 [#allocation11], 4
      %s77 = int_to_ptr.vmem [resolvable:$true] %s76
      %82 = dma.hbm_to_vmem [thread:$0]  %s5, 6272, %s77, [#allocation12], 64, 64, 4
    $region25: #{tpu_custom_call.1} parent=1 // pred_fallthru
      _
    // Predicated region
    $region26: #{tpu_custom_call.1} parent=1 // pred_check
      _
    $region27: #{tpu_custom_call.1} parent=1 // pred_check_branch
      %84 = sbr.rel (0) target = $region29
    $region28: #{tpu_custom_call.1} parent=1 // pred_region
      %s86 = ssub.s32 16, 16
      %87 = vsyncadd [#allocation12], %s86
      %s89 = sshll.u32 [#allocation13], 4
      %s90 = int_to_ptr.vmem [resolvable:$true] %s89
      %92 = dma.hbm_to_vmem [thread:$0]  %s6, 16, %s90, [#allocation12]
    $region29: #{tpu_custom_call.1} parent=1 // pred_fallthru
      _
    // Predicated region
    $region30: #{tpu_custom_call.1} parent=1 // pred_check
      _
    $region31: #{tpu_custom_call.1} parent=1 // pred_check_branch
      %94 = sbr.rel (0) target = $region33
    $region32: #{tpu_custom_call.1} parent=1 // pred_region
      %95 = dma.done [#allocation3], 896
    $region33: #{tpu_custom_call.1} parent=1 // pred_fallthru
      _
    // Predicated region
    $region34: #{tpu_custom_call.1} parent=1 // pred_check
      _
    $region35: #{tpu_custom_call.1} parent=1 // pred_check_branch
      %97 = sbr.rel (0) target = $region37
    $region36: #{tpu_custom_call.1} parent=1 // pred_region
      %98 = dma.done [#allocation6], 43904
    $region37: #{tpu_custom_call.1} parent=1 // pred_fallthru
      _
    // Predicated region
    $region38: #{tpu_custom_call.1} parent=1 // pred_check
      _
    $region39: #{tpu_custom_call.1} parent=1 // pred_check_branch
      %100 = sbr.rel (0) target = $region41
    $region40: #{tpu_custom_call.1} parent=1 // pred_region
      %101 = dma.done [#allocation6], 112
    $region41: #{tpu_custom_call.1} parent=1 // pred_fallthru
      _
    // Predicated region
    $region42: #{tpu_custom_call.1} parent=1 // pred_check
      _
    $region43: #{tpu_custom_call.1} parent=1 // pred_check_branch
      %103 = sbr.rel (0) target = $region45
    $region44: #{tpu_custom_call.1} parent=1 // pred_region
      %104 = dma.done [#allocation9], 43904
    $region45: #{tpu_custom_call.1} parent=1 // pred_fallthru
      _
    // Predicated region
    $region46: #{tpu_custom_call.1} parent=1 // pred_check
      _
    $region47: #{tpu_custom_call.1} parent=1 // pred_check_branch
      %106 = sbr.rel (0) target = $region49
    $region48: #{tpu_custom_call.1} parent=1 // pred_region
      %107 = dma.done [#allocation9], 112
    $region49: #{tpu_custom_call.1} parent=1 // pred_fallthru
      _
    // Predicated region
    $region50: #{tpu_custom_call.1} parent=1 // pred_check
      _
    $region51: #{tpu_custom_call.1} parent=1 // pred_check_branch
      %109 = sbr.rel (0) target = $region53
    $region52: #{tpu_custom_call.1} parent=1 // pred_region
      %110 = dma.done [#allocation12], 6272
    $region53: #{tpu_custom_call.1} parent=1 // pred_fallthru
      _
    // Predicated region
    $region54: #{tpu_custom_call.1} parent=1 // pred_check
      _
    $region55: #{tpu_custom_call.1} parent=1 // pred_check_branch
      %112 = sbr.rel (0) target = $region57
    $region56: #{tpu_custom_call.1} parent=1 // pred_region
      %113 = dma.done [#allocation12], 16
    $region57: #{tpu_custom_call.1} parent=1 // pred_fallthru
      _
    %v115 = vld [vmem:[#allocation2] sm:$0xff]
    %v116 = vld [vmem:[#allocation2 + $0x8] sm:$0xff]
    %v117 = vld [vmem:[#allocation2 + $0x10] sm:$0xff]
    %v118 = vld [vmem:[#allocation2 + $0x18] sm:$0xff]
    %v119 = vld [vmem:[#allocation2 + $0x20] sm:$0xff]
    %v120 = vld [vmem:[#allocation2 + $0x28] sm:$0xff]
    %v121 = vld [vmem:[#allocation2 + $0x30] sm:$0xff]
    %v122 = vpack.c.bf16 %v115, %v115
    %v123 = vpack.c.bf16 %v116, %v116
    %v124 = vpack.c.bf16 %v117, %v117
    %v125 = vpack.c.bf16 %v118, %v118
    %v126 = vpack.c.bf16 %v119, %v119
    %v127 = vpack.c.bf16 %v120, %v120
    %v128 = vpack.c.bf16 %v121, %v121
    %v129 = vld [vmem:[#allocation5] sm:$0xff]
    %v130 = vld [vmem:[#allocation5 + $0x8] sm:$0xff]
    %v131 = vld [vmem:[#allocation5 + $0x10] sm:$0xff]
    %v132 = vld [vmem:[#allocation5 + $0x18] sm:$0xf]
    %v133 = vld [vmem:[#allocation5 + $0x1c] sm:$0xff]
    %v134 = vld [vmem:[#allocation5 + $0x24] sm:$0xff]
    %v135 = vld [vmem:[#allocation5 + $0x2c] sm:$0xff]
    %v136 = vld [vmem:[#allocation5 + $0x34] sm:$0xf]
    %v137 = vld [vmem:[#allocation5 + $0x38] sm:$0xff]
    %v138 = vld [vmem:[#allocation5 + $0x40] sm:$0xff]
    %v139 = vld [vmem:[#allocation5 + $0x48] sm:$0xff]
    %v140 = vld [vmem:[#allocation5 + $0x50] sm:$0xf]
    %v141 = vld [vmem:[#allocation5 + $0x54] sm:$0xff]
    %v142 = vld [vmem:[#allocation5 + $0x5c] sm:$0xff]
    %v143 = vld [vmem:[#allocation5 + $0x64] sm:$0xff]
    %v144 = vld [vmem:[#allocation5 + $0x6c] sm:$0xf]
    %v145 = vld [vmem:[#allocation5 + $0x70] sm:$0xff]
    %v146 = vld [vmem:[#allocation5 + $0x78] sm:$0xff]
    %v147 = vld [vmem:[#allocation5 + $0x80] sm:$0xff]
    %v148 = vld [vmem:[#allocation5 + $0x88] sm:$0xf]
    %v149 = vld [vmem:[#allocation5 + $0x8c] sm:$0xff]
    %v150 = vld [vmem:[#allocation5 + $0x94] sm:$0xff]
    %v151 = vld [vmem:[#allocation5 + $0x9c] sm:$0xff]
    %v152 = vld [vmem:[#allocation5 + $0xa4] sm:$0xf]
    %v153 = vld [vmem:[#allocation5 + $0xa8] sm:$0xff]
    %v154 = vld [vmem:[#allocation5 + $0xb0] sm:$0xff]
    %v155 = vld [vmem:[#allocation5 + $0xb8] sm:$0xff]
    %v156 = vld [vmem:[#allocation5 + $0xc0] sm:$0xf]
    %v157 = vld [vmem:[#allocation5 + $0xc4] sm:$0xff]
    %v158 = vld [vmem:[#allocation5 + $0xcc] sm:$0xff]
    %v159 = vld [vmem:[#allocation5 + $0xd4] sm:$0xff]
    %v160 = vld [vmem:[#allocation5 + $0xdc] sm:$0xf]
    %v161 = vld [vmem:[#allocation5 + $0xe0] sm:$0xff]
    %v162 = vld [vmem:[#allocation5 + $0xe8] sm:$0xff]
    %v163 = vld [vmem:[#allocation5 + $0xf0] sm:$0xff]
    %v164 = vld [vmem:[#allocation5 + $0xf8] sm:$0xf]
    %v165 = vld [vmem:[#allocation5 + $0xfc] sm:$0xff]
    %v166 = vld [vmem:[#allocation5 + $0x104] sm:$0xff]
    %v167 = vld [vmem:[#allocation5 + $0x10c] sm:$0xff]
    %v168 = vld [vmem:[#allocation5 + $0x114] sm:$0xf]
    %v169 = vld [vmem:[#allocation5 + $0x118] sm:$0xff]
    %v170 = vld [vmem:[#allocation5 + $0x120] sm:$0xff]
    %v171 = vld [vmem:[#allocation5 + $0x128] sm:$0xff]
    %v172 = vld [vmem:[#allocation5 + $0x130] sm:$0xf]
    %v173 = vld [vmem:[#allocation5 + $0x134] sm:$0xff]
    %v174 = vld [vmem:[#allocation5 + $0x13c] sm:$0xff]
    %v175 = vld [vmem:[#allocation5 + $0x144] sm:$0xff]
    %v176 = vld [vmem:[#allocation5 + $0x14c] sm:$0xf]
    %v177 = vld [vmem:[#allocation5 + $0x150] sm:$0xff]
    %v178 = vld [vmem:[#allocation5 + $0x158] sm:$0xff]
    %v179 = vld [vmem:[#allocation5 + $0x160] sm:$0xff]
    %v180 = vld [vmem:[#allocation5 + $0x168] sm:$0xf]
    %v181 = vld [vmem:[#allocation5 + $0x16c] sm:$0xff]
    %v182 = vld [vmem:[#allocation5 + $0x174] sm:$0xff]
    %v183 = vld [vmem:[#allocation5 + $0x17c] sm:$0xff]
    %v184 = vld [vmem:[#allocation5 + $0x184] sm:$0xf]
    %v185 = vld [vmem:[#allocation5 + $0x188] sm:$0xff]
    %v186 = vld [vmem:[#allocation5 + $0x190] sm:$0xff]
    %v187 = vld [vmem:[#allocation5 + $0x198] sm:$0xff]
    %v188 = vld [vmem:[#allocation5 + $0x1a0] sm:$0xf]
    %v189 = vld [vmem:[#allocation5 + $0x1a4] sm:$0xff]
    %v190 = vld [vmem:[#allocation5 + $0x1ac] sm:$0xff]
    %v191 = vld [vmem:[#allocation5 + $0x1b4] sm:$0xff]
    %v192 = vld [vmem:[#allocation5 + $0x1bc] sm:$0xf]
    %v193 = vld [vmem:[#allocation5 + $0x1c0] sm:$0xff]
    %v194 = vld [vmem:[#allocation5 + $0x1c8] sm:$0xff]
    %v195 = vld [vmem:[#allocation5 + $0x1d0] sm:$0xff]
    %v196 = vld [vmem:[#allocation5 + $0x1d8] sm:$0xf]
    %v197 = vld [vmem:[#allocation5 + $0x1dc] sm:$0xff]
    %v198 = vld [vmem:[#allocation5 + $0x1e4] sm:$0xff]
    %v199 = vld [vmem:[#allocation5 + $0x1ec] sm:$0xff]
    %v200 = vld [vmem:[#allocation5 + $0x1f4] sm:$0xf]
    %v201 = vld [vmem:[#allocation5 + $0x1f8] sm:$0xff]
    %v202 = vld [vmem:[#allocation5 + $0x200] sm:$0xff]
    %v203 = vld [vmem:[#allocation5 + $0x208] sm:$0xff]
    %v204 = vld [vmem:[#allocation5 + $0x210] sm:$0xf]
    %v205 = vld [vmem:[#allocation5 + $0x214] sm:$0xff]
    %v206 = vld [vmem:[#allocation5 + $0x21c] sm:$0xff]
    %v207 = vld [vmem:[#allocation5 + $0x224] sm:$0xff]
    %v208 = vld [vmem:[#allocation5 + $0x22c] sm:$0xf]
    %v209 = vld [vmem:[#allocation5 + $0x230] sm:$0xff]
    %v210 = vld [vmem:[#allocation5 + $0x238] sm:$0xff]
    %v211 = vld [vmem:[#allocation5 + $0x240] sm:$0xff]
    %v212 = vld [vmem:[#allocation5 + $0x248] sm:$0xf]
    %v213 = vld [vmem:[#allocation5 + $0x24c] sm:$0xff]
    %v214 = vld [vmem:[#allocation5 + $0x254] sm:$0xff]
    %v215 = vld [vmem:[#allocation5 + $0x25c] sm:$0xff]
    %v216 = vld [vmem:[#allocation5 + $0x264] sm:$0xf]
    %v217 = vld [vmem:[#allocation5 + $0x268] sm:$0xff]
    %v218 = vld [vmem:[#allocation5 + $0x270] sm:$0xff]
    %v219 = vld [vmem:[#allocation5 + $0x278] sm:$0xff]
    %v220 = vld [vmem:[#allocation5 + $0x280] sm:$0xf]
    %v221 = vld [vmem:[#allocation5 + $0x284] sm:$0xff]
    %v222 = vld [vmem:[#allocation5 + $0x28c] sm:$0xff]
    %v223 = vld [vmem:[#allocation5 + $0x294] sm:$0xff]
    %v224 = vld [vmem:[#allocation5 + $0x29c] sm:$0xf]
    %v225 = vld [vmem:[#allocation5 + $0x2a0] sm:$0xff]
    %v226 = vld [vmem:[#allocation5 + $0x2a8] sm:$0xff]
    %v227 = vld [vmem:[#allocation5 + $0x2b0] sm:$0xff]
    %v228 = vld [vmem:[#allocation5 + $0x2b8] sm:$0xf]
    %v229 = vld [vmem:[#allocation5 + $0x2bc] sm:$0xff]
    %v230 = vld [vmem:[#allocation5 + $0x2c4] sm:$0xff]
    %v231 = vld [vmem:[#allocation5 + $0x2cc] sm:$0xff]
    %v232 = vld [vmem:[#allocation5 + $0x2d4] sm:$0xf]
    %v233 = vld [vmem:[#allocation5 + $0x2d8] sm:$0xff]
    %v234 = vld [vmem:[#allocation5 + $0x2e0] sm:$0xff]
    %v235 = vld [vmem:[#allocation5 + $0x2e8] sm:$0xff]
    %v236 = vld [vmem:[#allocation5 + $0x2f0] sm:$0xf]
    %v237 = vld [vmem:[#allocation5 + $0x2f4] sm:$0xff]
    %v238 = vld [vmem:[#allocation5 + $0x2fc] sm:$0xff]
    %v239 = vld [vmem:[#allocation5 + $0x304] sm:$0xff]
    %v240 = vld [vmem:[#allocation5 + $0x30c] sm:$0xf]
    %v241 = vld [vmem:[#allocation5 + $0x310] sm:$0xff]
    %v242 = vld [vmem:[#allocation5 + $0x318] sm:$0xff]
    %v243 = vld [vmem:[#allocation5 + $0x320] sm:$0xff]
    %v244 = vld [vmem:[#allocation5 + $0x328] sm:$0xf]
    %v245 = vld [vmem:[#allocation5 + $0x32c] sm:$0xff]
    %v246 = vld [vmem:[#allocation5 + $0x334] sm:$0xff]
    %v247 = vld [vmem:[#allocation5 + $0x33c] sm:$0xff]
    %v248 = vld [vmem:[#allocation5 + $0x344] sm:$0xf]
    %v249 = vld [vmem:[#allocation5 + $0x348] sm:$0xff]
    %v250 = vld [vmem:[#allocation5 + $0x350] sm:$0xff]
    %v251 = vld [vmem:[#allocation5 + $0x358] sm:$0xff]
    %v252 = vld [vmem:[#allocation5 + $0x360] sm:$0xf]
    %v253 = vld [vmem:[#allocation5 + $0x364] sm:$0xff]
    %v254 = vld [vmem:[#allocation5 + $0x36c] sm:$0xff]
    %v255 = vld [vmem:[#allocation5 + $0x374] sm:$0xff]
    %v256 = vld [vmem:[#allocation5 + $0x37c] sm:$0xf]
    %v257 = vld [vmem:[#allocation5 + $0x380] sm:$0xff]
    %v258 = vld [vmem:[#allocation5 + $0x388] sm:$0xff]
    %v259 = vld [vmem:[#allocation5 + $0x390] sm:$0xff]
    %v260 = vld [vmem:[#allocation5 + $0x398] sm:$0xf]
    %v261 = vld [vmem:[#allocation5 + $0x39c] sm:$0xff]
    %v262 = vld [vmem:[#allocation5 + $0x3a4] sm:$0xff]
    %v263 = vld [vmem:[#allocation5 + $0x3ac] sm:$0xff]
    %v264 = vld [vmem:[#allocation5 + $0x3b4] sm:$0xf]
    %v265 = vld [vmem:[#allocation5 + $0x3b8] sm:$0xff]
    %v266 = vld [vmem:[#allocation5 + $0x3c0] sm:$0xff]
    %v267 = vld [vmem:[#allocation5 + $0x3c8] sm:$0xff]
    %v268 = vld [vmem:[#allocation5 + $0x3d0] sm:$0xf]
    %v269 = vld [vmem:[#allocation5 + $0x3d4] sm:$0xff]
    %v270 = vld [vmem:[#allocation5 + $0x3dc] sm:$0xff]
    %v271 = vld [vmem:[#allocation5 + $0x3e4] sm:$0xff]
    %v272 = vld [vmem:[#allocation5 + $0x3ec] sm:$0xf]
    %v273 = vld [vmem:[#allocation5 + $0x3f0] sm:$0xff]
    %v274 = vld [vmem:[#allocation5 + $0x3f8] sm:$0xff]
    %v275 = vld [vmem:[#allocation5 + $0x400] sm:$0xff]
    %v276 = vld [vmem:[#allocation5 + $0x408] sm:$0xf]
    %v277 = vld [vmem:[#allocation5 + $0x40c] sm:$0xff]
    %v278 = vld [vmem:[#allocation5 + $0x414] sm:$0xff]
    %v279 = vld [vmem:[#allocation5 + $0x41c] sm:$0xff]
    %v280 = vld [vmem:[#allocation5 + $0x424] sm:$0xf]
    %v281 = vld [vmem:[#allocation5 + $0x428] sm:$0xff]
    %v282 = vld [vmem:[#allocation5 + $0x430] sm:$0xff]
    %v283 = vld [vmem:[#allocation5 + $0x438] sm:$0xff]
    %v284 = vld [vmem:[#allocation5 + $0x440] sm:$0xf]
    %v285 = vld [vmem:[#allocation5 + $0x444] sm:$0xff]
    %v286 = vld [vmem:[#allocation5 + $0x44c] sm:$0xff]
    %v287 = vld [vmem:[#allocation5 + $0x454] sm:$0xff]
    %v288 = vld [vmem:[#allocation5 + $0x45c] sm:$0xf]
    %v289 = vld [vmem:[#allocation5 + $0x460] sm:$0xff]
    %v290 = vld [vmem:[#allocation5 + $0x468] sm:$0xff]
    %v291 = vld [vmem:[#allocation5 + $0x470] sm:$0xff]
    %v292 = vld [vmem:[#allocation5 + $0x478] sm:$0xf]
    %v293 = vld [vmem:[#allocation5 + $0x47c] sm:$0xff]
    %v294 = vld [vmem:[#allocation5 + $0x484] sm:$0xff]
    %v295 = vld [vmem:[#allocation5 + $0x48c] sm:$0xff]
    %v296 = vld [vmem:[#allocation5 + $0x494] sm:$0xf]
    %v297 = vld [vmem:[#allocation5 + $0x498] sm:$0xff]
    %v298 = vld [vmem:[#allocation5 + $0x4a0] sm:$0xff]
    %v299 = vld [vmem:[#allocation5 + $0x4a8] sm:$0xff]
    %v300 = vld [vmem:[#allocation5 + $0x4b0] sm:$0xf]
    %v301 = vld [vmem:[#allocation5 + $0x4b4] sm:$0xff]
    %v302 = vld [vmem:[#allocation5 + $0x4bc] sm:$0xff]
    %v303 = vld [vmem:[#allocation5 + $0x4c4] sm:$0xff]
    %v304 = vld [vmem:[#allocation5 + $0x4cc] sm:$0xf]
    %v305 = vld [vmem:[#allocation5 + $0x4d0] sm:$0xff]
    %v306 = vld [vmem:[#allocation5 + $0x4d8] sm:$0xff]
    %v307 = vld [vmem:[#allocation5 + $0x4e0] sm:$0xff]
    %v308 = vld [vmem:[#allocation5 + $0x4e8] sm:$0xf]
    %v309 = vld [vmem:[#allocation5 + $0x4ec] sm:$0xff]
    %v310 = vld [vmem:[#allocation5 + $0x4f4] sm:$0xff]
    %v311 = vld [vmem:[#allocation5 + $0x4fc] sm:$0xff]
    %v312 = vld [vmem:[#allocation5 + $0x504] sm:$0xf]
    %v313 = vld [vmem:[#allocation5 + $0x508] sm:$0xff]
    %v314 = vld [vmem:[#allocation5 + $0x510] sm:$0xff]
    %v315 = vld [vmem:[#allocation5 + $0x518] sm:$0xff]
    %v316 = vld [vmem:[#allocation5 + $0x520] sm:$0xf]
    %v317 = vld [vmem:[#allocation5 + $0x524] sm:$0xff]
    %v318 = vld [vmem:[#allocation5 + $0x52c] sm:$0xff]
    %v319 = vld [vmem:[#allocation5 + $0x534] sm:$0xff]
    %v320 = vld [vmem:[#allocation5 + $0x53c] sm:$0xf]
    %v321 = vld [vmem:[#allocation5 + $0x540] sm:$0xff]
    %v322 = vld [vmem:[#allocation5 + $0x548] sm:$0xff]
    %v323 = vld [vmem:[#allocation5 + $0x550] sm:$0xff]
    %v324 = vld [vmem:[#allocation5 + $0x558] sm:$0xf]
    %v325 = vld [vmem:[#allocation5 + $0x55c] sm:$0xff]
    %v326 = vld [vmem:[#allocation5 + $0x564] sm:$0xff]
    %v327 = vld [vmem:[#allocation5 + $0x56c] sm:$0xff]
    %v328 = vld [vmem:[#allocation5 + $0x574] sm:$0xf]
    %v329 = vld [vmem:[#allocation5 + $0x578] sm:$0xff]
    %v330 = vld [vmem:[#allocation5 + $0x580] sm:$0xff]
    %v331 = vld [vmem:[#allocation5 + $0x588] sm:$0xff]
    %v332 = vld [vmem:[#allocation5 + $0x590] sm:$0xf]
    %v333 = vld [vmem:[#allocation5 + $0x594] sm:$0xff]
    %v334 = vld [vmem:[#allocation5 + $0x59c] sm:$0xff]
    %v335 = vld [vmem:[#allocation5 + $0x5a4] sm:$0xff]
    %v336 = vld [vmem:[#allocation5 + $0x5ac] sm:$0xf]
    %v337 = vld [vmem:[#allocation5 + $0x5b0] sm:$0xff]
    %v338 = vld [vmem:[#allocation5 + $0x5b8] sm:$0xff]
    %v339 = vld [vmem:[#allocation5 + $0x5c0] sm:$0xff]
    %v340 = vld [vmem:[#allocation5 + $0x5c8] sm:$0xf]
    %v341 = vld [vmem:[#allocation5 + $0x5cc] sm:$0xff]
    %v342 = vld [vmem:[#allocation5 + $0x5d4] sm:$0xff]
    %v343 = vld [vmem:[#allocation5 + $0x5dc] sm:$0xff]
    %v344 = vld [vmem:[#allocation5 + $0x5e4] sm:$0xf]
    %v345 = vld [vmem:[#allocation5 + $0x5e8] sm:$0xff]
    %v346 = vld [vmem:[#allocation5 + $0x5f0] sm:$0xff]
    %v347 = vld [vmem:[#allocation5 + $0x5f8] sm:$0xff]
    %v348 = vld [vmem:[#allocation5 + $0x600] sm:$0xf]
    %v349 = vld [vmem:[#allocation5 + $0x604] sm:$0xff]
    %v350 = vld [vmem:[#allocation5 + $0x60c] sm:$0xff]
    %v351 = vld [vmem:[#allocation5 + $0x614] sm:$0xff]
    %v352 = vld [vmem:[#allocation5 + $0x61c] sm:$0xf]
    %v353 = vld [vmem:[#allocation5 + $0x620] sm:$0xff]
    %v354 = vld [vmem:[#allocation5 + $0x628] sm:$0xff]
    %v355 = vld [vmem:[#allocation5 + $0x630] sm:$0xff]
    %v356 = vld [vmem:[#allocation5 + $0x638] sm:$0xf]
    %v357 = vld [vmem:[#allocation5 + $0x63c] sm:$0xff]
    %v358 = vld [vmem:[#allocation5 + $0x644] sm:$0xff]
    %v359 = vld [vmem:[#allocation5 + $0x64c] sm:$0xff]
    %v360 = vld [vmem:[#allocation5 + $0x654] sm:$0xf]
    %v361 = vld [vmem:[#allocation5 + $0x658] sm:$0xff]
    %v362 = vld [vmem:[#allocation5 + $0x660] sm:$0xff]
    %v363 = vld [vmem:[#allocation5 + $0x668] sm:$0xff]
    %v364 = vld [vmem:[#allocation5 + $0x670] sm:$0xf]
    %v365 = vld [vmem:[#allocation5 + $0x674] sm:$0xff]
    %v366 = vld [vmem:[#allocation5 + $0x67c] sm:$0xff]
    %v367 = vld [vmem:[#allocation5 + $0x684] sm:$0xff]
    %v368 = vld [vmem:[#allocation5 + $0x68c] sm:$0xf]
    %v369 = vld [vmem:[#allocation5 + $0x690] sm:$0xff]
    %v370 = vld [vmem:[#allocation5 + $0x698] sm:$0xff]
    %v371 = vld [vmem:[#allocation5 + $0x6a0] sm:$0xff]
    %v372 = vld [vmem:[#allocation5 + $0x6a8] sm:$0xf]
    %v373 = vld [vmem:[#allocation5 + $0x6ac] sm:$0xff]
    %v374 = vld [vmem:[#allocation5 + $0x6b4] sm:$0xff]
    %v375 = vld [vmem:[#allocation5 + $0x6bc] sm:$0xff]
    %v376 = vld [vmem:[#allocation5 + $0x6c4] sm:$0xf]
    %v377 = vld [vmem:[#allocation5 + $0x6c8] sm:$0xff]
    %v378 = vld [vmem:[#allocation5 + $0x6d0] sm:$0xff]
    %v379 = vld [vmem:[#allocation5 + $0x6d8] sm:$0xff]
    %v380 = vld [vmem:[#allocation5 + $0x6e0] sm:$0xf]
    %v381 = vld [vmem:[#allocation5 + $0x6e4] sm:$0xff]
    %v382 = vld [vmem:[#allocation5 + $0x6ec] sm:$0xff]
    %v383 = vld [vmem:[#allocation5 + $0x6f4] sm:$0xff]
    %v384 = vld [vmem:[#allocation5 + $0x6fc] sm:$0xf]
    %v385 = vld [vmem:[#allocation5 + $0x700] sm:$0xff]
    %v386 = vld [vmem:[#allocation5 + $0x708] sm:$0xff]
    %v387 = vld [vmem:[#allocation5 + $0x710] sm:$0xff]
    %v388 = vld [vmem:[#allocation5 + $0x718] sm:$0xf]
    %v389 = vld [vmem:[#allocation5 + $0x71c] sm:$0xff]
    %v390 = vld [vmem:[#allocation5 + $0x724] sm:$0xff]
    %v391 = vld [vmem:[#allocation5 + $0x72c] sm:$0xff]
    %v392 = vld [vmem:[#allocation5 + $0x734] sm:$0xf]
    %v393 = vld [vmem:[#allocation5 + $0x738] sm:$0xff]
    %v394 = vld [vmem:[#allocation5 + $0x740] sm:$0xff]
    %v395 = vld [vmem:[#allocation5 + $0x748] sm:$0xff]
    %v396 = vld [vmem:[#allocation5 + $0x750] sm:$0xf]
    %v397 = vld [vmem:[#allocation5 + $0x754] sm:$0xff]
    %v398 = vld [vmem:[#allocation5 + $0x75c] sm:$0xff]
    %v399 = vld [vmem:[#allocation5 + $0x764] sm:$0xff]
    %v400 = vld [vmem:[#allocation5 + $0x76c] sm:$0xf]
    %v401 = vld [vmem:[#allocation5 + $0x770] sm:$0xff]
    %v402 = vld [vmem:[#allocation5 + $0x778] sm:$0xff]
    %v403 = vld [vmem:[#allocation5 + $0x780] sm:$0xff]
    %v404 = vld [vmem:[#allocation5 + $0x788] sm:$0xf]
    %v405 = vld [vmem:[#allocation5 + $0x78c] sm:$0xff]
    %v406 = vld [vmem:[#allocation5 + $0x794] sm:$0xff]
    %v407 = vld [vmem:[#allocation5 + $0x79c] sm:$0xff]
    %v408 = vld [vmem:[#allocation5 + $0x7a4] sm:$0xf]
    %v409 = vld [vmem:[#allocation5 + $0x7a8] sm:$0xff]
    %v410 = vld [vmem:[#allocation5 + $0x7b0] sm:$0xff]
    %v411 = vld [vmem:[#allocation5 + $0x7b8] sm:$0xff]
    %v412 = vld [vmem:[#allocation5 + $0x7c0] sm:$0xf]
    %v413 = vld [vmem:[#allocation5 + $0x7c4] sm:$0xff]
    %v414 = vld [vmem:[#allocation5 + $0x7cc] sm:$0xff]
    %v415 = vld [vmem:[#allocation5 + $0x7d4] sm:$0xff]
    %v416 = vld [vmem:[#allocation5 + $0x7dc] sm:$0xf]
    %v417 = vld [vmem:[#allocation5 + $0x7e0] sm:$0xff]
    %v418 = vld [vmem:[#allocation5 + $0x7e8] sm:$0xff]
    %v419 = vld [vmem:[#allocation5 + $0x7f0] sm:$0xff]
    %v420 = vld [vmem:[#allocation5 + $0x7f8] sm:$0xf]
    %v421 = vld [vmem:[#allocation5 + $0x7fc] sm:$0xff]
    %v422 = vld [vmem:[#allocation5 + $0x804] sm:$0xff]
    %v423 = vld [vmem:[#allocation5 + $0x80c] sm:$0xff]
    %v424 = vld [vmem:[#allocation5 + $0x814] sm:$0xf]
    %v425 = vld [vmem:[#allocation5 + $0x818] sm:$0xff]
    %v426 = vld [vmem:[#allocation5 + $0x820] sm:$0xff]
    %v427 = vld [vmem:[#allocation5 + $0x828] sm:$0xff]
    %v428 = vld [vmem:[#allocation5 + $0x830] sm:$0xf]
    %v429 = vld [vmem:[#allocation5 + $0x834] sm:$0xff]
    %v430 = vld [vmem:[#allocation5 + $0x83c] sm:$0xff]
    %v431 = vld [vmem:[#allocation5 + $0x844] sm:$0xff]
    %v432 = vld [vmem:[#allocation5 + $0x84c] sm:$0xf]
    %v433 = vld [vmem:[#allocation5 + $0x850] sm:$0xff]
    %v434 = vld [vmem:[#allocation5 + $0x858] sm:$0xff]
    %v435 = vld [vmem:[#allocation5 + $0x860] sm:$0xff]
    %v436 = vld [vmem:[#allocation5 + $0x868] sm:$0xf]
    %v437 = vld [vmem:[#allocation5 + $0x86c] sm:$0xff]
    %v438 = vld [vmem:[#allocation5 + $0x874] sm:$0xff]
    %v439 = vld [vmem:[#allocation5 + $0x87c] sm:$0xff]
    %v440 = vld [vmem:[#allocation5 + $0x884] sm:$0xf]
    %v441 = vld [vmem:[#allocation5 + $0x888] sm:$0xff]
    %v442 = vld [vmem:[#allocation5 + $0x890] sm:$0xff]
    %v443 = vld [vmem:[#allocation5 + $0x898] sm:$0xff]
    %v444 = vld [vmem:[#allocation5 + $0x8a0] sm:$0xf]
    %v445 = vld [vmem:[#allocation5 + $0x8a4] sm:$0xff]
    %v446 = vld [vmem:[#allocation5 + $0x8ac] sm:$0xff]
    %v447 = vld [vmem:[#allocation5 + $0x8b4] sm:$0xff]
    %v448 = vld [vmem:[#allocation5 + $0x8bc] sm:$0xf]
    %v449 = vld [vmem:[#allocation5 + $0x8c0] sm:$0xff]
    %v450 = vld [vmem:[#allocation5 + $0x8c8] sm:$0xff]
    %v451 = vld [vmem:[#allocation5 + $0x8d0] sm:$0xff]
    %v452 = vld [vmem:[#allocation5 + $0x8d8] sm:$0xf]
    %v453 = vld [vmem:[#allocation5 + $0x8dc] sm:$0xff]
    %v454 = vld [vmem:[#allocation5 + $0x8e4] sm:$0xff]
    %v455 = vld [vmem:[#allocation5 + $0x8ec] sm:$0xff]
    %v456 = vld [vmem:[#allocation5 + $0x8f4] sm:$0xf]
    %v457 = vld [vmem:[#allocation5 + $0x8f8] sm:$0xff]
    %v458 = vld [vmem:[#allocation5 + $0x900] sm:$0xff]
    %v459 = vld [vmem:[#allocation5 + $0x908] sm:$0xff]
    %v460 = vld [vmem:[#allocation5 + $0x910] sm:$0xf]
    %v461 = vld [vmem:[#allocation5 + $0x914] sm:$0xff]
    %v462 = vld [vmem:[#allocation5 + $0x91c] sm:$0xff]
    %v463 = vld [vmem:[#allocation5 + $0x924] sm:$0xff]
    %v464 = vld [vmem:[#allocation5 + $0x92c] sm:$0xf]
    %v465 = vld [vmem:[#allocation5 + $0x930] sm:$0xff]
    %v466 = vld [vmem:[#allocation5 + $0x938] sm:$0xff]
    %v467 = vld [vmem:[#allocation5 + $0x940] sm:$0xff]
    %v468 = vld [vmem:[#allocation5 + $0x948] sm:$0xf]
    %v469 = vld [vmem:[#allocation5 + $0x94c] sm:$0xff]
    %v470 = vld [vmem:[#allocation5 + $0x954] sm:$0xff]
    %v471 = vld [vmem:[#allocation5 + $0x95c] sm:$0xff]
    %v472 = vld [vmem:[#allocation5 + $0x964] sm:$0xf]
    %v473 = vld [vmem:[#allocation5 + $0x968] sm:$0xff]
    %v474 = vld [vmem:[#allocation5 + $0x970] sm:$0xff]
    %v475 = vld [vmem:[#allocation5 + $0x978] sm:$0xff]
    %v476 = vld [vmem:[#allocation5 + $0x980] sm:$0xf]
    %v477 = vld [vmem:[#allocation5 + $0x984] sm:$0xff]
    %v478 = vld [vmem:[#allocation5 + $0x98c] sm:$0xff]
    %v479 = vld [vmem:[#allocation5 + $0x994] sm:$0xff]
    %v480 = vld [vmem:[#allocation5 + $0x99c] sm:$0xf]
    %v481 = vld [vmem:[#allocation5 + $0x9a0] sm:$0xff]
    %v482 = vld [vmem:[#allocation5 + $0x9a8] sm:$0xff]
    %v483 = vld [vmem:[#allocation5 + $0x9b0] sm:$0xff]
    %v484 = vld [vmem:[#allocation5 + $0x9b8] sm:$0xf]
    %v485 = vld [vmem:[#allocation5 + $0x9bc] sm:$0xff]
    %v486 = vld [vmem:[#allocation5 + $0x9c4] sm:$0xff]
    %v487 = vld [vmem:[#allocation5 + $0x9cc] sm:$0xff]
    %v488 = vld [vmem:[#allocation5 + $0x9d4] sm:$0xf]
    %v489 = vld [vmem:[#allocation5 + $0x9d8] sm:$0xff]
    %v490 = vld [vmem:[#allocation5 + $0x9e0] sm:$0xff]
    %v491 = vld [vmem:[#allocation5 + $0x9e8] sm:$0xff]
    %v492 = vld [vmem:[#allocation5 + $0x9f0] sm:$0xf]
    %v493 = vld [vmem:[#allocation5 + $0x9f4] sm:$0xff]
    %v494 = vld [vmem:[#allocation5 + $0x9fc] sm:$0xff]
    %v495 = vld [vmem:[#allocation5 + $0xa04] sm:$0xff]
    %v496 = vld [vmem:[#allocation5 + $0xa0c] sm:$0xf]
    %v497 = vld [vmem:[#allocation5 + $0xa10] sm:$0xff]
    %v498 = vld [vmem:[#allocation5 + $0xa18] sm:$0xff]
    %v499 = vld [vmem:[#allocation5 + $0xa20] sm:$0xff]
    %v500 = vld [vmem:[#allocation5 + $0xa28] sm:$0xf]
    %v501 = vld [vmem:[#allocation5 + $0xa2c] sm:$0xff]
    %v502 = vld [vmem:[#allocation5 + $0xa34] sm:$0xff]
    %v503 = vld [vmem:[#allocation5 + $0xa3c] sm:$0xff]
    %v504 = vld [vmem:[#allocation5 + $0xa44] sm:$0xf]
    %v505 = vld [vmem:[#allocation5 + $0xa48] sm:$0xff]
    %v506 = vld [vmem:[#allocation5 + $0xa50] sm:$0xff]
    %v507 = vld [vmem:[#allocation5 + $0xa58] sm:$0xff]
    %v508 = vld [vmem:[#allocation5 + $0xa60] sm:$0xf]
    %v509 = vld [vmem:[#allocation5 + $0xa64] sm:$0xff]
    %v510 = vld [vmem:[#allocation5 + $0xa6c] sm:$0xff]
    %v511 = vld [vmem:[#allocation5 + $0xa74] sm:$0xff]
    %v512 = vld [vmem:[#allocation5 + $0xa7c] sm:$0xf]
    %v513 = vld [vmem:[#allocation5 + $0xa80] sm:$0xff]
    %v514 = vld [vmem:[#allocation5 + $0xa88] sm:$0xff]
    %v515 = vld [vmem:[#allocation5 + $0xa90] sm:$0xff]
    %v516 = vld [vmem:[#allocation5 + $0xa98] sm:$0xf]
    %v517 = vld [vmem:[#allocation5 + $0xa9c] sm:$0xff]
    %v518 = vld [vmem:[#allocation5 + $0xaa4] sm:$0xff]
    %v519 = vld [vmem:[#allocation5 + $0xaac] sm:$0xff]
    %v520 = vld [vmem:[#allocation5 + $0xab4] sm:$0xf]
    %v521 = vld [vmem:[#allocation7] sm:$0x7f]
    %v523 = vlaneseq
    %v524 = vshrl.u32 %v523, 7
    %v525 = vsub.s32 0, %v524
    %v526 = vrot.slane %v521, %v525
    %v527 = vlaneseq
    %v528 = vshrl.u32 %v527, 7
    %v529 = vsub.s32 1, %v528
    %v530 = vrot.slane %v521, %v529
    %v531 = vlaneseq
    %v532 = vshrl.u32 %v531, 7
    %v533 = vsub.s32 2, %v532
    %v534 = vrot.slane %v521, %v533
    %v535 = vlaneseq
    %v536 = vshrl.u32 %v535, 7
    %v537 = vsub.s32 3, %v536
    %v538 = vrot.slane %v521, %v537
    %v539 = vlaneseq
    %v540 = vshrl.u32 %v539, 7
    %v541 = vsub.s32 4, %v540
    %v542 = vrot.slane %v521, %v541
    %v543 = vlaneseq
    %v544 = vshrl.u32 %v543, 7
    %v545 = vsub.s32 5, %v544
    %v546 = vrot.slane %v521, %v545
    %v547 = vlaneseq
    %v548 = vshrl.u32 %v547, 7
    %v549 = vsub.s32 6, %v548
    %v550 = vrot.slane %v521, %v549
    %v950 = vunpack.c.l.b16 %v129
    %v951 = vunpack.c.h.b16 %v129
    %v952 = vunpack.c.l.b16 %v130
    %v953 = vunpack.c.h.b16 %v130
    %v954 = vunpack.c.l.b16 %v131
    %v955 = vunpack.c.h.b16 %v131
    %v956 = vunpack.c.l.b16 %v132
    %v957 = vunpack.c.l.b16 %v133
    %v958 = vunpack.c.h.b16 %v133
    %v959 = vunpack.c.l.b16 %v134
    %v960 = vunpack.c.h.b16 %v134
    %v961 = vunpack.c.l.b16 %v135
    %v962 = vunpack.c.h.b16 %v135
    %v963 = vunpack.c.l.b16 %v136
    %v964 = vunpack.c.l.b16 %v137
    %v965 = vunpack.c.h.b16 %v137
    %v966 = vunpack.c.l.b16 %v138
    %v967 = vunpack.c.h.b16 %v138
    %v968 = vunpack.c.l.b16 %v139
    %v969 = vunpack.c.h.b16 %v139
    %v970 = vunpack.c.l.b16 %v140
    %v971 = vunpack.c.l.b16 %v141
    %v972 = vunpack.c.h.b16 %v141
    %v973 = vunpack.c.l.b16 %v142
    %v974 = vunpack.c.h.b16 %v142
    %v975 = vunpack.c.l.b16 %v143
    %v976 = vunpack.c.h.b16 %v143
    %v977 = vunpack.c.l.b16 %v144
    %v978 = vunpack.c.l.b16 %v145
    %v979 = vunpack.c.h.b16 %v145
    %v980 = vunpack.c.l.b16 %v146
    %v981 = vunpack.c.h.b16 %v146
    %v982 = vunpack.c.l.b16 %v147
    %v983 = vunpack.c.h.b16 %v147
    %v984 = vunpack.c.l.b16 %v148
    %v985 = vunpack.c.l.b16 %v149
    %v986 = vunpack.c.h.b16 %v149
    %v987 = vunpack.c.l.b16 %v150
    %v988 = vunpack.c.h.b16 %v150
    %v989 = vunpack.c.l.b16 %v151
    %v990 = vunpack.c.h.b16 %v151
    %v991 = vunpack.c.l.b16 %v152
    %v992 = vunpack.c.l.b16 %v153
    %v993 = vunpack.c.h.b16 %v153
    %v994 = vunpack.c.l.b16 %v154
    %v995 = vunpack.c.h.b16 %v154
    %v996 = vunpack.c.l.b16 %v155
    %v997 = vunpack.c.h.b16 %v155
    %v998 = vunpack.c.l.b16 %v156
    %v999 = vunpack.c.l.b16 %v157
    %v1000 = vunpack.c.h.b16 %v157
    %v1001 = vunpack.c.l.b16 %v158
    %v1002 = vunpack.c.h.b16 %v158
    %v1003 = vunpack.c.l.b16 %v159
    %v1004 = vunpack.c.h.b16 %v159
    %v1005 = vunpack.c.l.b16 %v160
    %v1006 = vunpack.c.l.b16 %v161
    %v1007 = vunpack.c.h.b16 %v161
    %v1008 = vunpack.c.l.b16 %v162
    %v1009 = vunpack.c.h.b16 %v162
    %v1010 = vunpack.c.l.b16 %v163
    %v1011 = vunpack.c.h.b16 %v163
    %v1012 = vunpack.c.l.b16 %v164
    %v1013 = vunpack.c.l.b16 %v165
    %v1014 = vunpack.c.h.b16 %v165
    %v1015 = vunpack.c.l.b16 %v166
    %v1016 = vunpack.c.h.b16 %v166
    %v1017 = vunpack.c.l.b16 %v167
    %v1018 = vunpack.c.h.b16 %v167
    %v1019 = vunpack.c.l.b16 %v168
    %v1020 = vunpack.c.l.b16 %v169
    %v1021 = vunpack.c.h.b16 %v169
    %v1022 = vunpack.c.l.b16 %v170
    %v1023 = vunpack.c.h.b16 %v170
    %v1024 = vunpack.c.l.b16 %v171
    %v1025 = vunpack.c.h.b16 %v171
    %v1026 = vunpack.c.l.b16 %v172
    %v1027 = vunpack.c.l.b16 %v173
    %v1028 = vunpack.c.h.b16 %v173
    %v1029 = vunpack.c.l.b16 %v174
    %v1030 = vunpack.c.h.b16 %v174
    %v1031 = vunpack.c.l.b16 %v175
    %v1032 = vunpack.c.h.b16 %v175
    %v1033 = vunpack.c.l.b16 %v176
    %v1034 = vunpack.c.l.b16 %v177
    %v1035 = vunpack.c.h.b16 %v177
    %v1036 = vunpack.c.l.b16 %v178
    %v1037 = vunpack.c.h.b16 %v178
    %v1038 = vunpack.c.l.b16 %v179
    %v1039 = vunpack.c.h.b16 %v179
    %v1040 = vunpack.c.l.b16 %v180
    %v1041 = vunpack.c.l.b16 %v181
    %v1042 = vunpack.c.h.b16 %v181
    %v1043 = vunpack.c.l.b16 %v182
    %v1044 = vunpack.c.h.b16 %v182
    %v1045 = vunpack.c.l.b16 %v183
    %v1046 = vunpack.c.h.b16 %v183
    %v1047 = vunpack.c.l.b16 %v184
    %v1048 = vunpack.c.l.b16 %v185
    %v1049 = vunpack.c.h.b16 %v185
    %v1050 = vunpack.c.l.b16 %v186
    %v1051 = vunpack.c.h.b16 %v186
    %v1052 = vunpack.c.l.b16 %v187
    %v1053 = vunpack.c.h.b16 %v187
    %v1054 = vunpack.c.l.b16 %v188
    %v1055 = vunpack.c.l.b16 %v189
    %v1056 = vunpack.c.h.b16 %v189
    %v1057 = vunpack.c.l.b16 %v190
    %v1058 = vunpack.c.h.b16 %v190
    %v1059 = vunpack.c.l.b16 %v191
    %v1060 = vunpack.c.h.b16 %v191
    %v1061 = vunpack.c.l.b16 %v192
    %v1062 = vunpack.c.l.b16 %v193
    %v1063 = vunpack.c.h.b16 %v193
    %v1064 = vunpack.c.l.b16 %v194
    %v1065 = vunpack.c.h.b16 %v194
    %v1066 = vunpack.c.l.b16 %v195
    %v1067 = vunpack.c.h.b16 %v195
    %v1068 = vunpack.c.l.b16 %v196
    %v1069 = vunpack.c.l.b16 %v197
    %v1070 = vunpack.c.h.b16 %v197
    %v1071 = vunpack.c.l.b16 %v198
    %v1072 = vunpack.c.h.b16 %v198
    %v1073 = vunpack.c.l.b16 %v199
    %v1074 = vunpack.c.h.b16 %v199
    %v1075 = vunpack.c.l.b16 %v200
    %v1076 = vunpack.c.l.b16 %v201
    %v1077 = vunpack.c.h.b16 %v201
    %v1078 = vunpack.c.l.b16 %v202
    %v1079 = vunpack.c.h.b16 %v202
    %v1080 = vunpack.c.l.b16 %v203
    %v1081 = vunpack.c.h.b16 %v203
    %v1082 = vunpack.c.l.b16 %v204
    %v1083 = vunpack.c.l.b16 %v205
    %v1084 = vunpack.c.h.b16 %v205
    %v1085 = vunpack.c.l.b16 %v206
    %v1086 = vunpack.c.h.b16 %v206
    %v1087 = vunpack.c.l.b16 %v207
    %v1088 = vunpack.c.h.b16 %v207
    %v1089 = vunpack.c.l.b16 %v208
    %v1090 = vunpack.c.l.b16 %v209
    %v1091 = vunpack.c.h.b16 %v209
    %v1092 = vunpack.c.l.b16 %v210
    %v1093 = vunpack.c.h.b16 %v210
    %v1094 = vunpack.c.l.b16 %v211
    %v1095 = vunpack.c.h.b16 %v211
    %v1096 = vunpack.c.l.b16 %v212
    %v1097 = vunpack.c.l.b16 %v213
    %v1098 = vunpack.c.h.b16 %v213
    %v1099 = vunpack.c.l.b16 %v214
    %v1100 = vunpack.c.h.b16 %v214
    %v1101 = vunpack.c.l.b16 %v215
    %v1102 = vunpack.c.h.b16 %v215
    %v1103 = vunpack.c.l.b16 %v216
    %v1104 = vunpack.c.l.b16 %v217
    %v1105 = vunpack.c.h.b16 %v217
    %v1106 = vunpack.c.l.b16 %v218
    %v1107 = vunpack.c.h.b16 %v218
    %v1108 = vunpack.c.l.b16 %v219
    %v1109 = vunpack.c.h.b16 %v219
    %v1110 = vunpack.c.l.b16 %v220
    %v1111 = vunpack.c.l.b16 %v221
    %v1112 = vunpack.c.h.b16 %v221
    %v1113 = vunpack.c.l.b16 %v222
    %v1114 = vunpack.c.h.b16 %v222
    %v1115 = vunpack.c.l.b16 %v223
    %v1116 = vunpack.c.h.b16 %v223
    %v1117 = vunpack.c.l.b16 %v224
    %v1118 = vunpack.c.l.b16 %v225
    %v1119 = vunpack.c.h.b16 %v225
    %v1120 = vunpack.c.l.b16 %v226
    %v1121 = vunpack.c.h.b16 %v226
    %v1122 = vunpack.c.l.b16 %v227
    %v1123 = vunpack.c.h.b16 %v227
    %v1124 = vunpack.c.l.b16 %v228
    %v1125 = vunpack.c.l.b16 %v229
    %v1126 = vunpack.c.h.b16 %v229
    %v1127 = vunpack.c.l.b16 %v230
    %v1128 = vunpack.c.h.b16 %v230
    %v1129 = vunpack.c.l.b16 %v231
    %v1130 = vunpack.c.h.b16 %v231
    %v1131 = vunpack.c.l.b16 %v232
    %v1132 = vunpack.c.l.b16 %v233
    %v1133 = vunpack.c.h.b16 %v233
    %v1134 = vunpack.c.l.b16 %v234
    %v1135 = vunpack.c.h.b16 %v234
    %v1136 = vunpack.c.l.b16 %v235
    %v1137 = vunpack.c.h.b16 %v235
    %v1138 = vunpack.c.l.b16 %v236
    %v1139 = vunpack.c.l.b16 %v237
    %v1140 = vunpack.c.h.b16 %v237
    %v1141 = vunpack.c.l.b16 %v238
    %v1142 = vunpack.c.h.b16 %v238
    %v1143 = vunpack.c.l.b16 %v239
    %v1144 = vunpack.c.h.b16 %v239
    %v1145 = vunpack.c.l.b16 %v240
    %v1146 = vunpack.c.l.b16 %v241
    %v1147 = vunpack.c.h.b16 %v241
    %v1148 = vunpack.c.l.b16 %v242
    %v1149 = vunpack.c.h.b16 %v242
    %v1150 = vunpack.c.l.b16 %v243
    %v1151 = vunpack.c.h.b16 %v243
    %v1152 = vunpack.c.l.b16 %v244
    %v1153 = vunpack.c.l.b16 %v245
    %v1154 = vunpack.c.h.b16 %v245
    %v1155 = vunpack.c.l.b16 %v246
    %v1156 = vunpack.c.h.b16 %v246
    %v1157 = vunpack.c.l.b16 %v247
    %v1158 = vunpack.c.h.b16 %v247
    %v1159 = vunpack.c.l.b16 %v248
    %v1160 = vunpack.c.l.b16 %v249
    %v1161 = vunpack.c.h.b16 %v249
    %v1162 = vunpack.c.l.b16 %v250
    %v1163 = vunpack.c.h.b16 %v250
    %v1164 = vunpack.c.l.b16 %v251
    %v1165 = vunpack.c.h.b16 %v251
    %v1166 = vunpack.c.l.b16 %v252
    %v1167 = vunpack.c.l.b16 %v253
    %v1168 = vunpack.c.h.b16 %v253
    %v1169 = vunpack.c.l.b16 %v254
    %v1170 = vunpack.c.h.b16 %v254
    %v1171 = vunpack.c.l.b16 %v255
    %v1172 = vunpack.c.h.b16 %v255
    %v1173 = vunpack.c.l.b16 %v256
    %v1174 = vunpack.c.l.b16 %v257
    %v1175 = vunpack.c.h.b16 %v257
    %v1176 = vunpack.c.l.b16 %v258
    %v1177 = vunpack.c.h.b16 %v258
    %v1178 = vunpack.c.l.b16 %v259
    %v1179 = vunpack.c.h.b16 %v259
    %v1180 = vunpack.c.l.b16 %v260
    %v1181 = vunpack.c.l.b16 %v261
    %v1182 = vunpack.c.h.b16 %v261
    %v1183 = vunpack.c.l.b16 %v262
    %v1184 = vunpack.c.h.b16 %v262
    %v1185 = vunpack.c.l.b16 %v263
    %v1186 = vunpack.c.h.b16 %v263
    %v1187 = vunpack.c.l.b16 %v264
    %v1188 = vunpack.c.l.b16 %v265
    %v1189 = vunpack.c.h.b16 %v265
    %v1190 = vunpack.c.l.b16 %v266
    %v1191 = vunpack.c.h.b16 %v266
    %v1192 = vunpack.c.l.b16 %v267
    %v1193 = vunpack.c.h.b16 %v267
    %v1194 = vunpack.c.l.b16 %v268
    %v1195 = vunpack.c.l.b16 %v269
    %v1196 = vunpack.c.h.b16 %v269
    %v1197 = vunpack.c.l.b16 %v270
    %v1198 = vunpack.c.h.b16 %v270
    %v1199 = vunpack.c.l.b16 %v271
    %v1200 = vunpack.c.h.b16 %v271
    %v1201 = vunpack.c.l.b16 %v272
    %v1202 = vunpack.c.l.b16 %v273
    %v1203 = vunpack.c.h.b16 %v273
    %v1204 = vunpack.c.l.b16 %v274
    %v1205 = vunpack.c.h.b16 %v274
    %v1206 = vunpack.c.l.b16 %v275
    %v1207 = vunpack.c.h.b16 %v275
    %v1208 = vunpack.c.l.b16 %v276
    %v1209 = vunpack.c.l.b16 %v277
    %v1210 = vunpack.c.h.b16 %v277
    %v1211 = vunpack.c.l.b16 %v278
    %v1212 = vunpack.c.h.b16 %v278
    %v1213 = vunpack.c.l.b16 %v279
    %v1214 = vunpack.c.h.b16 %v279
    %v1215 = vunpack.c.l.b16 %v280
    %v1216 = vunpack.c.l.b16 %v281
    %v1217 = vunpack.c.h.b16 %v281
    %v1218 = vunpack.c.l.b16 %v282
    %v1219 = vunpack.c.h.b16 %v282
    %v1220 = vunpack.c.l.b16 %v283
    %v1221 = vunpack.c.h.b16 %v283
    %v1222 = vunpack.c.l.b16 %v284
    %v1223 = vunpack.c.l.b16 %v285
    %v1224 = vunpack.c.h.b16 %v285
    %v1225 = vunpack.c.l.b16 %v286
    %v1226 = vunpack.c.h.b16 %v286
    %v1227 = vunpack.c.l.b16 %v287
    %v1228 = vunpack.c.h.b16 %v287
    %v1229 = vunpack.c.l.b16 %v288
    %v1230 = vunpack.c.l.b16 %v289
    %v1231 = vunpack.c.h.b16 %v289
    %v1232 = vunpack.c.l.b16 %v290
    %v1233 = vunpack.c.h.b16 %v290
    %v1234 = vunpack.c.l.b16 %v291
    %v1235 = vunpack.c.h.b16 %v291
    %v1236 = vunpack.c.l.b16 %v292
    %v1237 = vunpack.c.l.b16 %v293
    %v1238 = vunpack.c.h.b16 %v293
    %v1239 = vunpack.c.l.b16 %v294
    %v1240 = vunpack.c.h.b16 %v294
    %v1241 = vunpack.c.l.b16 %v295
    %v1242 = vunpack.c.h.b16 %v295
    %v1243 = vunpack.c.l.b16 %v296
    %v1244 = vunpack.c.l.b16 %v297
    %v1245 = vunpack.c.h.b16 %v297
    %v1246 = vunpack.c.l.b16 %v298
    %v1247 = vunpack.c.h.b16 %v298
    %v1248 = vunpack.c.l.b16 %v299
    %v1249 = vunpack.c.h.b16 %v299
    %v1250 = vunpack.c.l.b16 %v300
    %v1251 = vunpack.c.l.b16 %v301
    %v1252 = vunpack.c.h.b16 %v301
    %v1253 = vunpack.c.l.b16 %v302
    %v1254 = vunpack.c.h.b16 %v302
    %v1255 = vunpack.c.l.b16 %v303
    %v1256 = vunpack.c.h.b16 %v303
    %v1257 = vunpack.c.l.b16 %v304
    %v1258 = vunpack.c.l.b16 %v305
    %v1259 = vunpack.c.h.b16 %v305
    %v1260 = vunpack.c.l.b16 %v306
    %v1261 = vunpack.c.h.b16 %v306
    %v1262 = vunpack.c.l.b16 %v307
    %v1263 = vunpack.c.h.b16 %v307
    %v1264 = vunpack.c.l.b16 %v308
    %v1265 = vunpack.c.l.b16 %v309
    %v1266 = vunpack.c.h.b16 %v309
    %v1267 = vunpack.c.l.b16 %v310
    %v1268 = vunpack.c.h.b16 %v310
    %v1269 = vunpack.c.l.b16 %v311
    %v1270 = vunpack.c.h.b16 %v311
    %v1271 = vunpack.c.l.b16 %v312
    %v1272 = vunpack.c.l.b16 %v313
    %v1273 = vunpack.c.h.b16 %v313
    %v1274 = vunpack.c.l.b16 %v314
    %v1275 = vunpack.c.h.b16 %v314
    %v1276 = vunpack.c.l.b16 %v315
    %v1277 = vunpack.c.h.b16 %v315
    %v1278 = vunpack.c.l.b16 %v316
    %v1279 = vunpack.c.l.b16 %v317
    %v1280 = vunpack.c.h.b16 %v317
    %v1281 = vunpack.c.l.b16 %v318
    %v1282 = vunpack.c.h.b16 %v318
    %v1283 = vunpack.c.l.b16 %v319
    %v1284 = vunpack.c.h.b16 %v319
    %v1285 = vunpack.c.l.b16 %v320
    %v1286 = vunpack.c.l.b16 %v321
    %v1287 = vunpack.c.h.b16 %v321
    %v1288 = vunpack.c.l.b16 %v322
    %v1289 = vunpack.c.h.b16 %v322
    %v1290 = vunpack.c.l.b16 %v323
    %v1291 = vunpack.c.h.b16 %v323
    %v1292 = vunpack.c.l.b16 %v324
    %v1293 = vunpack.c.l.b16 %v325
    %v1294 = vunpack.c.h.b16 %v325
    %v1295 = vunpack.c.l.b16 %v326
    %v1296 = vunpack.c.h.b16 %v326
    %v1297 = vunpack.c.l.b16 %v327
    %v1298 = vunpack.c.h.b16 %v327
    %v1299 = vunpack.c.l.b16 %v328
    %v1300 = vunpack.c.l.b16 %v329
    %v1301 = vunpack.c.h.b16 %v329
    %v1302 = vunpack.c.l.b16 %v330
    %v1303 = vunpack.c.h.b16 %v330
    %v1304 = vunpack.c.l.b16 %v331
    %v1305 = vunpack.c.h.b16 %v331
    %v1306 = vunpack.c.l.b16 %v332
    %v1307 = vunpack.c.l.b16 %v333
    %v1308 = vunpack.c.h.b16 %v333
    %v1309 = vunpack.c.l.b16 %v334
    %v1310 = vunpack.c.h.b16 %v334
    %v1311 = vunpack.c.l.b16 %v335
    %v1312 = vunpack.c.h.b16 %v335
    %v1313 = vunpack.c.l.b16 %v336
    %v1314 = vunpack.c.l.b16 %v337
    %v1315 = vunpack.c.h.b16 %v337
    %v1316 = vunpack.c.l.b16 %v338
    %v1317 = vunpack.c.h.b16 %v338
    %v1318 = vunpack.c.l.b16 %v339
    %v1319 = vunpack.c.h.b16 %v339
    %v1320 = vunpack.c.l.b16 %v340
    %v1321 = vunpack.c.l.b16 %v341
    %v1322 = vunpack.c.h.b16 %v341
    %v1323 = vunpack.c.l.b16 %v342
    %v1324 = vunpack.c.h.b16 %v342
    %v1325 = vunpack.c.l.b16 %v343
    %v1326 = vunpack.c.h.b16 %v343
    %v1327 = vunpack.c.l.b16 %v344
    %v1328 = vunpack.c.l.b16 %v345
    %v1329 = vunpack.c.h.b16 %v345
    %v1330 = vunpack.c.l.b16 %v346
    %v1331 = vunpack.c.h.b16 %v346
    %v1332 = vunpack.c.l.b16 %v347
    %v1333 = vunpack.c.h.b16 %v347
    %v1334 = vunpack.c.l.b16 %v348
    %v1335 = vunpack.c.l.b16 %v349
    %v1336 = vunpack.c.h.b16 %v349
    %v1337 = vunpack.c.l.b16 %v350
    %v1338 = vunpack.c.h.b16 %v350
    %v1339 = vunpack.c.l.b16 %v351
    %v1340 = vunpack.c.h.b16 %v351
    %v1341 = vunpack.c.l.b16 %v352
    %v1342 = vunpack.c.l.b16 %v353
    %v1343 = vunpack.c.h.b16 %v353
    %v1344 = vunpack.c.l.b16 %v354
    %v1345 = vunpack.c.h.b16 %v354
    %v1346 = vunpack.c.l.b16 %v355
    %v1347 = vunpack.c.h.b16 %v355
    %v1348 = vunpack.c.l.b16 %v356
    %v1349 = vunpack.c.l.b16 %v357
    %v1350 = vunpack.c.h.b16 %v357
    %v1351 = vunpack.c.l.b16 %v358
    %v1352 = vunpack.c.h.b16 %v358
    %v1353 = vunpack.c.l.b16 %v359
    %v1354 = vunpack.c.h.b16 %v359
    %v1355 = vunpack.c.l.b16 %v360
    %v1356 = vunpack.c.l.b16 %v361
    %v1357 = vunpack.c.h.b16 %v361
    %v1358 = vunpack.c.l.b16 %v362
    %v1359 = vunpack.c.h.b16 %v362
    %v1360 = vunpack.c.l.b16 %v363
    %v1361 = vunpack.c.h.b16 %v363
    %v1362 = vunpack.c.l.b16 %v364
    %v1363 = vunpack.c.l.b16 %v365
    %v1364 = vunpack.c.h.b16 %v365
    %v1365 = vunpack.c.l.b16 %v366
    %v1366 = vunpack.c.h.b16 %v366
    %v1367 = vunpack.c.l.b16 %v367
    %v1368 = vunpack.c.h.b16 %v367
    %v1369 = vunpack.c.l.b16 %v368
    %v1370 = vunpack.c.l.b16 %v369
    %v1371 = vunpack.c.h.b16 %v369
    %v1372 = vunpack.c.l.b16 %v370
    %v1373 = vunpack.c.h.b16 %v370
    %v1374 = vunpack.c.l.b16 %v371
    %v1375 = vunpack.c.h.b16 %v371
    %v1376 = vunpack.c.l.b16 %v372
    %v1377 = vunpack.c.l.b16 %v373
    %v1378 = vunpack.c.h.b16 %v373
    %v1379 = vunpack.c.l.b16 %v374
    %v1380 = vunpack.c.h.b16 %v374
    %v1381 = vunpack.c.l.b16 %v375
    %v1382 = vunpack.c.h.b16 %v375
    %v1383 = vunpack.c.l.b16 %v376
    %v1384 = vunpack.c.l.b16 %v377
    %v1385 = vunpack.c.h.b16 %v377
    %v1386 = vunpack.c.l.b16 %v378
    %v1387 = vunpack.c.h.b16 %v378
    %v1388 = vunpack.c.l.b16 %v379
    %v1389 = vunpack.c.h.b16 %v379
    %v1390 = vunpack.c.l.b16 %v380
    %v1391 = vunpack.c.l.b16 %v381
    %v1392 = vunpack.c.h.b16 %v381
    %v1393 = vunpack.c.l.b16 %v382
    %v1394 = vunpack.c.h.b16 %v382
    %v1395 = vunpack.c.l.b16 %v383
    %v1396 = vunpack.c.h.b16 %v383
    %v1397 = vunpack.c.l.b16 %v384
    %v1398 = vunpack.c.l.b16 %v385
    %v1399 = vunpack.c.h.b16 %v385
    %v1400 = vunpack.c.l.b16 %v386
    %v1401 = vunpack.c.h.b16 %v386
    %v1402 = vunpack.c.l.b16 %v387
    %v1403 = vunpack.c.h.b16 %v387
    %v1404 = vunpack.c.l.b16 %v388
    %v1405 = vunpack.c.l.b16 %v389
    %v1406 = vunpack.c.h.b16 %v389
    %v1407 = vunpack.c.l.b16 %v390
    %v1408 = vunpack.c.h.b16 %v390
    %v1409 = vunpack.c.l.b16 %v391
    %v1410 = vunpack.c.h.b16 %v391
    %v1411 = vunpack.c.l.b16 %v392
    %v1412 = vunpack.c.l.b16 %v393
    %v1413 = vunpack.c.h.b16 %v393
    %v1414 = vunpack.c.l.b16 %v394
    %v1415 = vunpack.c.h.b16 %v394
    %v1416 = vunpack.c.l.b16 %v395
    %v1417 = vunpack.c.h.b16 %v395
    %v1418 = vunpack.c.l.b16 %v396
    %v1419 = vunpack.c.l.b16 %v397
    %v1420 = vunpack.c.h.b16 %v397
    %v1421 = vunpack.c.l.b16 %v398
    %v1422 = vunpack.c.h.b16 %v398
    %v1423 = vunpack.c.l.b16 %v399
    %v1424 = vunpack.c.h.b16 %v399
    %v1425 = vunpack.c.l.b16 %v400
    %v1426 = vunpack.c.l.b16 %v401
    %v1427 = vunpack.c.h.b16 %v401
    %v1428 = vunpack.c.l.b16 %v402
    %v1429 = vunpack.c.h.b16 %v402
    %v1430 = vunpack.c.l.b16 %v403
    %v1431 = vunpack.c.h.b16 %v403
    %v1432 = vunpack.c.l.b16 %v404
    %v1433 = vunpack.c.l.b16 %v405
    %v1434 = vunpack.c.h.b16 %v405
    %v1435 = vunpack.c.l.b16 %v406
    %v1436 = vunpack.c.h.b16 %v406
    %v1437 = vunpack.c.l.b16 %v407
    %v1438 = vunpack.c.h.b16 %v407
    %v1439 = vunpack.c.l.b16 %v408
    %v1440 = vunpack.c.l.b16 %v409
    %v1441 = vunpack.c.h.b16 %v409
    %v1442 = vunpack.c.l.b16 %v410
    %v1443 = vunpack.c.h.b16 %v410
    %v1444 = vunpack.c.l.b16 %v411
    %v1445 = vunpack.c.h.b16 %v411
    %v1446 = vunpack.c.l.b16 %v412
    %v1447 = vunpack.c.l.b16 %v413
    %v1448 = vunpack.c.h.b16 %v413
    %v1449 = vunpack.c.l.b16 %v414
    %v1450 = vunpack.c.h.b16 %v414
    %v1451 = vunpack.c.l.b16 %v415
    %v1452 = vunpack.c.h.b16 %v415
    %v1453 = vunpack.c.l.b16 %v416
    %v1454 = vunpack.c.l.b16 %v417
    %v1455 = vunpack.c.h.b16 %v417
    %v1456 = vunpack.c.l.b16 %v418
    %v1457 = vunpack.c.h.b16 %v418
    %v1458 = vunpack.c.l.b16 %v419
    %v1459 = vunpack.c.h.b16 %v419
    %v1460 = vunpack.c.l.b16 %v420
    %v1461 = vunpack.c.l.b16 %v421
    %v1462 = vunpack.c.h.b16 %v421
    %v1463 = vunpack.c.l.b16 %v422
    %v1464 = vunpack.c.h.b16 %v422
    %v1465 = vunpack.c.l.b16 %v423
    %v1466 = vunpack.c.h.b16 %v423
    %v1467 = vunpack.c.l.b16 %v424
    %v1468 = vunpack.c.l.b16 %v425
    %v1469 = vunpack.c.h.b16 %v425
    %v1470 = vunpack.c.l.b16 %v426
    %v1471 = vunpack.c.h.b16 %v426
    %v1472 = vunpack.c.l.b16 %v427
    %v1473 = vunpack.c.h.b16 %v427
    %v1474 = vunpack.c.l.b16 %v428
    %v1475 = vunpack.c.l.b16 %v429
    %v1476 = vunpack.c.h.b16 %v429
    %v1477 = vunpack.c.l.b16 %v430
    %v1478 = vunpack.c.h.b16 %v430
    %v1479 = vunpack.c.l.b16 %v431
    %v1480 = vunpack.c.h.b16 %v431
    %v1481 = vunpack.c.l.b16 %v432
    %v1482 = vunpack.c.l.b16 %v433
    %v1483 = vunpack.c.h.b16 %v433
    %v1484 = vunpack.c.l.b16 %v434
    %v1485 = vunpack.c.h.b16 %v434
    %v1486 = vunpack.c.l.b16 %v435
    %v1487 = vunpack.c.h.b16 %v435
    %v1488 = vunpack.c.l.b16 %v436
    %v1489 = vunpack.c.l.b16 %v437
    %v1490 = vunpack.c.h.b16 %v437
    %v1491 = vunpack.c.l.b16 %v438
    %v1492 = vunpack.c.h.b16 %v438
    %v1493 = vunpack.c.l.b16 %v439
    %v1494 = vunpack.c.h.b16 %v439
    %v1495 = vunpack.c.l.b16 %v440
    %v1496 = vunpack.c.l.b16 %v441
    %v1497 = vunpack.c.h.b16 %v441
    %v1498 = vunpack.c.l.b16 %v442
    %v1499 = vunpack.c.h.b16 %v442
    %v1500 = vunpack.c.l.b16 %v443
    %v1501 = vunpack.c.h.b16 %v443
    %v1502 = vunpack.c.l.b16 %v444
    %v1503 = vunpack.c.l.b16 %v445
    %v1504 = vunpack.c.h.b16 %v445
    %v1505 = vunpack.c.l.b16 %v446
    %v1506 = vunpack.c.h.b16 %v446
    %v1507 = vunpack.c.l.b16 %v447
    %v1508 = vunpack.c.h.b16 %v447
    %v1509 = vunpack.c.l.b16 %v448
    %v1510 = vunpack.c.l.b16 %v449
    %v1511 = vunpack.c.h.b16 %v449
    %v1512 = vunpack.c.l.b16 %v450
    %v1513 = vunpack.c.h.b16 %v450
    %v1514 = vunpack.c.l.b16 %v451
    %v1515 = vunpack.c.h.b16 %v451
    %v1516 = vunpack.c.l.b16 %v452
    %v1517 = vunpack.c.l.b16 %v453
    %v1518 = vunpack.c.h.b16 %v453
    %v1519 = vunpack.c.l.b16 %v454
    %v1520 = vunpack.c.h.b16 %v454
    %v1521 = vunpack.c.l.b16 %v455
    %v1522 = vunpack.c.h.b16 %v455
    %v1523 = vunpack.c.l.b16 %v456
    %v1524 = vunpack.c.l.b16 %v457
    %v1525 = vunpack.c.h.b16 %v457
    %v1526 = vunpack.c.l.b16 %v458
    %v1527 = vunpack.c.h.b16 %v458
    %v1528 = vunpack.c.l.b16 %v459
    %v1529 = vunpack.c.h.b16 %v459
    %v1530 = vunpack.c.l.b16 %v460
    %v1531 = vunpack.c.l.b16 %v461
    %v1532 = vunpack.c.h.b16 %v461
    %v1533 = vunpack.c.l.b16 %v462
    %v1534 = vunpack.c.h.b16 %v462
    %v1535 = vunpack.c.l.b16 %v463
    %v1536 = vunpack.c.h.b16 %v463
    %v1537 = vunpack.c.l.b16 %v464
    %v1538 = vunpack.c.l.b16 %v465
    %v1539 = vunpack.c.h.b16 %v465
    %v1540 = vunpack.c.l.b16 %v466
    %v1541 = vunpack.c.h.b16 %v466
    %v1542 = vunpack.c.l.b16 %v467
    %v1543 = vunpack.c.h.b16 %v467
    %v1544 = vunpack.c.l.b16 %v468
    %v1545 = vunpack.c.l.b16 %v469
    %v1546 = vunpack.c.h.b16 %v469
    %v1547 = vunpack.c.l.b16 %v470
    %v1548 = vunpack.c.h.b16 %v470
    %v1549 = vunpack.c.l.b16 %v471
    %v1550 = vunpack.c.h.b16 %v471
    %v1551 = vunpack.c.l.b16 %v472
    %v1552 = vunpack.c.l.b16 %v473
    %v1553 = vunpack.c.h.b16 %v473
    %v1554 = vunpack.c.l.b16 %v474
    %v1555 = vunpack.c.h.b16 %v474
    %v1556 = vunpack.c.l.b16 %v475
    %v1557 = vunpack.c.h.b16 %v475
    %v1558 = vunpack.c.l.b16 %v476
    %v1559 = vunpack.c.l.b16 %v477
    %v1560 = vunpack.c.h.b16 %v477
    %v1561 = vunpack.c.l.b16 %v478
    %v1562 = vunpack.c.h.b16 %v478
    %v1563 = vunpack.c.l.b16 %v479
    %v1564 = vunpack.c.h.b16 %v479
    %v1565 = vunpack.c.l.b16 %v480
    %v1566 = vunpack.c.l.b16 %v481
    %v1567 = vunpack.c.h.b16 %v481
    %v1568 = vunpack.c.l.b16 %v482
    %v1569 = vunpack.c.h.b16 %v482
    %v1570 = vunpack.c.l.b16 %v483
    %v1571 = vunpack.c.h.b16 %v483
    %v1572 = vunpack.c.l.b16 %v484
    %v1573 = vunpack.c.l.b16 %v485
    %v1574 = vunpack.c.h.b16 %v485
    %v1575 = vunpack.c.l.b16 %v486
    %v1576 = vunpack.c.h.b16 %v486
    %v1577 = vunpack.c.l.b16 %v487
    %v1578 = vunpack.c.h.b16 %v487
    %v1579 = vunpack.c.l.b16 %v488
    %v1580 = vunpack.c.l.b16 %v489
    %v1581 = vunpack.c.h.b16 %v489
    %v1582 = vunpack.c.l.b16 %v490
    %v1583 = vunpack.c.h.b16 %v490
    %v1584 = vunpack.c.l.b16 %v491
    %v1585 = vunpack.c.h.b16 %v491
    %v1586 = vunpack.c.l.b16 %v492
    %v1587 = vunpack.c.l.b16 %v493
    %v1588 = vunpack.c.h.b16 %v493
    %v1589 = vunpack.c.l.b16 %v494
    %v1590 = vunpack.c.h.b16 %v494
    %v1591 = vunpack.c.l.b16 %v495
    %v1592 = vunpack.c.h.b16 %v495
    %v1593 = vunpack.c.l.b16 %v496
    %v1594 = vunpack.c.l.b16 %v497
    %v1595 = vunpack.c.h.b16 %v497
    %v1596 = vunpack.c.l.b16 %v498
    %v1597 = vunpack.c.h.b16 %v498
    %v1598 = vunpack.c.l.b16 %v499
    %v1599 = vunpack.c.h.b16 %v499
    %v1600 = vunpack.c.l.b16 %v500
    %v1601 = vunpack.c.l.b16 %v501
    %v1602 = vunpack.c.h.b16 %v501
    %v1603 = vunpack.c.l.b16 %v502
    %v1604 = vunpack.c.h.b16 %v502
    %v1605 = vunpack.c.l.b16 %v503
    %v1606 = vunpack.c.h.b16 %v503
    %v1607 = vunpack.c.l.b16 %v504
    %v1608 = vunpack.c.l.b16 %v505
    %v1609 = vunpack.c.h.b16 %v505
    %v1610 = vunpack.c.l.b16 %v506
    %v1611 = vunpack.c.h.b16 %v506
    %v1612 = vunpack.c.l.b16 %v507
    %v1613 = vunpack.c.h.b16 %v507
    %v1614 = vunpack.c.l.b16 %v508
    %v1615 = vunpack.c.l.b16 %v509
    %v1616 = vunpack.c.h.b16 %v509
    %v1617 = vunpack.c.l.b16 %v510
    %v1618 = vunpack.c.h.b16 %v510
    %v1619 = vunpack.c.l.b16 %v511
    %v1620 = vunpack.c.h.b16 %v511
    %v1621 = vunpack.c.l.b16 %v512
    %v1622 = vunpack.c.l.b16 %v513
    %v1623 = vunpack.c.h.b16 %v513
    %v1624 = vunpack.c.l.b16 %v514
    %v1625 = vunpack.c.h.b16 %v514
    %v1626 = vunpack.c.l.b16 %v515
    %v1627 = vunpack.c.h.b16 %v515
    %v1628 = vunpack.c.l.b16 %v516
    %v1629 = vunpack.c.l.b16 %v517
    %v1630 = vunpack.c.h.b16 %v517
    %v1631 = vunpack.c.l.b16 %v518
    %v1632 = vunpack.c.h.b16 %v518
    %v1633 = vunpack.c.l.b16 %v519
    %v1634 = vunpack.c.h.b16 %v519
    %v1635 = vunpack.c.l.b16 %v520
    %v1636 = vpack.c.b16 %v957, %v950
    %v1637 = vpack.c.b16 %v958, %v951
    %v1638 = vpack.c.b16 %v959, %v952
    %v1639 = vpack.c.b16 %v960, %v953
    %v1640 = vpack.c.b16 %v961, %v954
    %v1641 = vpack.c.b16 %v962, %v955
    %v1642 = vpack.c.b16 %v963, %v956
    %v1643 = vpack.c.b16 %v971, %v964
    %v1644 = vpack.c.b16 %v972, %v965
    %v1645 = vpack.c.b16 %v973, %v966
    %v1646 = vpack.c.b16 %v974, %v967
    %v1647 = vpack.c.b16 %v975, %v968
    %v1648 = vpack.c.b16 %v976, %v969
    %v1649 = vpack.c.b16 %v977, %v970
    %v1650 = vpack.c.b16 %v985, %v978
    %v1651 = vpack.c.b16 %v986, %v979
    %v1652 = vpack.c.b16 %v987, %v980
    %v1653 = vpack.c.b16 %v988, %v981
    %v1654 = vpack.c.b16 %v989, %v982
    %v1655 = vpack.c.b16 %v990, %v983
    %v1656 = vpack.c.b16 %v991, %v984
    %v1657 = vpack.c.b16 %v999, %v992
    %v1658 = vpack.c.b16 %v1000, %v993
    %v1659 = vpack.c.b16 %v1001, %v994
    %v1660 = vpack.c.b16 %v1002, %v995
    %v1661 = vpack.c.b16 %v1003, %v996
    %v1662 = vpack.c.b16 %v1004, %v997
    %v1663 = vpack.c.b16 %v1005, %v998
    %v1664 = vpack.c.b16 %v1013, %v1006
    %v1665 = vpack.c.b16 %v1014, %v1007
    %v1666 = vpack.c.b16 %v1015, %v1008
    %v1667 = vpack.c.b16 %v1016, %v1009
    %v1668 = vpack.c.b16 %v1017, %v1010
    %v1669 = vpack.c.b16 %v1018, %v1011
    %v1670 = vpack.c.b16 %v1019, %v1012
    %v1671 = vpack.c.b16 %v1027, %v1020
    %v1672 = vpack.c.b16 %v1028, %v1021
    %v1673 = vpack.c.b16 %v1029, %v1022
    %v1674 = vpack.c.b16 %v1030, %v1023
    %v1675 = vpack.c.b16 %v1031, %v1024
    %v1676 = vpack.c.b16 %v1032, %v1025
    %v1677 = vpack.c.b16 %v1033, %v1026
    %v1678 = vpack.c.b16 %v1041, %v1034
    %v1679 = vpack.c.b16 %v1042, %v1035
    %v1680 = vpack.c.b16 %v1043, %v1036
    %v1681 = vpack.c.b16 %v1044, %v1037
    %v1682 = vpack.c.b16 %v1045, %v1038
    %v1683 = vpack.c.b16 %v1046, %v1039
    %v1684 = vpack.c.b16 %v1047, %v1040
    %v1685 = vpack.c.b16 %v1055, %v1048
    %v1686 = vpack.c.b16 %v1056, %v1049
    %v1687 = vpack.c.b16 %v1057, %v1050
    %v1688 = vpack.c.b16 %v1058, %v1051
    %v1689 = vpack.c.b16 %v1059, %v1052
    %v1690 = vpack.c.b16 %v1060, %v1053
    %v1691 = vpack.c.b16 %v1061, %v1054
    %v1692 = vpack.c.b16 %v1069, %v1062
    %v1693 = vpack.c.b16 %v1070, %v1063
    %v1694 = vpack.c.b16 %v1071, %v1064
    %v1695 = vpack.c.b16 %v1072, %v1065
    %v1696 = vpack.c.b16 %v1073, %v1066
    %v1697 = vpack.c.b16 %v1074, %v1067
    %v1698 = vpack.c.b16 %v1075, %v1068
    %v1699 = vpack.c.b16 %v1083, %v1076
    %v1700 = vpack.c.b16 %v1084, %v1077
    %v1701 = vpack.c.b16 %v1085, %v1078
    %v1702 = vpack.c.b16 %v1086, %v1079
    %v1703 = vpack.c.b16 %v1087, %v1080
    %v1704 = vpack.c.b16 %v1088, %v1081
    %v1705 = vpack.c.b16 %v1089, %v1082
    %v1706 = vpack.c.b16 %v1097, %v1090
    %v1707 = vpack.c.b16 %v1098, %v1091
    %v1708 = vpack.c.b16 %v1099, %v1092
    %v1709 = vpack.c.b16 %v1100, %v1093
    %v1710 = vpack.c.b16 %v1101, %v1094
    %v1711 = vpack.c.b16 %v1102, %v1095
    %v1712 = vpack.c.b16 %v1103, %v1096
    %v1713 = vpack.c.b16 %v1111, %v1104
    %v1714 = vpack.c.b16 %v1112, %v1105
    %v1715 = vpack.c.b16 %v1113, %v1106
    %v1716 = vpack.c.b16 %v1114, %v1107
    %v1717 = vpack.c.b16 %v1115, %v1108
    %v1718 = vpack.c.b16 %v1116, %v1109
    %v1719 = vpack.c.b16 %v1117, %v1110
    %v1720 = vpack.c.b16 %v1125, %v1118
    %v1721 = vpack.c.b16 %v1126, %v1119
    %v1722 = vpack.c.b16 %v1127, %v1120
    %v1723 = vpack.c.b16 %v1128, %v1121
    %v1724 = vpack.c.b16 %v1129, %v1122
    %v1725 = vpack.c.b16 %v1130, %v1123
    %v1726 = vpack.c.b16 %v1131, %v1124
    %v1727 = vpack.c.b16 %v1139, %v1132
    %v1728 = vpack.c.b16 %v1140, %v1133
    %v1729 = vpack.c.b16 %v1141, %v1134
    %v1730 = vpack.c.b16 %v1142, %v1135
    %v1731 = vpack.c.b16 %v1143, %v1136
    %v1732 = vpack.c.b16 %v1144, %v1137
    %v1733 = vpack.c.b16 %v1145, %v1138
    %v1734 = vpack.c.b16 %v1153, %v1146
    %v1735 = vpack.c.b16 %v1154, %v1147
    %v1736 = vpack.c.b16 %v1155, %v1148
    %v1737 = vpack.c.b16 %v1156, %v1149
    %v1738 = vpack.c.b16 %v1157, %v1150
    %v1739 = vpack.c.b16 %v1158, %v1151
    %v1740 = vpack.c.b16 %v1159, %v1152
    %v1741 = vpack.c.b16 %v1167, %v1160
    %v1742 = vpack.c.b16 %v1168, %v1161
    %v1743 = vpack.c.b16 %v1169, %v1162
    %v1744 = vpack.c.b16 %v1170, %v1163
    %v1745 = vpack.c.b16 %v1171, %v1164
    %v1746 = vpack.c.b16 %v1172, %v1165
    %v1747 = vpack.c.b16 %v1173, %v1166
    %v1748 = vpack.c.b16 %v1181, %v1174
    %v1749 = vpack.c.b16 %v1182, %v1175
    %v1750 = vpack.c.b16 %v1183, %v1176
    %v1751 = vpack.c.b16 %v1184, %v1177
    %v1752 = vpack.c.b16 %v1185, %v1178
    %v1753 = vpack.c.b16 %v1186, %v1179
    %v1754 = vpack.c.b16 %v1187, %v1180
    %v1755 = vpack.c.b16 %v1195, %v1188
    %v1756 = vpack.c.b16 %v1196, %v1189
    %v1757 = vpack.c.b16 %v1197, %v1190
    %v1758 = vpack.c.b16 %v1198, %v1191
    %v1759 = vpack.c.b16 %v1199, %v1192
    %v1760 = vpack.c.b16 %v1200, %v1193
    %v1761 = vpack.c.b16 %v1201, %v1194
    %v1762 = vpack.c.b16 %v1209, %v1202
    %v1763 = vpack.c.b16 %v1210, %v1203
    %v1764 = vpack.c.b16 %v1211, %v1204
    %v1765 = vpack.c.b16 %v1212, %v1205
    %v1766 = vpack.c.b16 %v1213, %v1206
    %v1767 = vpack.c.b16 %v1214, %v1207
    %v1768 = vpack.c.b16 %v1215, %v1208
    %v1769 = vpack.c.b16 %v1223, %v1216
    %v1770 = vpack.c.b16 %v1224, %v1217
    %v1771 = vpack.c.b16 %v1225, %v1218
    %v1772 = vpack.c.b16 %v1226, %v1219
    %v1773 = vpack.c.b16 %v1227, %v1220
    %v1774 = vpack.c.b16 %v1228, %v1221
    %v1775 = vpack.c.b16 %v1229, %v1222
    %v1776 = vpack.c.b16 %v1237, %v1230
    %v1777 = vpack.c.b16 %v1238, %v1231
    %v1778 = vpack.c.b16 %v1239, %v1232
    %v1779 = vpack.c.b16 %v1240, %v1233
    %v1780 = vpack.c.b16 %v1241, %v1234
    %v1781 = vpack.c.b16 %v1242, %v1235
    %v1782 = vpack.c.b16 %v1243, %v1236
    %v1783 = vpack.c.b16 %v1251, %v1244
    %v1784 = vpack.c.b16 %v1252, %v1245
    %v1785 = vpack.c.b16 %v1253, %v1246
    %v1786 = vpack.c.b16 %v1254, %v1247
    %v1787 = vpack.c.b16 %v1255, %v1248
    %v1788 = vpack.c.b16 %v1256, %v1249
    %v1789 = vpack.c.b16 %v1257, %v1250
    %v1790 = vpack.c.b16 %v1265, %v1258
    %v1791 = vpack.c.b16 %v1266, %v1259
    %v1792 = vpack.c.b16 %v1267, %v1260
    %v1793 = vpack.c.b16 %v1268, %v1261
    %v1794 = vpack.c.b16 %v1269, %v1262
    %v1795 = vpack.c.b16 %v1270, %v1263
    %v1796 = vpack.c.b16 %v1271, %v1264
    %v1797 = vpack.c.b16 %v1279, %v1272
    %v1798 = vpack.c.b16 %v1280, %v1273
    %v1799 = vpack.c.b16 %v1281, %v1274
    %v1800 = vpack.c.b16 %v1282, %v1275
    %v1801 = vpack.c.b16 %v1283, %v1276
    %v1802 = vpack.c.b16 %v1284, %v1277
    %v1803 = vpack.c.b16 %v1285, %v1278
    %v1804 = vpack.c.b16 %v1293, %v1286
    %v1805 = vpack.c.b16 %v1294, %v1287
    %v1806 = vpack.c.b16 %v1295, %v1288
    %v1807 = vpack.c.b16 %v1296, %v1289
    %v1808 = vpack.c.b16 %v1297, %v1290
    %v1809 = vpack.c.b16 %v1298, %v1291
    %v1810 = vpack.c.b16 %v1299, %v1292
    %v1811 = vpack.c.b16 %v1307, %v1300
    %v1812 = vpack.c.b16 %v1308, %v1301
    %v1813 = vpack.c.b16 %v1309, %v1302
    %v1814 = vpack.c.b16 %v1310, %v1303
    %v1815 = vpack.c.b16 %v1311, %v1304
    %v1816 = vpack.c.b16 %v1312, %v1305
    %v1817 = vpack.c.b16 %v1313, %v1306
    %v1818 = vpack.c.b16 %v1321, %v1314
    %v1819 = vpack.c.b16 %v1322, %v1315
    %v1820 = vpack.c.b16 %v1323, %v1316
    %v1821 = vpack.c.b16 %v1324, %v1317
    %v1822 = vpack.c.b16 %v1325, %v1318
    %v1823 = vpack.c.b16 %v1326, %v1319
    %v1824 = vpack.c.b16 %v1327, %v1320
    %v1825 = vpack.c.b16 %v1335, %v1328
    %v1826 = vpack.c.b16 %v1336, %v1329
    %v1827 = vpack.c.b16 %v1337, %v1330
    %v1828 = vpack.c.b16 %v1338, %v1331
    %v1829 = vpack.c.b16 %v1339, %v1332
    %v1830 = vpack.c.b16 %v1340, %v1333
    %v1831 = vpack.c.b16 %v1341, %v1334
    %v1832 = vpack.c.b16 %v1349, %v1342
    %v1833 = vpack.c.b16 %v1350, %v1343
    %v1834 = vpack.c.b16 %v1351, %v1344
    %v1835 = vpack.c.b16 %v1352, %v1345
    %v1836 = vpack.c.b16 %v1353, %v1346
    %v1837 = vpack.c.b16 %v1354, %v1347
    %v1838 = vpack.c.b16 %v1355, %v1348
    %v1839 = vpack.c.b16 %v1363, %v1356
    %v1840 = vpack.c.b16 %v1364, %v1357
    %v1841 = vpack.c.b16 %v1365, %v1358
    %v1842 = vpack.c.b16 %v1366, %v1359
    %v1843 = vpack.c.b16 %v1367, %v1360
    %v1844 = vpack.c.b16 %v1368, %v1361
    %v1845 = vpack.c.b16 %v1369, %v1362
    %v1846 = vpack.c.b16 %v1377, %v1370
    %v1847 = vpack.c.b16 %v1378, %v1371
    %v1848 = vpack.c.b16 %v1379, %v1372
    %v1849 = vpack.c.b16 %v1380, %v1373
    %v1850 = vpack.c.b16 %v1381, %v1374
    %v1851 = vpack.c.b16 %v1382, %v1375
    %v1852 = vpack.c.b16 %v1383, %v1376
    %v1853 = vpack.c.b16 %v1391, %v1384
    %v1854 = vpack.c.b16 %v1392, %v1385
    %v1855 = vpack.c.b16 %v1393, %v1386
    %v1856 = vpack.c.b16 %v1394, %v1387
    %v1857 = vpack.c.b16 %v1395, %v1388
    %v1858 = vpack.c.b16 %v1396, %v1389
    %v1859 = vpack.c.b16 %v1397, %v1390
    %v1860 = vpack.c.b16 %v1405, %v1398
    %v1861 = vpack.c.b16 %v1406, %v1399
    %v1862 = vpack.c.b16 %v1407, %v1400
    %v1863 = vpack.c.b16 %v1408, %v1401
    %v1864 = vpack.c.b16 %v1409, %v1402
    %v1865 = vpack.c.b16 %v1410, %v1403
    %v1866 = vpack.c.b16 %v1411, %v1404
    %v1867 = vpack.c.b16 %v1419, %v1412
    %v1868 = vpack.c.b16 %v1420, %v1413
    %v1869 = vpack.c.b16 %v1421, %v1414
    %v1870 = vpack.c.b16 %v1422, %v1415
    %v1871 = vpack.c.b16 %v1423, %v1416
    %v1872 = vpack.c.b16 %v1424, %v1417
    %v1873 = vpack.c.b16 %v1425, %v1418
    %v1874 = vpack.c.b16 %v1433, %v1426
    %v1875 = vpack.c.b16 %v1434, %v1427
    %v1876 = vpack.c.b16 %v1435, %v1428
    %v1877 = vpack.c.b16 %v1436, %v1429
    %v1878 = vpack.c.b16 %v1437, %v1430
    %v1879 = vpack.c.b16 %v1438, %v1431
    %v1880 = vpack.c.b16 %v1439, %v1432
    %v1881 = vpack.c.b16 %v1447, %v1440
    %v1882 = vpack.c.b16 %v1448, %v1441
    %v1883 = vpack.c.b16 %v1449, %v1442
    %v1884 = vpack.c.b16 %v1450, %v1443
    %v1885 = vpack.c.b16 %v1451, %v1444
    %v1886 = vpack.c.b16 %v1452, %v1445
    %v1887 = vpack.c.b16 %v1453, %v1446
    %v1888 = vpack.c.b16 %v1461, %v1454
    %v1889 = vpack.c.b16 %v1462, %v1455
    %v1890 = vpack.c.b16 %v1463, %v1456
    %v1891 = vpack.c.b16 %v1464, %v1457
    %v1892 = vpack.c.b16 %v1465, %v1458
    %v1893 = vpack.c.b16 %v1466, %v1459
    %v1894 = vpack.c.b16 %v1467, %v1460
    %v1895 = vpack.c.b16 %v1475, %v1468
    %v1896 = vpack.c.b16 %v1476, %v1469
    %v1897 = vpack.c.b16 %v1477, %v1470
    %v1898 = vpack.c.b16 %v1478, %v1471
    %v1899 = vpack.c.b16 %v1479, %v1472
    %v1900 = vpack.c.b16 %v1480, %v1473
    %v1901 = vpack.c.b16 %v1481, %v1474
    %v1902 = vpack.c.b16 %v1489, %v1482
    %v1903 = vpack.c.b16 %v1490, %v1483
    %v1904 = vpack.c.b16 %v1491, %v1484
    %v1905 = vpack.c.b16 %v1492, %v1485
    %v1906 = vpack.c.b16 %v1493, %v1486
    %v1907 = vpack.c.b16 %v1494, %v1487
    %v1908 = vpack.c.b16 %v1495, %v1488
    %v1909 = vpack.c.b16 %v1503, %v1496
    %v1910 = vpack.c.b16 %v1504, %v1497
    %v1911 = vpack.c.b16 %v1505, %v1498
    %v1912 = vpack.c.b16 %v1506, %v1499
    %v1913 = vpack.c.b16 %v1507, %v1500
    %v1914 = vpack.c.b16 %v1508, %v1501
    %v1915 = vpack.c.b16 %v1509, %v1502
    %v1916 = vpack.c.b16 %v1517, %v1510
    %v1917 = vpack.c.b16 %v1518, %v1511
    %v1918 = vpack.c.b16 %v1519, %v1512
    %v1919 = vpack.c.b16 %v1520, %v1513
    %v1920 = vpack.c.b16 %v1521, %v1514
    %v1921 = vpack.c.b16 %v1522, %v1515
    %v1922 = vpack.c.b16 %v1523, %v1516
    %v1923 = vpack.c.b16 %v1531, %v1524
    %v1924 = vpack.c.b16 %v1532, %v1525
    %v1925 = vpack.c.b16 %v1533, %v1526
    %v1926 = vpack.c.b16 %v1534, %v1527
    %v1927 = vpack.c.b16 %v1535, %v1528
    %v1928 = vpack.c.b16 %v1536, %v1529
    %v1929 = vpack.c.b16 %v1537, %v1530
    %v1930 = vpack.c.b16 %v1545, %v1538
    %v1931 = vpack.c.b16 %v1546, %v1539
    %v1932 = vpack.c.b16 %v1547, %v1540
    %v1933 = vpack.c.b16 %v1548, %v1541
    %v1934 = vpack.c.b16 %v1549, %v1542
    %v1935 = vpack.c.b16 %v1550, %v1543
    %v1936 = vpack.c.b16 %v1551, %v1544
    %v1937 = vpack.c.b16 %v1559, %v1552
    %v1938 = vpack.c.b16 %v1560, %v1553
    %v1939 = vpack.c.b16 %v1561, %v1554
    %v1940 = vpack.c.b16 %v1562, %v1555
    %v1941 = vpack.c.b16 %v1563, %v1556
    %v1942 = vpack.c.b16 %v1564, %v1557
    %v1943 = vpack.c.b16 %v1565, %v1558
    %v1944 = vpack.c.b16 %v1573, %v1566
    %v1945 = vpack.c.b16 %v1574, %v1567
    %v1946 = vpack.c.b16 %v1575, %v1568
    %v1947 = vpack.c.b16 %v1576, %v1569
    %v1948 = vpack.c.b16 %v1577, %v1570
    %v1949 = vpack.c.b16 %v1578, %v1571
    %v1950 = vpack.c.b16 %v1579, %v1572
    %v1951 = vpack.c.b16 %v1587, %v1580
    %v1952 = vpack.c.b16 %v1588, %v1581
    %v1953 = vpack.c.b16 %v1589, %v1582
    %v1954 = vpack.c.b16 %v1590, %v1583
    %v1955 = vpack.c.b16 %v1591, %v1584
    %v1956 = vpack.c.b16 %v1592, %v1585
    %v1957 = vpack.c.b16 %v1593, %v1586
    %v1958 = vpack.c.b16 %v1601, %v1594
    %v1959 = vpack.c.b16 %v1602, %v1595
    %v1960 = vpack.c.b16 %v1603, %v1596
    %v1961 = vpack.c.b16 %v1604, %v1597
    %v1962 = vpack.c.b16 %v1605, %v1598
    %v1963 = vpack.c.b16 %v1606, %v1599
    %v1964 = vpack.c.b16 %v1607, %v1600
    %v1965 = vpack.c.b16 %v1615, %v1608
    %v1966 = vpack.c.b16 %v1616, %v1609
    %v1967 = vpack.c.b16 %v1617, %v1610
    %v1968 = vpack.c.b16 %v1618, %v1611
    %v1969 = vpack.c.b16 %v1619, %v1612
    %v1970 = vpack.c.b16 %v1620, %v1613
    %v1971 = vpack.c.b16 %v1621, %v1614
    %v1972 = vpack.c.b16 %v1629, %v1622
    %v1973 = vpack.c.b16 %v1630, %v1623
    %v1974 = vpack.c.b16 %v1631, %v1624
    %v1975 = vpack.c.b16 %v1632, %v1625
    %v1976 = vpack.c.b16 %v1633, %v1626
    %v1977 = vpack.c.b16 %v1634, %v1627
    %v1978 = vpack.c.b16 %v1635, %v1628
    %vm2322 = vcmask 130048
    %v2324 = vsel %vm2322, %v128, 0
    %2326 = vmatprep.subr.bf16.mxu0 %v1686
    %2327 = vmatpush1.bf16.msra.mxu0 %v1685
    %2328 = vmatprep.subr.bf16.mxu0 %v1679
    %2329 = vmatpush1.bf16.msra.mxu0 %v1678
    %2330 = vmatprep.subr.bf16.mxu0 %v1672
    %2331 = vmatpush1.bf16.msra.mxu0 %v1671
    %2332 = vmatprep.subr.bf16.mxu0 %v1665
    %2333 = vmatpush1.bf16.msra.mxu0 %v1664
    %2334 = vmatprep.subr.bf16.mxu0 %v1658
    %2335 = vmatpush1.bf16.msra.mxu0 %v1657
    %2336 = vmatprep.subr.bf16.mxu0 %v1651
    %2337 = vmatpush1.bf16.msra.mxu0 %v1650
    %2338 = vmatprep.subr.bf16.mxu0 %v1644
    %2339 = vmatpush1.bf16.msra.mxu0 %v1643
    %2340 = vmatprep.subr.bf16.mxu0 %v1637
    %2341 = vmatpush1.bf16.msra.mxu0 %v1636
    %2342 = vmatprep.subr.bf16.mxu0 %v1742
    %2343 = vmatpush2.bf16.msra.mxu0 %v1741
    %2344 = vmatprep.subr.bf16.mxu0 %v1735
    %2345 = vmatpush2.bf16.msra.mxu0 %v1734
    %2346 = vmatprep.subr.bf16.mxu0 %v1728
    %2347 = vmatpush2.bf16.msra.mxu0 %v1727
    %2348 = vmatprep.subr.bf16.mxu0 %v1721
    %2349 = vmatpush2.bf16.msra.mxu0 %v1720
    %2350 = vmatprep.subr.bf16.mxu0 %v1714
    %2351 = vmatpush2.bf16.msra.mxu0 %v1713
    %2352 = vmatprep.subr.bf16.mxu0 %v1707
    %2353 = vmatpush2.bf16.msra.mxu0 %v1706
    %2354 = vmatprep.subr.bf16.mxu0 %v1700
    %2355 = vmatpush2.bf16.msra.mxu0 %v1699
    %2356 = vmatprep.subr.bf16.mxu0 %v1693
    %2357 = vmatpush2.bf16.msra.mxu0 %v1692
    %2358 = vmatprep.mubr.bf16.mxu0 %v123
    %2359 = vmatmul.mubr.bf16.gmra.mxu0 %v122
    %v2360 = vpop.f32.mrf.mxu0
    %v2361 = vadd.f32 %v526, %v2360
    %v2362 = vpop.f32.mrf.mxu0
    %v2363 = vadd.f32 %v530, %v2362
    %v2364 = vpop.f32.mrf.mxu0
    %v2365 = vpop.f32.mrf.mxu0
    %2366 = vdwg.mxu0
    %2367 = vmatprep.subr.bf16.mxu0 %v1798
    %2368 = vmatpush1.bf16.msra.mxu0 %v1797
    %2369 = vmatprep.subr.bf16.mxu0 %v1791
    %2370 = vmatpush1.bf16.msra.mxu0 %v1790
    %2371 = vmatprep.subr.bf16.mxu0 %v1784
    %2372 = vmatpush1.bf16.msra.mxu0 %v1783
    %2373 = vmatprep.subr.bf16.mxu0 %v1777
    %2374 = vmatpush1.bf16.msra.mxu0 %v1776
    %2375 = vmatprep.subr.bf16.mxu0 %v1770
    %2376 = vmatpush1.bf16.msra.mxu0 %v1769
    %2377 = vmatprep.subr.bf16.mxu0 %v1763
    %2378 = vmatpush1.bf16.msra.mxu0 %v1762
    %2379 = vmatprep.subr.bf16.mxu0 %v1756
    %2380 = vmatpush1.bf16.msra.mxu0 %v1755
    %2381 = vmatprep.subr.bf16.mxu0 %v1749
    %2382 = vmatpush1.bf16.msra.mxu0 %v1748
    %2383 = vmatprep.subr.bf16.mxu0 %v1854
    %2384 = vmatpush2.bf16.msra.mxu0 %v1853
    %2385 = vmatprep.subr.bf16.mxu0 %v1847
    %2386 = vmatpush2.bf16.msra.mxu0 %v1846
    %2387 = vmatprep.subr.bf16.mxu0 %v1840
    %2388 = vmatpush2.bf16.msra.mxu0 %v1839
    %2389 = vmatprep.subr.bf16.mxu0 %v1833
    %2390 = vmatpush2.bf16.msra.mxu0 %v1832
    %2391 = vmatprep.subr.bf16.mxu0 %v1826
    %2392 = vmatpush2.bf16.msra.mxu0 %v1825
    %2393 = vmatprep.subr.bf16.mxu0 %v1819
    %2394 = vmatpush2.bf16.msra.mxu0 %v1818
    %2395 = vmatprep.subr.bf16.mxu0 %v1812
    %2396 = vmatpush2.bf16.msra.mxu0 %v1811
    %2397 = vmatprep.subr.bf16.mxu0 %v1805
    %2398 = vmatpush2.bf16.msra.mxu0 %v1804
    %2399 = vmatprep.mubr.bf16.mxu0 %v125
    %2400 = vmatmul.mubr.bf16.gmra.mxu0 %v124
    %v2401 = vpop.f32.mrf.mxu0
    %v2402 = vadd.f32 %v2361, %v2401
    %v2403 = vpop.f32.mrf.mxu0
    %v2404 = vadd.f32 %v2363, %v2403
    %v2405 = vpop.f32.mrf.mxu0
    %v2406 = vpop.f32.mrf.mxu0
    %2407 = vdwg.mxu0
    %2408 = vmatprep.subr.bf16.mxu0 %v1910
    %2409 = vmatpush1.bf16.msra.mxu0 %v1909
    %2410 = vmatprep.subr.bf16.mxu0 %v1903
    %2411 = vmatpush1.bf16.msra.mxu0 %v1902
    %2412 = vmatprep.subr.bf16.mxu0 %v1896
    %2413 = vmatpush1.bf16.msra.mxu0 %v1895
    %2414 = vmatprep.subr.bf16.mxu0 %v1889
    %2415 = vmatpush1.bf16.msra.mxu0 %v1888
    %2416 = vmatprep.subr.bf16.mxu0 %v1882
    %2417 = vmatpush1.bf16.msra.mxu0 %v1881
    %2418 = vmatprep.subr.bf16.mxu0 %v1875
    %2419 = vmatpush1.bf16.msra.mxu0 %v1874
    %2420 = vmatprep.subr.bf16.mxu0 %v1868
    %2421 = vmatpush1.bf16.msra.mxu0 %v1867
    %2422 = vmatprep.subr.bf16.mxu0 %v1861
    %2423 = vmatpush1.bf16.msra.mxu0 %v1860
    %2424 = vmatprep.subr.bf16.mxu0 %v1966
    %2425 = vmatpush2.bf16.msra.mxu0 %v1965
    %2426 = vmatprep.subr.bf16.mxu0 %v1959
    %2427 = vmatpush2.bf16.msra.mxu0 %v1958
    %2428 = vmatprep.subr.bf16.mxu0 %v1952
    %2429 = vmatpush2.bf16.msra.mxu0 %v1951
    %2430 = vmatprep.subr.bf16.mxu0 %v1945
    %2431 = vmatpush2.bf16.msra.mxu0 %v1944
    %2432 = vmatprep.subr.bf16.mxu0 %v1938
    %2433 = vmatpush2.bf16.msra.mxu0 %v1937
    %2434 = vmatprep.subr.bf16.mxu0 %v1931
    %2435 = vmatpush2.bf16.msra.mxu0 %v1930
    %2436 = vmatprep.subr.bf16.mxu0 %v1924
    %2437 = vmatpush2.bf16.msra.mxu0 %v1923
    %2438 = vmatprep.subr.bf16.mxu0 %v1917
    %2439 = vmatpush2.bf16.msra.mxu0 %v1916
    %2440 = vmatprep.mubr.bf16.mxu0 %v127
    %2441 = vmatmul.mubr.bf16.gmra.mxu0 %v126
    %v2442 = vpop.f32.mrf.mxu0
    %v2443 = vadd.f32 %v2402, %v2442
    %v2444 = vpop.f32.mrf.mxu0
    %v2445 = vadd.f32 %v2404, %v2444
    %v2446 = vpop.f32.mrf.mxu0
    %v2447 = vpop.f32.mrf.mxu0
    %2448 = vdwg.mxu0
    %2449 = vmatprep.subr.bf16.mxu0 0
    %2450 = vmatpush1.bf16.msra.mxu0 0
    %2451 = vmatprep.subr.bf16.mxu0 0
    %2452 = vmatpush1.bf16.msra.mxu0 0
    %2453 = vmatprep.subr.bf16.mxu0 0
    %2454 = vmatpush1.bf16.msra.mxu0 0
    %2455 = vmatprep.subr.bf16.mxu0 0
    %2456 = vmatpush1.bf16.msra.mxu0 0
    %2457 = vmatprep.subr.bf16.mxu0 0
    %2458 = vmatpush1.bf16.msra.mxu0 0
    %2459 = vmatprep.subr.bf16.mxu0 0
    %2460 = vmatpush1.bf16.msra.mxu0 0
    %2461 = vmatprep.subr.bf16.mxu0 0
    %2462 = vmatpush1.bf16.msra.mxu0 0
    %2463 = vmatprep.subr.bf16.mxu0 %v1973
    %2464 = vmatpush1.bf16.msra.mxu0 %v1972
    %2465 = vmatprep.subr.bf16.mxu0 0
    %2466 = vmatpush2.bf16.msra.mxu0 0
    %2467 = vmatprep.subr.bf16.mxu0 0
    %2468 = vmatpush2.bf16.msra.mxu0 0
    %2469 = vmatprep.subr.bf16.mxu0 0
    %2470 = vmatpush2.bf16.msra.mxu0 0
    %2471 = vmatprep.subr.bf16.mxu0 0
    %2472 = vmatpush2.bf16.msra.mxu0 0
    %2473 = vmatprep.subr.bf16.mxu0 0
    %2474 = vmatpush2.bf16.msra.mxu0 0
    %2475 = vmatprep.subr.bf16.mxu0 0
    %2476 = vmatpush2.bf16.msra.mxu0 0
    %2477 = vmatprep.subr.bf16.mxu0 0
    %2478 = vmatpush2.bf16.msra.mxu0 0
    %2479 = vmatprep.subr.bf16.mxu0 0
    %2480 = vmatpush2.bf16.msra.mxu0 0
    %2481 = vmatprep.mubr.bf16.mxu0 0
    %2482 = vmatmul.mubr.bf16.gmra.mxu0 %v2324
    %v2483 = vpop.f32.mrf.mxu0
    %v2484 = vadd.f32 %v2443, %v2483
    %v2485 = vpop.f32.mrf.mxu0
    %v2486 = vadd.f32 %v2445, %v2485
    %v2487 = vpop.f32.mrf.mxu0
    %v2488 = vpop.f32.mrf.mxu0
    %2489 = vdwg.mxu0
    %2490 = vmatprep.subr.bf16.mxu0 %v1688
    %2491 = vmatpush1.bf16.msra.mxu0 %v1687
    %2492 = vmatprep.subr.bf16.mxu0 %v1681
    %2493 = vmatpush1.bf16.msra.mxu0 %v1680
    %2494 = vmatprep.subr.bf16.mxu0 %v1674
    %2495 = vmatpush1.bf16.msra.mxu0 %v1673
    %2496 = vmatprep.subr.bf16.mxu0 %v1667
    %2497 = vmatpush1.bf16.msra.mxu0 %v1666
    %2498 = vmatprep.subr.bf16.mxu0 %v1660
    %2499 = vmatpush1.bf16.msra.mxu0 %v1659
    %2500 = vmatprep.subr.bf16.mxu0 %v1653
    %2501 = vmatpush1.bf16.msra.mxu0 %v1652
    %2502 = vmatprep.subr.bf16.mxu0 %v1646
    %2503 = vmatpush1.bf16.msra.mxu0 %v1645
    %2504 = vmatprep.subr.bf16.mxu0 %v1639
    %2505 = vmatpush1.bf16.msra.mxu0 %v1638
    %2506 = vmatprep.subr.bf16.mxu0 %v1744
    %2507 = vmatpush2.bf16.msra.mxu0 %v1743
    %2508 = vmatprep.subr.bf16.mxu0 %v1737
    %2509 = vmatpush2.bf16.msra.mxu0 %v1736
    %2510 = vmatprep.subr.bf16.mxu0 %v1730
    %2511 = vmatpush2.bf16.msra.mxu0 %v1729
    %2512 = vmatprep.subr.bf16.mxu0 %v1723
    %2513 = vmatpush2.bf16.msra.mxu0 %v1722
    %2514 = vmatprep.subr.bf16.mxu0 %v1716
    %2515 = vmatpush2.bf16.msra.mxu0 %v1715
    %2516 = vmatprep.subr.bf16.mxu0 %v1709
    %2517 = vmatpush2.bf16.msra.mxu0 %v1708
    %2518 = vmatprep.subr.bf16.mxu0 %v1702
    %2519 = vmatpush2.bf16.msra.mxu0 %v1701
    %2520 = vmatprep.subr.bf16.mxu0 %v1695
    %2521 = vmatpush2.bf16.msra.mxu0 %v1694
    %2522 = vmatprep.mubr.bf16.mxu0 %v123
    %2523 = vmatmul.mubr.bf16.gmra.mxu0 %v122
    %v2524 = vpop.f32.mrf.mxu0
    %v2525 = vadd.f32 %v534, %v2524
    %v2526 = vpop.f32.mrf.mxu0
    %v2527 = vadd.f32 %v538, %v2526
    %v2528 = vpop.f32.mrf.mxu0
    %v2529 = vpop.f32.mrf.mxu0
    %2530 = vdwg.mxu0
    %2531 = vmatprep.subr.bf16.mxu0 %v1800
    %2532 = vmatpush1.bf16.msra.mxu0 %v1799
    %2533 = vmatprep.subr.bf16.mxu0 %v1793
    %2534 = vmatpush1.bf16.msra.mxu0 %v1792
    %2535 = vmatprep.subr.bf16.mxu0 %v1786
    %2536 = vmatpush1.bf16.msra.mxu0 %v1785
    %2537 = vmatprep.subr.bf16.mxu0 %v1779
    %2538 = vmatpush1.bf16.msra.mxu0 %v1778
    %2539 = vmatprep.subr.bf16.mxu0 %v1772
    %2540 = vmatpush1.bf16.msra.mxu0 %v1771
    %2541 = vmatprep.subr.bf16.mxu0 %v1765
    %2542 = vmatpush1.bf16.msra.mxu0 %v1764
    %2543 = vmatprep.subr.bf16.mxu0 %v1758
    %2544 = vmatpush1.bf16.msra.mxu0 %v1757
    %2545 = vmatprep.subr.bf16.mxu0 %v1751
    %2546 = vmatpush1.bf16.msra.mxu0 %v1750
    %2547 = vmatprep.subr.bf16.mxu0 %v1856
    %2548 = vmatpush2.bf16.msra.mxu0 %v1855
    %2549 = vmatprep.subr.bf16.mxu0 %v1849
    %2550 = vmatpush2.bf16.msra.mxu0 %v1848
    %2551 = vmatprep.subr.bf16.mxu0 %v1842
    %2552 = vmatpush2.bf16.msra.mxu0 %v1841
    %2553 = vmatprep.subr.bf16.mxu0 %v1835
    %2554 = vmatpush2.bf16.msra.mxu0 %v1834
    %2555 = vmatprep.subr.bf16.mxu0 %v1828
    %2556 = vmatpush2.bf16.msra.mxu0 %v1827
    %2557 = vmatprep.subr.bf16.mxu0 %v1821
    %2558 = vmatpush2.bf16.msra.mxu0 %v1820
    %2559 = vmatprep.subr.bf16.mxu0 %v1814
    %2560 = vmatpush2.bf16.msra.mxu0 %v1813
    %2561 = vmatprep.subr.bf16.mxu0 %v1807
    %2562 = vmatpush2.bf16.msra.mxu0 %v1806
    %2563 = vmatprep.mubr.bf16.mxu0 %v125
    %2564 = vmatmul.mubr.bf16.gmra.mxu0 %v124
    %v2565 = vpop.f32.mrf.mxu0
    %v2566 = vadd.f32 %v2525, %v2565
    %v2567 = vpop.f32.mrf.mxu0
    %v2568 = vadd.f32 %v2527, %v2567
    %v2569 = vpop.f32.mrf.mxu0
    %v2570 = vpop.f32.mrf.mxu0
    %2571 = vdwg.mxu0
    %2572 = vmatprep.subr.bf16.mxu0 %v1912
    %2573 = vmatpush1.bf16.msra.mxu0 %v1911
    %2574 = vmatprep.subr.bf16.mxu0 %v1905
    %2575 = vmatpush1.bf16.msra.mxu0 %v1904
    %2576 = vmatprep.subr.bf16.mxu0 %v1898
    %2577 = vmatpush1.bf16.msra.mxu0 %v1897
    %2578 = vmatprep.subr.bf16.mxu0 %v1891
    %2579 = vmatpush1.bf16.msra.mxu0 %v1890
    %2580 = vmatprep.subr.bf16.mxu0 %v1884
    %2581 = vmatpush1.bf16.msra.mxu0 %v1883
    %2582 = vmatprep.subr.bf16.mxu0 %v1877
    %2583 = vmatpush1.bf16.msra.mxu0 %v1876
    %2584 = vmatprep.subr.bf16.mxu0 %v1870
    %2585 = vmatpush1.bf16.msra.mxu0 %v1869
    %2586 = vmatprep.subr.bf16.mxu0 %v1863
    %2587 = vmatpush1.bf16.msra.mxu0 %v1862
    %2588 = vmatprep.subr.bf16.mxu0 %v1968
    %2589 = vmatpush2.bf16.msra.mxu0 %v1967
    %2590 = vmatprep.subr.bf16.mxu0 %v1961
    %2591 = vmatpush2.bf16.msra.mxu0 %v1960
    %2592 = vmatprep.subr.bf16.mxu0 %v1954
    %2593 = vmatpush2.bf16.msra.mxu0 %v1953
    %2594 = vmatprep.subr.bf16.mxu0 %v1947
    %2595 = vmatpush2.bf16.msra.mxu0 %v1946
    %2596 = vmatprep.subr.bf16.mxu0 %v1940
    %2597 = vmatpush2.bf16.msra.mxu0 %v1939
    %2598 = vmatprep.subr.bf16.mxu0 %v1933
    %2599 = vmatpush2.bf16.msra.mxu0 %v1932
    %2600 = vmatprep.subr.bf16.mxu0 %v1926
    %2601 = vmatpush2.bf16.msra.mxu0 %v1925
    %2602 = vmatprep.subr.bf16.mxu0 %v1919
    %2603 = vmatpush2.bf16.msra.mxu0 %v1918
    %2604 = vmatprep.mubr.bf16.mxu0 %v127
    %2605 = vmatmul.mubr.bf16.gmra.mxu0 %v126
    %v2606 = vpop.f32.mrf.mxu0
    %v2607 = vadd.f32 %v2566, %v2606
    %v2608 = vpop.f32.mrf.mxu0
    %v2609 = vadd.f32 %v2568, %v2608
    %v2610 = vpop.f32.mrf.mxu0
    %v2611 = vpop.f32.mrf.mxu0
    %2612 = vdwg.mxu0
    %2613 = vmatprep.subr.bf16.mxu0 0
    %2614 = vmatpush1.bf16.msra.mxu0 0
    %2615 = vmatprep.subr.bf16.mxu0 0
    %2616 = vmatpush1.bf16.msra.mxu0 0
    %2617 = vmatprep.subr.bf16.mxu0 0
    %2618 = vmatpush1.bf16.msra.mxu0 0
    %2619 = vmatprep.subr.bf16.mxu0 0
    %2620 = vmatpush1.bf16.msra.mxu0 0
    %2621 = vmatprep.subr.bf16.mxu0 0
    %2622 = vmatpush1.bf16.msra.mxu0 0
    %2623 = vmatprep.subr.bf16.mxu0 0
    %2624 = vmatpush1.bf16.msra.mxu0 0
    %2625 = vmatprep.subr.bf16.mxu0 0
    %2626 = vmatpush1.bf16.msra.mxu0 0
    %2627 = vmatprep.subr.bf16.mxu0 %v1975
    %2628 = vmatpush1.bf16.msra.mxu0 %v1974
    %2629 = vmatprep.subr.bf16.mxu0 0
    %2630 = vmatpush2.bf16.msra.mxu0 0
    %2631 = vmatprep.subr.bf16.mxu0 0
    %2632 = vmatpush2.bf16.msra.mxu0 0
    %2633 = vmatprep.subr.bf16.mxu0 0
    %2634 = vmatpush2.bf16.msra.mxu0 0
    %2635 = vmatprep.subr.bf16.mxu0 0
    %2636 = vmatpush2.bf16.msra.mxu0 0
    %2637 = vmatprep.subr.bf16.mxu0 0
    %2638 = vmatpush2.bf16.msra.mxu0 0
    %2639 = vmatprep.subr.bf16.mxu0 0
    %2640 = vmatpush2.bf16.msra.mxu0 0
    %2641 = vmatprep.subr.bf16.mxu0 0
    %2642 = vmatpush2.bf16.msra.mxu0 0
    %2643 = vmatprep.subr.bf16.mxu0 0
    %2644 = vmatpush2.bf16.msra.mxu0 0
    %2645 = vmatprep.mubr.bf16.mxu0 0
    %2646 = vmatmul.mubr.bf16.gmra.mxu0 %v2324
    %v2647 = vpop.f32.mrf.mxu0
    %v2648 = vadd.f32 %v2607, %v2647
    %v2649 = vpop.f32.mrf.mxu0
    %v2650 = vadd.f32 %v2609, %v2649
    %v2651 = vpop.f32.mrf.mxu0
    %v2652 = vpop.f32.mrf.mxu0
    %2653 = vdwg.mxu0
    %2654 = vmatprep.subr.bf16.mxu0 %v1690
    %2655 = vmatpush1.bf16.msra.mxu0 %v1689
    %2656 = vmatprep.subr.bf16.mxu0 %v1683
    %2657 = vmatpush1.bf16.msra.mxu0 %v1682
    %2658 = vmatprep.subr.bf16.mxu0 %v1676
    %2659 = vmatpush1.bf16.msra.mxu0 %v1675
    %2660 = vmatprep.subr.bf16.mxu0 %v1669
    %2661 = vmatpush1.bf16.msra.mxu0 %v1668
    %2662 = vmatprep.subr.bf16.mxu0 %v1662
    %2663 = vmatpush1.bf16.msra.mxu0 %v1661
    %2664 = vmatprep.subr.bf16.mxu0 %v1655
    %2665 = vmatpush1.bf16.msra.mxu0 %v1654
    %2666 = vmatprep.subr.bf16.mxu0 %v1648
    %2667 = vmatpush1.bf16.msra.mxu0 %v1647
    %2668 = vmatprep.subr.bf16.mxu0 %v1641
    %2669 = vmatpush1.bf16.msra.mxu0 %v1640
    %2670 = vmatprep.subr.bf16.mxu0 %v1746
    %2671 = vmatpush2.bf16.msra.mxu0 %v1745
    %2672 = vmatprep.subr.bf16.mxu0 %v1739
    %2673 = vmatpush2.bf16.msra.mxu0 %v1738
    %2674 = vmatprep.subr.bf16.mxu0 %v1732
    %2675 = vmatpush2.bf16.msra.mxu0 %v1731
    %2676 = vmatprep.subr.bf16.mxu0 %v1725
    %2677 = vmatpush2.bf16.msra.mxu0 %v1724
    %2678 = vmatprep.subr.bf16.mxu0 %v1718
    %2679 = vmatpush2.bf16.msra.mxu0 %v1717
    %2680 = vmatprep.subr.bf16.mxu0 %v1711
    %2681 = vmatpush2.bf16.msra.mxu0 %v1710
    %2682 = vmatprep.subr.bf16.mxu0 %v1704
    %2683 = vmatpush2.bf16.msra.mxu0 %v1703
    %2684 = vmatprep.subr.bf16.mxu0 %v1697
    %2685 = vmatpush2.bf16.msra.mxu0 %v1696
    %2686 = vmatprep.mubr.bf16.mxu0 %v123
    %2687 = vmatmul.mubr.bf16.gmra.mxu0 %v122
    %v2688 = vpop.f32.mrf.mxu0
    %v2689 = vadd.f32 %v542, %v2688
    %v2690 = vpop.f32.mrf.mxu0
    %v2691 = vadd.f32 %v546, %v2690
    %v2692 = vpop.f32.mrf.mxu0
    %v2693 = vpop.f32.mrf.mxu0
    %2694 = vdwg.mxu0
    %2695 = vmatprep.subr.bf16.mxu0 %v1802
    %2696 = vmatpush1.bf16.msra.mxu0 %v1801
    %2697 = vmatprep.subr.bf16.mxu0 %v1795
    %2698 = vmatpush1.bf16.msra.mxu0 %v1794
    %2699 = vmatprep.subr.bf16.mxu0 %v1788
    %2700 = vmatpush1.bf16.msra.mxu0 %v1787
    %2701 = vmatprep.subr.bf16.mxu0 %v1781
    %2702 = vmatpush1.bf16.msra.mxu0 %v1780
    %2703 = vmatprep.subr.bf16.mxu0 %v1774
    %2704 = vmatpush1.bf16.msra.mxu0 %v1773
    %2705 = vmatprep.subr.bf16.mxu0 %v1767
    %2706 = vmatpush1.bf16.msra.mxu0 %v1766
    %2707 = vmatprep.subr.bf16.mxu0 %v1760
    %2708 = vmatpush1.bf16.msra.mxu0 %v1759
    %2709 = vmatprep.subr.bf16.mxu0 %v1753
    %2710 = vmatpush1.bf16.msra.mxu0 %v1752
    %2711 = vmatprep.subr.bf16.mxu0 %v1858
    %2712 = vmatpush2.bf16.msra.mxu0 %v1857
    %2713 = vmatprep.subr.bf16.mxu0 %v1851
    %2714 = vmatpush2.bf16.msra.mxu0 %v1850
    %2715 = vmatprep.subr.bf16.mxu0 %v1844
    %2716 = vmatpush2.bf16.msra.mxu0 %v1843
    %2717 = vmatprep.subr.bf16.mxu0 %v1837
    %2718 = vmatpush2.bf16.msra.mxu0 %v1836
    %2719 = vmatprep.subr.bf16.mxu0 %v1830
    %2720 = vmatpush2.bf16.msra.mxu0 %v1829
    %2721 = vmatprep.subr.bf16.mxu0 %v1823
    %2722 = vmatpush2.bf16.msra.mxu0 %v1822
    %2723 = vmatprep.subr.bf16.mxu0 %v1816
    %2724 = vmatpush2.bf16.msra.mxu0 %v1815
    %2725 = vmatprep.subr.bf16.mxu0 %v1809
    %2726 = vmatpush2.bf16.msra.mxu0 %v1808
    %2727 = vmatprep.mubr.bf16.mxu0 %v125
    %2728 = vmatmul.mubr.bf16.gmra.mxu0 %v124
    %v2729 = vpop.f32.mrf.mxu0
    %v2730 = vadd.f32 %v2689, %v2729
    %v2731 = vpop.f32.mrf.mxu0
    %v2732 = vadd.f32 %v2691, %v2731
    %v2733 = vpop.f32.mrf.mxu0
    %v2734 = vpop.f32.mrf.mxu0
    %2735 = vdwg.mxu0
    %2736 = vmatprep.subr.bf16.mxu0 %v1914
    %2737 = vmatpush1.bf16.msra.mxu0 %v1913
    %2738 = vmatprep.subr.bf16.mxu0 %v1907
    %2739 = vmatpush1.bf16.msra.mxu0 %v1906
    %2740 = vmatprep.subr.bf16.mxu0 %v1900
    %2741 = vmatpush1.bf16.msra.mxu0 %v1899
    %2742 = vmatprep.subr.bf16.mxu0 %v1893
    %2743 = vmatpush1.bf16.msra.mxu0 %v1892
    %2744 = vmatprep.subr.bf16.mxu0 %v1886
    %2745 = vmatpush1.bf16.msra.mxu0 %v1885
    %2746 = vmatprep.subr.bf16.mxu0 %v1879
    %2747 = vmatpush1.bf16.msra.mxu0 %v1878
    %2748 = vmatprep.subr.bf16.mxu0 %v1872
    %2749 = vmatpush1.bf16.msra.mxu0 %v1871
    %2750 = vmatprep.subr.bf16.mxu0 %v1865
    %2751 = vmatpush1.bf16.msra.mxu0 %v1864
    %2752 = vmatprep.subr.bf16.mxu0 %v1970
    %2753 = vmatpush2.bf16.msra.mxu0 %v1969
    %2754 = vmatprep.subr.bf16.mxu0 %v1963
    %2755 = vmatpush2.bf16.msra.mxu0 %v1962
    %2756 = vmatprep.subr.bf16.mxu0 %v1956
    %2757 = vmatpush2.bf16.msra.mxu0 %v1955
    %2758 = vmatprep.subr.bf16.mxu0 %v1949
    %2759 = vmatpush2.bf16.msra.mxu0 %v1948
    %2760 = vmatprep.subr.bf16.mxu0 %v1942
    %2761 = vmatpush2.bf16.msra.mxu0 %v1941
    %2762 = vmatprep.subr.bf16.mxu0 %v1935
    %2763 = vmatpush2.bf16.msra.mxu0 %v1934
    %2764 = vmatprep.subr.bf16.mxu0 %v1928
    %2765 = vmatpush2.bf16.msra.mxu0 %v1927
    %2766 = vmatprep.subr.bf16.mxu0 %v1921
    %2767 = vmatpush2.bf16.msra.mxu0 %v1920
    %2768 = vmatprep.mubr.bf16.mxu0 %v127
    %2769 = vmatmul.mubr.bf16.gmra.mxu0 %v126
    %v2770 = vpop.f32.mrf.mxu0
    %v2771 = vadd.f32 %v2730, %v2770
    %v2772 = vpop.f32.mrf.mxu0
    %v2773 = vadd.f32 %v2732, %v2772
    %v2774 = vpop.f32.mrf.mxu0
    %v2775 = vpop.f32.mrf.mxu0
    %2776 = vdwg.mxu0
    %2777 = vmatprep.subr.bf16.mxu0 0
    %2778 = vmatpush1.bf16.msra.mxu0 0
    %2779 = vmatprep.subr.bf16.mxu0 0
    %2780 = vmatpush1.bf16.msra.mxu0 0
    %2781 = vmatprep.subr.bf16.mxu0 0
    %2782 = vmatpush1.bf16.msra.mxu0 0
    %2783 = vmatprep.subr.bf16.mxu0 0
    %2784 = vmatpush1.bf16.msra.mxu0 0
    %2785 = vmatprep.subr.bf16.mxu0 0
    %2786 = vmatpush1.bf16.msra.mxu0 0
    %2787 = vmatprep.subr.bf16.mxu0 0
    %2788 = vmatpush1.bf16.msra.mxu0 0
    %2789 = vmatprep.subr.bf16.mxu0 0
    %2790 = vmatpush1.bf16.msra.mxu0 0
    %2791 = vmatprep.subr.bf16.mxu0 %v1977
    %2792 = vmatpush1.bf16.msra.mxu0 %v1976
    %2793 = vmatprep.subr.bf16.mxu0 0
    %2794 = vmatpush2.bf16.msra.mxu0 0
    %2795 = vmatprep.subr.bf16.mxu0 0
    %2796 = vmatpush2.bf16.msra.mxu0 0
    %2797 = vmatprep.subr.bf16.mxu0 0
    %2798 = vmatpush2.bf16.msra.mxu0 0
    %2799 = vmatprep.subr.bf16.mxu0 0
    %2800 = vmatpush2.bf16.msra.mxu0 0
    %2801 = vmatprep.subr.bf16.mxu0 0
    %2802 = vmatpush2.bf16.msra.mxu0 0
    %2803 = vmatprep.subr.bf16.mxu0 0
    %2804 = vmatpush2.bf16.msra.mxu0 0
    %2805 = vmatprep.subr.bf16.mxu0 0
    %2806 = vmatpush2.bf16.msra.mxu0 0
    %2807 = vmatprep.subr.bf16.mxu0 0
    %2808 = vmatpush2.bf16.msra.mxu0 0
    %2809 = vmatprep.mubr.bf16.mxu0 0
    %2810 = vmatmul.mubr.bf16.gmra.mxu0 %v2324
    %v2811 = vpop.f32.mrf.mxu0
    %v2812 = vadd.f32 %v2771, %v2811
    %v2813 = vpop.f32.mrf.mxu0
    %v2814 = vadd.f32 %v2773, %v2813
    %v2815 = vpop.f32.mrf.mxu0
    %v2816 = vpop.f32.mrf.mxu0
    %2817 = vdwg.mxu0
    %2818 = vmatprep.subr.bf16.mxu0 0
    %2819 = vmatpush1.bf16.msra.mxu0 %v1691
    %2820 = vmatprep.subr.bf16.mxu0 0
    %2821 = vmatpush1.bf16.msra.mxu0 %v1684
    %2822 = vmatprep.subr.bf16.mxu0 0
    %2823 = vmatpush1.bf16.msra.mxu0 %v1677
    %2824 = vmatprep.subr.bf16.mxu0 0
    %2825 = vmatpush1.bf16.msra.mxu0 %v1670
    %2826 = vmatprep.subr.bf16.mxu0 0
    %2827 = vmatpush1.bf16.msra.mxu0 %v1663
    %2828 = vmatprep.subr.bf16.mxu0 0
    %2829 = vmatpush1.bf16.msra.mxu0 %v1656
    %2830 = vmatprep.subr.bf16.mxu0 0
    %2831 = vmatpush1.bf16.msra.mxu0 %v1649
    %2832 = vmatprep.subr.bf16.mxu0 0
    %2833 = vmatpush1.bf16.msra.mxu0 %v1642
    %2834 = vmatprep.subr.bf16.mxu0 0
    %2835 = vmatpush2.bf16.msra.mxu0 %v1747
    %2836 = vmatprep.subr.bf16.mxu0 0
    %2837 = vmatpush2.bf16.msra.mxu0 %v1740
    %2838 = vmatprep.subr.bf16.mxu0 0
    %2839 = vmatpush2.bf16.msra.mxu0 %v1733
    %2840 = vmatprep.subr.bf16.mxu0 0
    %2841 = vmatpush2.bf16.msra.mxu0 %v1726
    %2842 = vmatprep.subr.bf16.mxu0 0
    %2843 = vmatpush2.bf16.msra.mxu0 %v1719
    %2844 = vmatprep.subr.bf16.mxu0 0
    %2845 = vmatpush2.bf16.msra.mxu0 %v1712
    %2846 = vmatprep.subr.bf16.mxu0 0
    %2847 = vmatpush2.bf16.msra.mxu0 %v1705
    %2848 = vmatprep.subr.bf16.mxu0 0
    %2849 = vmatpush2.bf16.msra.mxu0 %v1698
    %2850 = vmatprep.mubr.bf16.mxu0 %v123
    %2851 = vmatmul.mubr.bf16.gmra.mxu0 %v122
    %v2852 = vpop.f32.mrf.mxu0
    %v2853 = vadd.f32 %v550, %v2852
    %v2854 = vpop.f32.mrf.mxu0
    %v2855 = vpop.f32.mrf.mxu0
    %v2856 = vpop.f32.mrf.mxu0
    %2857 = vdwg.mxu0
    %2858 = vmatprep.subr.bf16.mxu0 0
    %2859 = vmatpush1.bf16.msra.mxu0 %v1803
    %2860 = vmatprep.subr.bf16.mxu0 0
    %2861 = vmatpush1.bf16.msra.mxu0 %v1796
    %2862 = vmatprep.subr.bf16.mxu0 0
    %2863 = vmatpush1.bf16.msra.mxu0 %v1789
    %2864 = vmatprep.subr.bf16.mxu0 0
    %2865 = vmatpush1.bf16.msra.mxu0 %v1782
    %2866 = vmatprep.subr.bf16.mxu0 0
    %2867 = vmatpush1.bf16.msra.mxu0 %v1775
    %2868 = vmatprep.subr.bf16.mxu0 0
    %2869 = vmatpush1.bf16.msra.mxu0 %v1768
    %2870 = vmatprep.subr.bf16.mxu0 0
    %2871 = vmatpush1.bf16.msra.mxu0 %v1761
    %2872 = vmatprep.subr.bf16.mxu0 0
    %2873 = vmatpush1.bf16.msra.mxu0 %v1754
    %2874 = vmatprep.subr.bf16.mxu0 0
    %2875 = vmatpush2.bf16.msra.mxu0 %v1859
    %2876 = vmatprep.subr.bf16.mxu0 0
    %2877 = vmatpush2.bf16.msra.mxu0 %v1852
    %2878 = vmatprep.subr.bf16.mxu0 0
    %2879 = vmatpush2.bf16.msra.mxu0 %v1845
    %2880 = vmatprep.subr.bf16.mxu0 0
    %2881 = vmatpush2.bf16.msra.mxu0 %v1838
    %2882 = vmatprep.subr.bf16.mxu0 0
    %2883 = vmatpush2.bf16.msra.mxu0 %v1831
    %2884 = vmatprep.subr.bf16.mxu0 0
    %2885 = vmatpush2.bf16.msra.mxu0 %v1824
    %2886 = vmatprep.subr.bf16.mxu0 0
    %2887 = vmatpush2.bf16.msra.mxu0 %v1817
    %2888 = vmatprep.subr.bf16.mxu0 0
    %2889 = vmatpush2.bf16.msra.mxu0 %v1810
    %2890 = vmatprep.mubr.bf16.mxu0 %v125
    %2891 = vmatmul.mubr.bf16.gmra.mxu0 %v124
    %v2892 = vpop.f32.mrf.mxu0
    %v2893 = vadd.f32 %v2853, %v2892
    %v2894 = vpop.f32.mrf.mxu0
    %v2895 = vpop.f32.mrf.mxu0
    %v2896 = vpop.f32.mrf.mxu0
    %2897 = vdwg.mxu0
    %2898 = vmatprep.subr.bf16.mxu0 0
    %2899 = vmatpush1.bf16.msra.mxu0 %v1915
    %2900 = vmatprep.subr.bf16.mxu0 0
    %2901 = vmatpush1.bf16.msra.mxu0 %v1908
    %2902 = vmatprep.subr.bf16.mxu0 0
    %2903 = vmatpush1.bf16.msra.mxu0 %v1901
    %2904 = vmatprep.subr.bf16.mxu0 0
    %2905 = vmatpush1.bf16.msra.mxu0 %v1894
    %2906 = vmatprep.subr.bf16.mxu0 0
    %2907 = vmatpush1.bf16.msra.mxu0 %v1887
    %2908 = vmatprep.subr.bf16.mxu0 0
    %2909 = vmatpush1.bf16.msra.mxu0 %v1880
    %2910 = vmatprep.subr.bf16.mxu0 0
    %2911 = vmatpush1.bf16.msra.mxu0 %v1873
    %2912 = vmatprep.subr.bf16.mxu0 0
    %2913 = vmatpush1.bf16.msra.mxu0 %v1866
    %2914 = vmatprep.subr.bf16.mxu0 0
    %2915 = vmatpush2.bf16.msra.mxu0 %v1971
    %2916 = vmatprep.subr.bf16.mxu0 0
    %2917 = vmatpush2.bf16.msra.mxu0 %v1964
    %2918 = vmatprep.subr.bf16.mxu0 0
    %2919 = vmatpush2.bf16.msra.mxu0 %v1957
    %2920 = vmatprep.subr.bf16.mxu0 0
    %2921 = vmatpush2.bf16.msra.mxu0 %v1950
    %2922 = vmatprep.subr.bf16.mxu0 0
    %2923 = vmatpush2.bf16.msra.mxu0 %v1943
    %2924 = vmatprep.subr.bf16.mxu0 0
    %2925 = vmatpush2.bf16.msra.mxu0 %v1936
    %2926 = vmatprep.subr.bf16.mxu0 0
    %2927 = vmatpush2.bf16.msra.mxu0 %v1929
    %2928 = vmatprep.subr.bf16.mxu0 0
    %2929 = vmatpush2.bf16.msra.mxu0 %v1922
    %2930 = vmatprep.mubr.bf16.mxu0 %v127
    %2931 = vmatmul.mubr.bf16.gmra.mxu0 %v126
    %v2932 = vpop.f32.mrf.mxu0
    %v2933 = vadd.f32 %v2893, %v2932
    %v2934 = vpop.f32.mrf.mxu0
    %v2935 = vpop.f32.mrf.mxu0
    %v2936 = vpop.f32.mrf.mxu0
    %2937 = vdwg.mxu0
    %2938 = vmatprep.subr.bf16.mxu0 0
    %2939 = vmatpush1.bf16.msra.mxu0 0
    %2940 = vmatprep.subr.bf16.mxu0 0
    %2941 = vmatpush1.bf16.msra.mxu0 0
    %2942 = vmatprep.subr.bf16.mxu0 0
    %2943 = vmatpush1.bf16.msra.mxu0 0
    %2944 = vmatprep.subr.bf16.mxu0 0
    %2945 = vmatpush1.bf16.msra.mxu0 0
    %2946 = vmatprep.subr.bf16.mxu0 0
    %2947 = vmatpush1.bf16.msra.mxu0 0
    %2948 = vmatprep.subr.bf16.mxu0 0
    %2949 = vmatpush1.bf16.msra.mxu0 0
    %2950 = vmatprep.subr.bf16.mxu0 0
    %2951 = vmatpush1.bf16.msra.mxu0 0
    %2952 = vmatprep.subr.bf16.mxu0 0
    %2953 = vmatpush1.bf16.msra.mxu0 %v1978
    %2954 = vmatprep.subr.bf16.mxu0 0
    %2955 = vmatpush2.bf16.msra.mxu0 0
    %2956 = vmatprep.subr.bf16.mxu0 0
    %2957 = vmatpush2.bf16.msra.mxu0 0
    %2958 = vmatprep.subr.bf16.mxu0 0
    %2959 = vmatpush2.bf16.msra.mxu0 0
    %2960 = vmatprep.subr.bf16.mxu0 0
    %2961 = vmatpush2.bf16.msra.mxu0 0
    %2962 = vmatprep.subr.bf16.mxu0 0
    %2963 = vmatpush2.bf16.msra.mxu0 0
    %2964 = vmatprep.subr.bf16.mxu0 0
    %2965 = vmatpush2.bf16.msra.mxu0 0
    %2966 = vmatprep.subr.bf16.mxu0 0
    %2967 = vmatpush2.bf16.msra.mxu0 0
    %2968 = vmatprep.subr.bf16.mxu0 0
    %2969 = vmatpush2.bf16.msra.mxu0 0
    %2970 = vmatprep.mubr.bf16.mxu0 0
    %2971 = vmatmul.mubr.bf16.gmra.mxu0 %v2324
    %v2972 = vpop.f32.mrf.mxu0
    %v2973 = vadd.f32 %v2933, %v2972
    %v2974 = vpop.f32.mrf.mxu0
    %v2975 = vpop.f32.mrf.mxu0
    %v2976 = vpop.f32.mrf.mxu0
    %2977 = vdwg.mxu0
    %v2978 = vmax.f32 %v2484, 0.0
    %v2979 = vmax.f32 %v2486, 0.0
    %v2980 = vmax.f32 %v2648, 0.0
    %v2981 = vmax.f32 %v2650, 0.0
    %v2982 = vmax.f32 %v2812, 0.0
    %v2983 = vmax.f32 %v2814, 0.0
    %v2984 = vmax.f32 %v2973, 0.0
    %v2985 = vpack.c.bf16 %v2978, %v2978
    %v2986 = vpack.c.bf16 %v2979, %v2979
    %v2987 = vpack.c.bf16 %v2980, %v2980
    %v2988 = vpack.c.bf16 %v2981, %v2981
    %v2989 = vpack.c.bf16 %v2982, %v2982
    %v2990 = vpack.c.bf16 %v2983, %v2983
    %v2991 = vpack.c.bf16 %v2984, %v2984
    %v2992 = vld [vmem:[#allocation8] sm:$0xff]
    %v2993 = vld [vmem:[#allocation8 + $0x8] sm:$0xff]
    %v2994 = vld [vmem:[#allocation8 + $0x10] sm:$0xff]
    %v2995 = vld [vmem:[#allocation8 + $0x18] sm:$0xf]
    %v2996 = vld [vmem:[#allocation8 + $0x1c] sm:$0xff]
    %v2997 = vld [vmem:[#allocation8 + $0x24] sm:$0xff]
    %v2998 = vld [vmem:[#allocation8 + $0x2c] sm:$0xff]
    %v2999 = vld [vmem:[#allocation8 + $0x34] sm:$0xf]
    %v3000 = vld [vmem:[#allocation8 + $0x38] sm:$0xff]
    %v3001 = vld [vmem:[#allocation8 + $0x40] sm:$0xff]
    %v3002 = vld [vmem:[#allocation8 + $0x48] sm:$0xff]
    %v3003 = vld [vmem:[#allocation8 + $0x50] sm:$0xf]
    %v3004 = vld [vmem:[#allocation8 + $0x54] sm:$0xff]
    %v3005 = vld [vmem:[#allocation8 + $0x5c] sm:$0xff]
    %v3006 = vld [vmem:[#allocation8 + $0x64] sm:$0xff]
    %v3007 = vld [vmem:[#allocation8 + $0x6c] sm:$0xf]
    %v3008 = vld [vmem:[#allocation8 + $0x70] sm:$0xff]
    %v3009 = vld [vmem:[#allocation8 + $0x78] sm:$0xff]
    %v3010 = vld [vmem:[#allocation8 + $0x80] sm:$0xff]
    %v3011 = vld [vmem:[#allocation8 + $0x88] sm:$0xf]
    %v3012 = vld [vmem:[#allocation8 + $0x8c] sm:$0xff]
    %v3013 = vld [vmem:[#allocation8 + $0x94] sm:$0xff]
    %v3014 = vld [vmem:[#allocation8 + $0x9c] sm:$0xff]
    %v3015 = vld [vmem:[#allocation8 + $0xa4] sm:$0xf]
    %v3016 = vld [vmem:[#allocation8 + $0xa8] sm:$0xff]
    %v3017 = vld [vmem:[#allocation8 + $0xb0] sm:$0xff]
    %v3018 = vld [vmem:[#allocation8 + $0xb8] sm:$0xff]
    %v3019 = vld [vmem:[#allocation8 + $0xc0] sm:$0xf]
    %v3020 = vld [vmem:[#allocation8 + $0xc4] sm:$0xff]
    %v3021 = vld [vmem:[#allocation8 + $0xcc] sm:$0xff]
    %v3022 = vld [vmem:[#allocation8 + $0xd4] sm:$0xff]
    %v3023 = vld [vmem:[#allocation8 + $0xdc] sm:$0xf]
    %v3024 = vld [vmem:[#allocation8 + $0xe0] sm:$0xff]
    %v3025 = vld [vmem:[#allocation8 + $0xe8] sm:$0xff]
    %v3026 = vld [vmem:[#allocation8 + $0xf0] sm:$0xff]
    %v3027 = vld [vmem:[#allocation8 + $0xf8] sm:$0xf]
    %v3028 = vld [vmem:[#allocation8 + $0xfc] sm:$0xff]
    %v3029 = vld [vmem:[#allocation8 + $0x104] sm:$0xff]
    %v3030 = vld [vmem:[#allocation8 + $0x10c] sm:$0xff]
    %v3031 = vld [vmem:[#allocation8 + $0x114] sm:$0xf]
    %v3032 = vld [vmem:[#allocation8 + $0x118] sm:$0xff]
    %v3033 = vld [vmem:[#allocation8 + $0x120] sm:$0xff]
    %v3034 = vld [vmem:[#allocation8 + $0x128] sm:$0xff]
    %v3035 = vld [vmem:[#allocation8 + $0x130] sm:$0xf]
    %v3036 = vld [vmem:[#allocation8 + $0x134] sm:$0xff]
    %v3037 = vld [vmem:[#allocation8 + $0x13c] sm:$0xff]
    %v3038 = vld [vmem:[#allocation8 + $0x144] sm:$0xff]
    %v3039 = vld [vmem:[#allocation8 + $0x14c] sm:$0xf]
    %v3040 = vld [vmem:[#allocation8 + $0x150] sm:$0xff]
    %v3041 = vld [vmem:[#allocation8 + $0x158] sm:$0xff]
    %v3042 = vld [vmem:[#allocation8 + $0x160] sm:$0xff]
    %v3043 = vld [vmem:[#allocation8 + $0x168] sm:$0xf]
    %v3044 = vld [vmem:[#allocation8 + $0x16c] sm:$0xff]
    %v3045 = vld [vmem:[#allocation8 + $0x174] sm:$0xff]
    %v3046 = vld [vmem:[#allocation8 + $0x17c] sm:$0xff]
    %v3047 = vld [vmem:[#allocation8 + $0x184] sm:$0xf]
    %v3048 = vld [vmem:[#allocation8 + $0x188] sm:$0xff]
    %v3049 = vld [vmem:[#allocation8 + $0x190] sm:$0xff]
    %v3050 = vld [vmem:[#allocation8 + $0x198] sm:$0xff]
    %v3051 = vld [vmem:[#allocation8 + $0x1a0] sm:$0xf]
    %v3052 = vld [vmem:[#allocation8 + $0x1a4] sm:$0xff]
    %v3053 = vld [vmem:[#allocation8 + $0x1ac] sm:$0xff]
    %v3054 = vld [vmem:[#allocation8 + $0x1b4] sm:$0xff]
    %v3055 = vld [vmem:[#allocation8 + $0x1bc] sm:$0xf]
    %v3056 = vld [vmem:[#allocation8 + $0x1c0] sm:$0xff]
    %v3057 = vld [vmem:[#allocation8 + $0x1c8] sm:$0xff]
    %v3058 = vld [vmem:[#allocation8 + $0x1d0] sm:$0xff]
    %v3059 = vld [vmem:[#allocation8 + $0x1d8] sm:$0xf]
    %v3060 = vld [vmem:[#allocation8 + $0x1dc] sm:$0xff]
    %v3061 = vld [vmem:[#allocation8 + $0x1e4] sm:$0xff]
    %v3062 = vld [vmem:[#allocation8 + $0x1ec] sm:$0xff]
    %v3063 = vld [vmem:[#allocation8 + $0x1f4] sm:$0xf]
    %v3064 = vld [vmem:[#allocation8 + $0x1f8] sm:$0xff]
    %v3065 = vld [vmem:[#allocation8 + $0x200] sm:$0xff]
    %v3066 = vld [vmem:[#allocation8 + $0x208] sm:$0xff]
    %v3067 = vld [vmem:[#allocation8 + $0x210] sm:$0xf]
    %v3068 = vld [vmem:[#allocation8 + $0x214] sm:$0xff]
    %v3069 = vld [vmem:[#allocation8 + $0x21c] sm:$0xff]
    %v3070 = vld [vmem:[#allocation8 + $0x224] sm:$0xff]
    %v3071 = vld [vmem:[#allocation8 + $0x22c] sm:$0xf]
    %v3072 = vld [vmem:[#allocation8 + $0x230] sm:$0xff]
    %v3073 = vld [vmem:[#allocation8 + $0x238] sm:$0xff]
    %v3074 = vld [vmem:[#allocation8 + $0x240] sm:$0xff]
    %v3075 = vld [vmem:[#allocation8 + $0x248] sm:$0xf]
    %v3076 = vld [vmem:[#allocation8 + $0x24c] sm:$0xff]
    %v3077 = vld [vmem:[#allocation8 + $0x254] sm:$0xff]
    %v3078 = vld [vmem:[#allocation8 + $0x25c] sm:$0xff]
    %v3079 = vld [vmem:[#allocation8 + $0x264] sm:$0xf]
    %v3080 = vld [vmem:[#allocation8 + $0x268] sm:$0xff]
    %v3081 = vld [vmem:[#allocation8 + $0x270] sm:$0xff]
    %v3082 = vld [vmem:[#allocation8 + $0x278] sm:$0xff]
    %v3083 = vld [vmem:[#allocation8 + $0x280] sm:$0xf]
    %v3084 = vld [vmem:[#allocation8 + $0x284] sm:$0xff]
    %v3085 = vld [vmem:[#allocation8 + $0x28c] sm:$0xff]
    %v3086 = vld [vmem:[#allocation8 + $0x294] sm:$0xff]
    %v3087 = vld [vmem:[#allocation8 + $0x29c] sm:$0xf]
    %v3088 = vld [vmem:[#allocation8 + $0x2a0] sm:$0xff]
    %v3089 = vld [vmem:[#allocation8 + $0x2a8] sm:$0xff]
    %v3090 = vld [vmem:[#allocation8 + $0x2b0] sm:$0xff]
    %v3091 = vld [vmem:[#allocation8 + $0x2b8] sm:$0xf]
    %v3092 = vld [vmem:[#allocation8 + $0x2bc] sm:$0xff]
    %v3093 = vld [vmem:[#allocation8 + $0x2c4] sm:$0xff]
    %v3094 = vld [vmem:[#allocation8 + $0x2cc] sm:$0xff]
    %v3095 = vld [vmem:[#allocation8 + $0x2d4] sm:$0xf]
    %v3096 = vld [vmem:[#allocation8 + $0x2d8] sm:$0xff]
    %v3097 = vld [vmem:[#allocation8 + $0x2e0] sm:$0xff]
    %v3098 = vld [vmem:[#allocation8 + $0x2e8] sm:$0xff]
    %v3099 = vld [vmem:[#allocation8 + $0x2f0] sm:$0xf]
    %v3100 = vld [vmem:[#allocation8 + $0x2f4] sm:$0xff]
    %v3101 = vld [vmem:[#allocation8 + $0x2fc] sm:$0xff]
    %v3102 = vld [vmem:[#allocation8 + $0x304] sm:$0xff]
    %v3103 = vld [vmem:[#allocation8 + $0x30c] sm:$0xf]
    %v3104 = vld [vmem:[#allocation8 + $0x310] sm:$0xff]
    %v3105 = vld [vmem:[#allocation8 + $0x318] sm:$0xff]
    %v3106 = vld [vmem:[#allocation8 + $0x320] sm:$0xff]
    %v3107 = vld [vmem:[#allocation8 + $0x328] sm:$0xf]
    %v3108 = vld [vmem:[#allocation8 + $0x32c] sm:$0xff]
    %v3109 = vld [vmem:[#allocation8 + $0x334] sm:$0xff]
    %v3110 = vld [vmem:[#allocation8 + $0x33c] sm:$0xff]
    %v3111 = vld [vmem:[#allocation8 + $0x344] sm:$0xf]
    %v3112 = vld [vmem:[#allocation8 + $0x348] sm:$0xff]
    %v3113 = vld [vmem:[#allocation8 + $0x350] sm:$0xff]
    %v3114 = vld [vmem:[#allocation8 + $0x358] sm:$0xff]
    %v3115 = vld [vmem:[#allocation8 + $0x360] sm:$0xf]
    %v3116 = vld [vmem:[#allocation8 + $0x364] sm:$0xff]
    %v3117 = vld [vmem:[#allocation8 + $0x36c] sm:$0xff]
    %v3118 = vld [vmem:[#allocation8 + $0x374] sm:$0xff]
    %v3119 = vld [vmem:[#allocation8 + $0x37c] sm:$0xf]
    %v3120 = vld [vmem:[#allocation8 + $0x380] sm:$0xff]
    %v3121 = vld [vmem:[#allocation8 + $0x388] sm:$0xff]
    %v3122 = vld [vmem:[#allocation8 + $0x390] sm:$0xff]
    %v3123 = vld [vmem:[#allocation8 + $0x398] sm:$0xf]
    %v3124 = vld [vmem:[#allocation8 + $0x39c] sm:$0xff]
    %v3125 = vld [vmem:[#allocation8 + $0x3a4] sm:$0xff]
    %v3126 = vld [vmem:[#allocation8 + $0x3ac] sm:$0xff]
    %v3127 = vld [vmem:[#allocation8 + $0x3b4] sm:$0xf]
    %v3128 = vld [vmem:[#allocation8 + $0x3b8] sm:$0xff]
    %v3129 = vld [vmem:[#allocation8 + $0x3c0] sm:$0xff]
    %v3130 = vld [vmem:[#allocation8 + $0x3c8] sm:$0xff]
    %v3131 = vld [vmem:[#allocation8 + $0x3d0] sm:$0xf]
    %v3132 = vld [vmem:[#allocation8 + $0x3d4] sm:$0xff]
    %v3133 = vld [vmem:[#allocation8 + $0x3dc] sm:$0xff]
    %v3134 = vld [vmem:[#allocation8 + $0x3e4] sm:$0xff]
    %v3135 = vld [vmem:[#allocation8 + $0x3ec] sm:$0xf]
    %v3136 = vld [vmem:[#allocation8 + $0x3f0] sm:$0xff]
    %v3137 = vld [vmem:[#allocation8 + $0x3f8] sm:$0xff]
    %v3138 = vld [vmem:[#allocation8 + $0x400] sm:$0xff]
    %v3139 = vld [vmem:[#allocation8 + $0x408] sm:$0xf]
    %v3140 = vld [vmem:[#allocation8 + $0x40c] sm:$0xff]
    %v3141 = vld [vmem:[#allocation8 + $0x414] sm:$0xff]
    %v3142 = vld [vmem:[#allocation8 + $0x41c] sm:$0xff]
    %v3143 = vld [vmem:[#allocation8 + $0x424] sm:$0xf]
    %v3144 = vld [vmem:[#allocation8 + $0x428] sm:$0xff]
    %v3145 = vld [vmem:[#allocation8 + $0x430] sm:$0xff]
    %v3146 = vld [vmem:[#allocation8 + $0x438] sm:$0xff]
    %v3147 = vld [vmem:[#allocation8 + $0x440] sm:$0xf]
    %v3148 = vld [vmem:[#allocation8 + $0x444] sm:$0xff]
    %v3149 = vld [vmem:[#allocation8 + $0x44c] sm:$0xff]
    %v3150 = vld [vmem:[#allocation8 + $0x454] sm:$0xff]
    %v3151 = vld [vmem:[#allocation8 + $0x45c] sm:$0xf]
    %v3152 = vld [vmem:[#allocation8 + $0x460] sm:$0xff]
    %v3153 = vld [vmem:[#allocation8 + $0x468] sm:$0xff]
    %v3154 = vld [vmem:[#allocation8 + $0x470] sm:$0xff]
    %v3155 = vld [vmem:[#allocation8 + $0x478] sm:$0xf]
    %v3156 = vld [vmem:[#allocation8 + $0x47c] sm:$0xff]
    %v3157 = vld [vmem:[#allocation8 + $0x484] sm:$0xff]
    %v3158 = vld [vmem:[#allocation8 + $0x48c] sm:$0xff]
    %v3159 = vld [vmem:[#allocation8 + $0x494] sm:$0xf]
    %v3160 = vld [vmem:[#allocation8 + $0x498] sm:$0xff]
    %v3161 = vld [vmem:[#allocation8 + $0x4a0] sm:$0xff]
    %v3162 = vld [vmem:[#allocation8 + $0x4a8] sm:$0xff]
    %v3163 = vld [vmem:[#allocation8 + $0x4b0] sm:$0xf]
    %v3164 = vld [vmem:[#allocation8 + $0x4b4] sm:$0xff]
    %v3165 = vld [vmem:[#allocation8 + $0x4bc] sm:$0xff]
    %v3166 = vld [vmem:[#allocation8 + $0x4c4] sm:$0xff]
    %v3167 = vld [vmem:[#allocation8 + $0x4cc] sm:$0xf]
    %v3168 = vld [vmem:[#allocation8 + $0x4d0] sm:$0xff]
    %v3169 = vld [vmem:[#allocation8 + $0x4d8] sm:$0xff]
    %v3170 = vld [vmem:[#allocation8 + $0x4e0] sm:$0xff]
    %v3171 = vld [vmem:[#allocation8 + $0x4e8] sm:$0xf]
    %v3172 = vld [vmem:[#allocation8 + $0x4ec] sm:$0xff]
    %v3173 = vld [vmem:[#allocation8 + $0x4f4] sm:$0xff]
    %v3174 = vld [vmem:[#allocation8 + $0x4fc] sm:$0xff]
    %v3175 = vld [vmem:[#allocation8 + $0x504] sm:$0xf]
    %v3176 = vld [vmem:[#allocation8 + $0x508] sm:$0xff]
    %v3177 = vld [vmem:[#allocation8 + $0x510] sm:$0xff]
    %v3178 = vld [vmem:[#allocation8 + $0x518] sm:$0xff]
    %v3179 = vld [vmem:[#allocation8 + $0x520] sm:$0xf]
    %v3180 = vld [vmem:[#allocation8 + $0x524] sm:$0xff]
    %v3181 = vld [vmem:[#allocation8 + $0x52c] sm:$0xff]
    %v3182 = vld [vmem:[#allocation8 + $0x534] sm:$0xff]
    %v3183 = vld [vmem:[#allocation8 + $0x53c] sm:$0xf]
    %v3184 = vld [vmem:[#allocation8 + $0x540] sm:$0xff]
    %v3185 = vld [vmem:[#allocation8 + $0x548] sm:$0xff]
    %v3186 = vld [vmem:[#allocation8 + $0x550] sm:$0xff]
    %v3187 = vld [vmem:[#allocation8 + $0x558] sm:$0xf]
    %v3188 = vld [vmem:[#allocation8 + $0x55c] sm:$0xff]
    %v3189 = vld [vmem:[#allocation8 + $0x564] sm:$0xff]
    %v3190 = vld [vmem:[#allocation8 + $0x56c] sm:$0xff]
    %v3191 = vld [vmem:[#allocation8 + $0x574] sm:$0xf]
    %v3192 = vld [vmem:[#allocation8 + $0x578] sm:$0xff]
    %v3193 = vld [vmem:[#allocation8 + $0x580] sm:$0xff]
    %v3194 = vld [vmem:[#allocation8 + $0x588] sm:$0xff]
    %v3195 = vld [vmem:[#allocation8 + $0x590] sm:$0xf]
    %v3196 = vld [vmem:[#allocation8 + $0x594] sm:$0xff]
    %v3197 = vld [vmem:[#allocation8 + $0x59c] sm:$0xff]
    %v3198 = vld [vmem:[#allocation8 + $0x5a4] sm:$0xff]
    %v3199 = vld [vmem:[#allocation8 + $0x5ac] sm:$0xf]
    %v3200 = vld [vmem:[#allocation8 + $0x5b0] sm:$0xff]
    %v3201 = vld [vmem:[#allocation8 + $0x5b8] sm:$0xff]
    %v3202 = vld [vmem:[#allocation8 + $0x5c0] sm:$0xff]
    %v3203 = vld [vmem:[#allocation8 + $0x5c8] sm:$0xf]
    %v3204 = vld [vmem:[#allocation8 + $0x5cc] sm:$0xff]
    %v3205 = vld [vmem:[#allocation8 + $0x5d4] sm:$0xff]
    %v3206 = vld [vmem:[#allocation8 + $0x5dc] sm:$0xff]
    %v3207 = vld [vmem:[#allocation8 + $0x5e4] sm:$0xf]
    %v3208 = vld [vmem:[#allocation8 + $0x5e8] sm:$0xff]
    %v3209 = vld [vmem:[#allocation8 + $0x5f0] sm:$0xff]
    %v3210 = vld [vmem:[#allocation8 + $0x5f8] sm:$0xff]
    %v3211 = vld [vmem:[#allocation8 + $0x600] sm:$0xf]
    %v3212 = vld [vmem:[#allocation8 + $0x604] sm:$0xff]
    %v3213 = vld [vmem:[#allocation8 + $0x60c] sm:$0xff]
    %v3214 = vld [vmem:[#allocation8 + $0x614] sm:$0xff]
    %v3215 = vld [vmem:[#allocation8 + $0x61c] sm:$0xf]
    %v3216 = vld [vmem:[#allocation8 + $0x620] sm:$0xff]
    %v3217 = vld [vmem:[#allocation8 + $0x628] sm:$0xff]
    %v3218 = vld [vmem:[#allocation8 + $0x630] sm:$0xff]
    %v3219 = vld [vmem:[#allocation8 + $0x638] sm:$0xf]
    %v3220 = vld [vmem:[#allocation8 + $0x63c] sm:$0xff]
    %v3221 = vld [vmem:[#allocation8 + $0x644] sm:$0xff]
    %v3222 = vld [vmem:[#allocation8 + $0x64c] sm:$0xff]
    %v3223 = vld [vmem:[#allocation8 + $0x654] sm:$0xf]
    %v3224 = vld [vmem:[#allocation8 + $0x658] sm:$0xff]
    %v3225 = vld [vmem:[#allocation8 + $0x660] sm:$0xff]
    %v3226 = vld [vmem:[#allocation8 + $0x668] sm:$0xff]
    %v3227 = vld [vmem:[#allocation8 + $0x670] sm:$0xf]
    %v3228 = vld [vmem:[#allocation8 + $0x674] sm:$0xff]
    %v3229 = vld [vmem:[#allocation8 + $0x67c] sm:$0xff]
    %v3230 = vld [vmem:[#allocation8 + $0x684] sm:$0xff]
    %v3231 = vld [vmem:[#allocation8 + $0x68c] sm:$0xf]
    %v3232 = vld [vmem:[#allocation8 + $0x690] sm:$0xff]
    %v3233 = vld [vmem:[#allocation8 + $0x698] sm:$0xff]
    %v3234 = vld [vmem:[#allocation8 + $0x6a0] sm:$0xff]
    %v3235 = vld [vmem:[#allocation8 + $0x6a8] sm:$0xf]
    %v3236 = vld [vmem:[#allocation8 + $0x6ac] sm:$0xff]
    %v3237 = vld [vmem:[#allocation8 + $0x6b4] sm:$0xff]
    %v3238 = vld [vmem:[#allocation8 + $0x6bc] sm:$0xff]
    %v3239 = vld [vmem:[#allocation8 + $0x6c4] sm:$0xf]
    %v3240 = vld [vmem:[#allocation8 + $0x6c8] sm:$0xff]
    %v3241 = vld [vmem:[#allocation8 + $0x6d0] sm:$0xff]
    %v3242 = vld [vmem:[#allocation8 + $0x6d8] sm:$0xff]
    %v3243 = vld [vmem:[#allocation8 + $0x6e0] sm:$0xf]
    %v3244 = vld [vmem:[#allocation8 + $0x6e4] sm:$0xff]
    %v3245 = vld [vmem:[#allocation8 + $0x6ec] sm:$0xff]
    %v3246 = vld [vmem:[#allocation8 + $0x6f4] sm:$0xff]
    %v3247 = vld [vmem:[#allocation8 + $0x6fc] sm:$0xf]
    %v3248 = vld [vmem:[#allocation8 + $0x700] sm:$0xff]
    %v3249 = vld [vmem:[#allocation8 + $0x708] sm:$0xff]
    %v3250 = vld [vmem:[#allocation8 + $0x710] sm:$0xff]
    %v3251 = vld [vmem:[#allocation8 + $0x718] sm:$0xf]
    %v3252 = vld [vmem:[#allocation8 + $0x71c] sm:$0xff]
    %v3253 = vld [vmem:[#allocation8 + $0x724] sm:$0xff]
    %v3254 = vld [vmem:[#allocation8 + $0x72c] sm:$0xff]
    %v3255 = vld [vmem:[#allocation8 + $0x734] sm:$0xf]
    %v3256 = vld [vmem:[#allocation8 + $0x738] sm:$0xff]
    %v3257 = vld [vmem:[#allocation8 + $0x740] sm:$0xff]
    %v3258 = vld [vmem:[#allocation8 + $0x748] sm:$0xff]
    %v3259 = vld [vmem:[#allocation8 + $0x750] sm:$0xf]
    %v3260 = vld [vmem:[#allocation8 + $0x754] sm:$0xff]
    %v3261 = vld [vmem:[#allocation8 + $0x75c] sm:$0xff]
    %v3262 = vld [vmem:[#allocation8 + $0x764] sm:$0xff]
    %v3263 = vld [vmem:[#allocation8 + $0x76c] sm:$0xf]
    %v3264 = vld [vmem:[#allocation8 + $0x770] sm:$0xff]
    %v3265 = vld [vmem:[#allocation8 + $0x778] sm:$0xff]
    %v3266 = vld [vmem:[#allocation8 + $0x780] sm:$0xff]
    %v3267 = vld [vmem:[#allocation8 + $0x788] sm:$0xf]
    %v3268 = vld [vmem:[#allocation8 + $0x78c] sm:$0xff]
    %v3269 = vld [vmem:[#allocation8 + $0x794] sm:$0xff]
    %v3270 = vld [vmem:[#allocation8 + $0x79c] sm:$0xff]
    %v3271 = vld [vmem:[#allocation8 + $0x7a4] sm:$0xf]
    %v3272 = vld [vmem:[#allocation8 + $0x7a8] sm:$0xff]
    %v3273 = vld [vmem:[#allocation8 + $0x7b0] sm:$0xff]
    %v3274 = vld [vmem:[#allocation8 + $0x7b8] sm:$0xff]
    %v3275 = vld [vmem:[#allocation8 + $0x7c0] sm:$0xf]
    %v3276 = vld [vmem:[#allocation8 + $0x7c4] sm:$0xff]
    %v3277 = vld [vmem:[#allocation8 + $0x7cc] sm:$0xff]
    %v3278 = vld [vmem:[#allocation8 + $0x7d4] sm:$0xff]
    %v3279 = vld [vmem:[#allocation8 + $0x7dc] sm:$0xf]
    %v3280 = vld [vmem:[#allocation8 + $0x7e0] sm:$0xff]
    %v3281 = vld [vmem:[#allocation8 + $0x7e8] sm:$0xff]
    %v3282 = vld [vmem:[#allocation8 + $0x7f0] sm:$0xff]
    %v3283 = vld [vmem:[#allocation8 + $0x7f8] sm:$0xf]
    %v3284 = vld [vmem:[#allocation8 + $0x7fc] sm:$0xff]
    %v3285 = vld [vmem:[#allocation8 + $0x804] sm:$0xff]
    %v3286 = vld [vmem:[#allocation8 + $0x80c] sm:$0xff]
    %v3287 = vld [vmem:[#allocation8 + $0x814] sm:$0xf]
    %v3288 = vld [vmem:[#allocation8 + $0x818] sm:$0xff]
    %v3289 = vld [vmem:[#allocation8 + $0x820] sm:$0xff]
    %v3290 = vld [vmem:[#allocation8 + $0x828] sm:$0xff]
    %v3291 = vld [vmem:[#allocation8 + $0x830] sm:$0xf]
    %v3292 = vld [vmem:[#allocation8 + $0x834] sm:$0xff]
    %v3293 = vld [vmem:[#allocation8 + $0x83c] sm:$0xff]
    %v3294 = vld [vmem:[#allocation8 + $0x844] sm:$0xff]
    %v3295 = vld [vmem:[#allocation8 + $0x84c] sm:$0xf]
    %v3296 = vld [vmem:[#allocation8 + $0x850] sm:$0xff]
    %v3297 = vld [vmem:[#allocation8 + $0x858] sm:$0xff]
    %v3298 = vld [vmem:[#allocation8 + $0x860] sm:$0xff]
    %v3299 = vld [vmem:[#allocation8 + $0x868] sm:$0xf]
    %v3300 = vld [vmem:[#allocation8 + $0x86c] sm:$0xff]
    %v3301 = vld [vmem:[#allocation8 + $0x874] sm:$0xff]
    %v3302 = vld [vmem:[#allocation8 + $0x87c] sm:$0xff]
    %v3303 = vld [vmem:[#allocation8 + $0x884] sm:$0xf]
    %v3304 = vld [vmem:[#allocation8 + $0x888] sm:$0xff]
    %v3305 = vld [vmem:[#allocation8 + $0x890] sm:$0xff]
    %v3306 = vld [vmem:[#allocation8 + $0x898] sm:$0xff]
    %v3307 = vld [vmem:[#allocation8 + $0x8a0] sm:$0xf]
    %v3308 = vld [vmem:[#allocation8 + $0x8a4] sm:$0xff]
    %v3309 = vld [vmem:[#allocation8 + $0x8ac] sm:$0xff]
    %v3310 = vld [vmem:[#allocation8 + $0x8b4] sm:$0xff]
    %v3311 = vld [vmem:[#allocation8 + $0x8bc] sm:$0xf]
    %v3312 = vld [vmem:[#allocation8 + $0x8c0] sm:$0xff]
    %v3313 = vld [vmem:[#allocation8 + $0x8c8] sm:$0xff]
    %v3314 = vld [vmem:[#allocation8 + $0x8d0] sm:$0xff]
    %v3315 = vld [vmem:[#allocation8 + $0x8d8] sm:$0xf]
    %v3316 = vld [vmem:[#allocation8 + $0x8dc] sm:$0xff]
    %v3317 = vld [vmem:[#allocation8 + $0x8e4] sm:$0xff]
    %v3318 = vld [vmem:[#allocation8 + $0x8ec] sm:$0xff]
    %v3319 = vld [vmem:[#allocation8 + $0x8f4] sm:$0xf]
    %v3320 = vld [vmem:[#allocation8 + $0x8f8] sm:$0xff]
    %v3321 = vld [vmem:[#allocation8 + $0x900] sm:$0xff]
    %v3322 = vld [vmem:[#allocation8 + $0x908] sm:$0xff]
    %v3323 = vld [vmem:[#allocation8 + $0x910] sm:$0xf]
    %v3324 = vld [vmem:[#allocation8 + $0x914] sm:$0xff]
    %v3325 = vld [vmem:[#allocation8 + $0x91c] sm:$0xff]
    %v3326 = vld [vmem:[#allocation8 + $0x924] sm:$0xff]
    %v3327 = vld [vmem:[#allocation8 + $0x92c] sm:$0xf]
    %v3328 = vld [vmem:[#allocation8 + $0x930] sm:$0xff]
    %v3329 = vld [vmem:[#allocation8 + $0x938] sm:$0xff]
    %v3330 = vld [vmem:[#allocation8 + $0x940] sm:$0xff]
    %v3331 = vld [vmem:[#allocation8 + $0x948] sm:$0xf]
    %v3332 = vld [vmem:[#allocation8 + $0x94c] sm:$0xff]
    %v3333 = vld [vmem:[#allocation8 + $0x954] sm:$0xff]
    %v3334 = vld [vmem:[#allocation8 + $0x95c] sm:$0xff]
    %v3335 = vld [vmem:[#allocation8 + $0x964] sm:$0xf]
    %v3336 = vld [vmem:[#allocation8 + $0x968] sm:$0xff]
    %v3337 = vld [vmem:[#allocation8 + $0x970] sm:$0xff]
    %v3338 = vld [vmem:[#allocation8 + $0x978] sm:$0xff]
    %v3339 = vld [vmem:[#allocation8 + $0x980] sm:$0xf]
    %v3340 = vld [vmem:[#allocation8 + $0x984] sm:$0xff]
    %v3341 = vld [vmem:[#allocation8 + $0x98c] sm:$0xff]
    %v3342 = vld [vmem:[#allocation8 + $0x994] sm:$0xff]
    %v3343 = vld [vmem:[#allocation8 + $0x99c] sm:$0xf]
    %v3344 = vld [vmem:[#allocation8 + $0x9a0] sm:$0xff]
    %v3345 = vld [vmem:[#allocation8 + $0x9a8] sm:$0xff]
    %v3346 = vld [vmem:[#allocation8 + $0x9b0] sm:$0xff]
    %v3347 = vld [vmem:[#allocation8 + $0x9b8] sm:$0xf]
    %v3348 = vld [vmem:[#allocation8 + $0x9bc] sm:$0xff]
    %v3349 = vld [vmem:[#allocation8 + $0x9c4] sm:$0xff]
    %v3350 = vld [vmem:[#allocation8 + $0x9cc] sm:$0xff]
    %v3351 = vld [vmem:[#allocation8 + $0x9d4] sm:$0xf]
    %v3352 = vld [vmem:[#allocation8 + $0x9d8] sm:$0xff]
    %v3353 = vld [vmem:[#allocation8 + $0x9e0] sm:$0xff]
    %v3354 = vld [vmem:[#allocation8 + $0x9e8] sm:$0xff]
    %v3355 = vld [vmem:[#allocation8 + $0x9f0] sm:$0xf]
    %v3356 = vld [vmem:[#allocation8 + $0x9f4] sm:$0xff]
    %v3357 = vld [vmem:[#allocation8 + $0x9fc] sm:$0xff]
    %v3358 = vld [vmem:[#allocation8 + $0xa04] sm:$0xff]
    %v3359 = vld [vmem:[#allocation8 + $0xa0c] sm:$0xf]
    %v3360 = vld [vmem:[#allocation8 + $0xa10] sm:$0xff]
    %v3361 = vld [vmem:[#allocation8 + $0xa18] sm:$0xff]
    %v3362 = vld [vmem:[#allocation8 + $0xa20] sm:$0xff]
    %v3363 = vld [vmem:[#allocation8 + $0xa28] sm:$0xf]
    %v3364 = vld [vmem:[#allocation8 + $0xa2c] sm:$0xff]
    %v3365 = vld [vmem:[#allocation8 + $0xa34] sm:$0xff]
    %v3366 = vld [vmem:[#allocation8 + $0xa3c] sm:$0xff]
    %v3367 = vld [vmem:[#allocation8 + $0xa44] sm:$0xf]
    %v3368 = vld [vmem:[#allocation8 + $0xa48] sm:$0xff]
    %v3369 = vld [vmem:[#allocation8 + $0xa50] sm:$0xff]
    %v3370 = vld [vmem:[#allocation8 + $0xa58] sm:$0xff]
    %v3371 = vld [vmem:[#allocation8 + $0xa60] sm:$0xf]
    %v3372 = vld [vmem:[#allocation8 + $0xa64] sm:$0xff]
    %v3373 = vld [vmem:[#allocation8 + $0xa6c] sm:$0xff]
    %v3374 = vld [vmem:[#allocation8 + $0xa74] sm:$0xff]
    %v3375 = vld [vmem:[#allocation8 + $0xa7c] sm:$0xf]
    %v3376 = vld [vmem:[#allocation8 + $0xa80] sm:$0xff]
    %v3377 = vld [vmem:[#allocation8 + $0xa88] sm:$0xff]
    %v3378 = vld [vmem:[#allocation8 + $0xa90] sm:$0xff]
    %v3379 = vld [vmem:[#allocation8 + $0xa98] sm:$0xf]
    %v3380 = vld [vmem:[#allocation8 + $0xa9c] sm:$0xff]
    %v3381 = vld [vmem:[#allocation8 + $0xaa4] sm:$0xff]
    %v3382 = vld [vmem:[#allocation8 + $0xaac] sm:$0xff]
    %v3383 = vld [vmem:[#allocation8 + $0xab4] sm:$0xf]
    %v3384 = vld [vmem:[#allocation10] sm:$0x7f]
    %v3386 = vlaneseq
    %v3387 = vshrl.u32 %v3386, 7
    %v3388 = vsub.s32 0, %v3387
    %v3389 = vrot.slane %v3384, %v3388
    %v3390 = vlaneseq
    %v3391 = vshrl.u32 %v3390, 7
    %v3392 = vsub.s32 1, %v3391
    %v3393 = vrot.slane %v3384, %v3392
    %v3394 = vlaneseq
    %v3395 = vshrl.u32 %v3394, 7
    %v3396 = vsub.s32 2, %v3395
    %v3397 = vrot.slane %v3384, %v3396
    %v3398 = vlaneseq
    %v3399 = vshrl.u32 %v3398, 7
    %v3400 = vsub.s32 3, %v3399
    %v3401 = vrot.slane %v3384, %v3400
    %v3402 = vlaneseq
    %v3403 = vshrl.u32 %v3402, 7
    %v3404 = vsub.s32 4, %v3403
    %v3405 = vrot.slane %v3384, %v3404
    %v3406 = vlaneseq
    %v3407 = vshrl.u32 %v3406, 7
    %v3408 = vsub.s32 5, %v3407
    %v3409 = vrot.slane %v3384, %v3408
    %v3410 = vlaneseq
    %v3411 = vshrl.u32 %v3410, 7
    %v3412 = vsub.s32 6, %v3411
    %v3413 = vrot.slane %v3384, %v3412
    %v3813 = vunpack.c.l.b16 %v2992
    %v3814 = vunpack.c.h.b16 %v2992
    %v3815 = vunpack.c.l.b16 %v2993
    %v3816 = vunpack.c.h.b16 %v2993
    %v3817 = vunpack.c.l.b16 %v2994
    %v3818 = vunpack.c.h.b16 %v2994
    %v3819 = vunpack.c.l.b16 %v2995
    %v3820 = vunpack.c.l.b16 %v2996
    %v3821 = vunpack.c.h.b16 %v2996
    %v3822 = vunpack.c.l.b16 %v2997
    %v3823 = vunpack.c.h.b16 %v2997
    %v3824 = vunpack.c.l.b16 %v2998
    %v3825 = vunpack.c.h.b16 %v2998
    %v3826 = vunpack.c.l.b16 %v2999
    %v3827 = vunpack.c.l.b16 %v3000
    %v3828 = vunpack.c.h.b16 %v3000
    %v3829 = vunpack.c.l.b16 %v3001
    %v3830 = vunpack.c.h.b16 %v3001
    %v3831 = vunpack.c.l.b16 %v3002
    %v3832 = vunpack.c.h.b16 %v3002
    %v3833 = vunpack.c.l.b16 %v3003
    %v3834 = vunpack.c.l.b16 %v3004
    %v3835 = vunpack.c.h.b16 %v3004
    %v3836 = vunpack.c.l.b16 %v3005
    %v3837 = vunpack.c.h.b16 %v3005
    %v3838 = vunpack.c.l.b16 %v3006
    %v3839 = vunpack.c.h.b16 %v3006
    %v3840 = vunpack.c.l.b16 %v3007
    %v3841 = vunpack.c.l.b16 %v3008
    %v3842 = vunpack.c.h.b16 %v3008
    %v3843 = vunpack.c.l.b16 %v3009
    %v3844 = vunpack.c.h.b16 %v3009
    %v3845 = vunpack.c.l.b16 %v3010
    %v3846 = vunpack.c.h.b16 %v3010
    %v3847 = vunpack.c.l.b16 %v3011
    %v3848 = vunpack.c.l.b16 %v3012
    %v3849 = vunpack.c.h.b16 %v3012
    %v3850 = vunpack.c.l.b16 %v3013
    %v3851 = vunpack.c.h.b16 %v3013
    %v3852 = vunpack.c.l.b16 %v3014
    %v3853 = vunpack.c.h.b16 %v3014
    %v3854 = vunpack.c.l.b16 %v3015
    %v3855 = vunpack.c.l.b16 %v3016
    %v3856 = vunpack.c.h.b16 %v3016
    %v3857 = vunpack.c.l.b16 %v3017
    %v3858 = vunpack.c.h.b16 %v3017
    %v3859 = vunpack.c.l.b16 %v3018
    %v3860 = vunpack.c.h.b16 %v3018
    %v3861 = vunpack.c.l.b16 %v3019
    %v3862 = vunpack.c.l.b16 %v3020
    %v3863 = vunpack.c.h.b16 %v3020
    %v3864 = vunpack.c.l.b16 %v3021
    %v3865 = vunpack.c.h.b16 %v3021
    %v3866 = vunpack.c.l.b16 %v3022
    %v3867 = vunpack.c.h.b16 %v3022
    %v3868 = vunpack.c.l.b16 %v3023
    %v3869 = vunpack.c.l.b16 %v3024
    %v3870 = vunpack.c.h.b16 %v3024
    %v3871 = vunpack.c.l.b16 %v3025
    %v3872 = vunpack.c.h.b16 %v3025
    %v3873 = vunpack.c.l.b16 %v3026
    %v3874 = vunpack.c.h.b16 %v3026
    %v3875 = vunpack.c.l.b16 %v3027
    %v3876 = vunpack.c.l.b16 %v3028
    %v3877 = vunpack.c.h.b16 %v3028
    %v3878 = vunpack.c.l.b16 %v3029
    %v3879 = vunpack.c.h.b16 %v3029
    %v3880 = vunpack.c.l.b16 %v3030
    %v3881 = vunpack.c.h.b16 %v3030
    %v3882 = vunpack.c.l.b16 %v3031
    %v3883 = vunpack.c.l.b16 %v3032
    %v3884 = vunpack.c.h.b16 %v3032
    %v3885 = vunpack.c.l.b16 %v3033
    %v3886 = vunpack.c.h.b16 %v3033
    %v3887 = vunpack.c.l.b16 %v3034
    %v3888 = vunpack.c.h.b16 %v3034
    %v3889 = vunpack.c.l.b16 %v3035
    %v3890 = vunpack.c.l.b16 %v3036
    %v3891 = vunpack.c.h.b16 %v3036
    %v3892 = vunpack.c.l.b16 %v3037
    %v3893 = vunpack.c.h.b16 %v3037
    %v3894 = vunpack.c.l.b16 %v3038
    %v3895 = vunpack.c.h.b16 %v3038
    %v3896 = vunpack.c.l.b16 %v3039
    %v3897 = vunpack.c.l.b16 %v3040
    %v3898 = vunpack.c.h.b16 %v3040
    %v3899 = vunpack.c.l.b16 %v3041
    %v3900 = vunpack.c.h.b16 %v3041
    %v3901 = vunpack.c.l.b16 %v3042
    %v3902 = vunpack.c.h.b16 %v3042
    %v3903 = vunpack.c.l.b16 %v3043
    %v3904 = vunpack.c.l.b16 %v3044
    %v3905 = vunpack.c.h.b16 %v3044
    %v3906 = vunpack.c.l.b16 %v3045
    %v3907 = vunpack.c.h.b16 %v3045
    %v3908 = vunpack.c.l.b16 %v3046
    %v3909 = vunpack.c.h.b16 %v3046
    %v3910 = vunpack.c.l.b16 %v3047
    %v3911 = vunpack.c.l.b16 %v3048
    %v3912 = vunpack.c.h.b16 %v3048
    %v3913 = vunpack.c.l.b16 %v3049
    %v3914 = vunpack.c.h.b16 %v3049
    %v3915 = vunpack.c.l.b16 %v3050
    %v3916 = vunpack.c.h.b16 %v3050
    %v3917 = vunpack.c.l.b16 %v3051
    %v3918 = vunpack.c.l.b16 %v3052
    %v3919 = vunpack.c.h.b16 %v3052
    %v3920 = vunpack.c.l.b16 %v3053
    %v3921 = vunpack.c.h.b16 %v3053
    %v3922 = vunpack.c.l.b16 %v3054
    %v3923 = vunpack.c.h.b16 %v3054
    %v3924 = vunpack.c.l.b16 %v3055
    %v3925 = vunpack.c.l.b16 %v3056
    %v3926 = vunpack.c.h.b16 %v3056
    %v3927 = vunpack.c.l.b16 %v3057
    %v3928 = vunpack.c.h.b16 %v3057
    %v3929 = vunpack.c.l.b16 %v3058
    %v3930 = vunpack.c.h.b16 %v3058
    %v3931 = vunpack.c.l.b16 %v3059
    %v3932 = vunpack.c.l.b16 %v3060
    %v3933 = vunpack.c.h.b16 %v3060
    %v3934 = vunpack.c.l.b16 %v3061
    %v3935 = vunpack.c.h.b16 %v3061
    %v3936 = vunpack.c.l.b16 %v3062
    %v3937 = vunpack.c.h.b16 %v3062
    %v3938 = vunpack.c.l.b16 %v3063
    %v3939 = vunpack.c.l.b16 %v3064
    %v3940 = vunpack.c.h.b16 %v3064
    %v3941 = vunpack.c.l.b16 %v3065
    %v3942 = vunpack.c.h.b16 %v3065
    %v3943 = vunpack.c.l.b16 %v3066
    %v3944 = vunpack.c.h.b16 %v3066
    %v3945 = vunpack.c.l.b16 %v3067
    %v3946 = vunpack.c.l.b16 %v3068
    %v3947 = vunpack.c.h.b16 %v3068
    %v3948 = vunpack.c.l.b16 %v3069
    %v3949 = vunpack.c.h.b16 %v3069
    %v3950 = vunpack.c.l.b16 %v3070
    %v3951 = vunpack.c.h.b16 %v3070
    %v3952 = vunpack.c.l.b16 %v3071
    %v3953 = vunpack.c.l.b16 %v3072
    %v3954 = vunpack.c.h.b16 %v3072
    %v3955 = vunpack.c.l.b16 %v3073
    %v3956 = vunpack.c.h.b16 %v3073
    %v3957 = vunpack.c.l.b16 %v3074
    %v3958 = vunpack.c.h.b16 %v3074
    %v3959 = vunpack.c.l.b16 %v3075
    %v3960 = vunpack.c.l.b16 %v3076
    %v3961 = vunpack.c.h.b16 %v3076
    %v3962 = vunpack.c.l.b16 %v3077
    %v3963 = vunpack.c.h.b16 %v3077
    %v3964 = vunpack.c.l.b16 %v3078
    %v3965 = vunpack.c.h.b16 %v3078
    %v3966 = vunpack.c.l.b16 %v3079
    %v3967 = vunpack.c.l.b16 %v3080
    %v3968 = vunpack.c.h.b16 %v3080
    %v3969 = vunpack.c.l.b16 %v3081
    %v3970 = vunpack.c.h.b16 %v3081
    %v3971 = vunpack.c.l.b16 %v3082
    %v3972 = vunpack.c.h.b16 %v3082
    %v3973 = vunpack.c.l.b16 %v3083
    %v3974 = vunpack.c.l.b16 %v3084
    %v3975 = vunpack.c.h.b16 %v3084
    %v3976 = vunpack.c.l.b16 %v3085
    %v3977 = vunpack.c.h.b16 %v3085
    %v3978 = vunpack.c.l.b16 %v3086
    %v3979 = vunpack.c.h.b16 %v3086
    %v3980 = vunpack.c.l.b16 %v3087
    %v3981 = vunpack.c.l.b16 %v3088
    %v3982 = vunpack.c.h.b16 %v3088
    %v3983 = vunpack.c.l.b16 %v3089
    %v3984 = vunpack.c.h.b16 %v3089
    %v3985 = vunpack.c.l.b16 %v3090
    %v3986 = vunpack.c.h.b16 %v3090
    %v3987 = vunpack.c.l.b16 %v3091
    %v3988 = vunpack.c.l.b16 %v3092
    %v3989 = vunpack.c.h.b16 %v3092
    %v3990 = vunpack.c.l.b16 %v3093
    %v3991 = vunpack.c.h.b16 %v3093
    %v3992 = vunpack.c.l.b16 %v3094
    %v3993 = vunpack.c.h.b16 %v3094
    %v3994 = vunpack.c.l.b16 %v3095
    %v3995 = vunpack.c.l.b16 %v3096
    %v3996 = vunpack.c.h.b16 %v3096
    %v3997 = vunpack.c.l.b16 %v3097
    %v3998 = vunpack.c.h.b16 %v3097
    %v3999 = vunpack.c.l.b16 %v3098
    %v4000 = vunpack.c.h.b16 %v3098
    %v4001 = vunpack.c.l.b16 %v3099
    %v4002 = vunpack.c.l.b16 %v3100
    %v4003 = vunpack.c.h.b16 %v3100
    %v4004 = vunpack.c.l.b16 %v3101
    %v4005 = vunpack.c.h.b16 %v3101
    %v4006 = vunpack.c.l.b16 %v3102
    %v4007 = vunpack.c.h.b16 %v3102
    %v4008 = vunpack.c.l.b16 %v3103
    %v4009 = vunpack.c.l.b16 %v3104
    %v4010 = vunpack.c.h.b16 %v3104
    %v4011 = vunpack.c.l.b16 %v3105
    %v4012 = vunpack.c.h.b16 %v3105
    %v4013 = vunpack.c.l.b16 %v3106
    %v4014 = vunpack.c.h.b16 %v3106
    %v4015 = vunpack.c.l.b16 %v3107
    %v4016 = vunpack.c.l.b16 %v3108
    %v4017 = vunpack.c.h.b16 %v3108
    %v4018 = vunpack.c.l.b16 %v3109
    %v4019 = vunpack.c.h.b16 %v3109
    %v4020 = vunpack.c.l.b16 %v3110
    %v4021 = vunpack.c.h.b16 %v3110
    %v4022 = vunpack.c.l.b16 %v3111
    %v4023 = vunpack.c.l.b16 %v3112
    %v4024 = vunpack.c.h.b16 %v3112
    %v4025 = vunpack.c.l.b16 %v3113
    %v4026 = vunpack.c.h.b16 %v3113
    %v4027 = vunpack.c.l.b16 %v3114
    %v4028 = vunpack.c.h.b16 %v3114
    %v4029 = vunpack.c.l.b16 %v3115
    %v4030 = vunpack.c.l.b16 %v3116
    %v4031 = vunpack.c.h.b16 %v3116
    %v4032 = vunpack.c.l.b16 %v3117
    %v4033 = vunpack.c.h.b16 %v3117
    %v4034 = vunpack.c.l.b16 %v3118
    %v4035 = vunpack.c.h.b16 %v3118
    %v4036 = vunpack.c.l.b16 %v3119
    %v4037 = vunpack.c.l.b16 %v3120
    %v4038 = vunpack.c.h.b16 %v3120
    %v4039 = vunpack.c.l.b16 %v3121
    %v4040 = vunpack.c.h.b16 %v3121
    %v4041 = vunpack.c.l.b16 %v3122
    %v4042 = vunpack.c.h.b16 %v3122
    %v4043 = vunpack.c.l.b16 %v3123
    %v4044 = vunpack.c.l.b16 %v3124
    %v4045 = vunpack.c.h.b16 %v3124
    %v4046 = vunpack.c.l.b16 %v3125
    %v4047 = vunpack.c.h.b16 %v3125
    %v4048 = vunpack.c.l.b16 %v3126
    %v4049 = vunpack.c.h.b16 %v3126
    %v4050 = vunpack.c.l.b16 %v3127
    %v4051 = vunpack.c.l.b16 %v3128
    %v4052 = vunpack.c.h.b16 %v3128
    %v4053 = vunpack.c.l.b16 %v3129
    %v4054 = vunpack.c.h.b16 %v3129
    %v4055 = vunpack.c.l.b16 %v3130
    %v4056 = vunpack.c.h.b16 %v3130
    %v4057 = vunpack.c.l.b16 %v3131
    %v4058 = vunpack.c.l.b16 %v3132
    %v4059 = vunpack.c.h.b16 %v3132
    %v4060 = vunpack.c.l.b16 %v3133
    %v4061 = vunpack.c.h.b16 %v3133
    %v4062 = vunpack.c.l.b16 %v3134
    %v4063 = vunpack.c.h.b16 %v3134
    %v4064 = vunpack.c.l.b16 %v3135
    %v4065 = vunpack.c.l.b16 %v3136
    %v4066 = vunpack.c.h.b16 %v3136
    %v4067 = vunpack.c.l.b16 %v3137
    %v4068 = vunpack.c.h.b16 %v3137
    %v4069 = vunpack.c.l.b16 %v3138
    %v4070 = vunpack.c.h.b16 %v3138
    %v4071 = vunpack.c.l.b16 %v3139
    %v4072 = vunpack.c.l.b16 %v3140
    %v4073 = vunpack.c.h.b16 %v3140
    %v4074 = vunpack.c.l.b16 %v3141
    %v4075 = vunpack.c.h.b16 %v3141
    %v4076 = vunpack.c.l.b16 %v3142
    %v4077 = vunpack.c.h.b16 %v3142
    %v4078 = vunpack.c.l.b16 %v3143
    %v4079 = vunpack.c.l.b16 %v3144
    %v4080 = vunpack.c.h.b16 %v3144
    %v4081 = vunpack.c.l.b16 %v3145
    %v4082 = vunpack.c.h.b16 %v3145
    %v4083 = vunpack.c.l.b16 %v3146
    %v4084 = vunpack.c.h.b16 %v3146
    %v4085 = vunpack.c.l.b16 %v3147
    %v4086 = vunpack.c.l.b16 %v3148
    %v4087 = vunpack.c.h.b16 %v3148
    %v4088 = vunpack.c.l.b16 %v3149
    %v4089 = vunpack.c.h.b16 %v3149
    %v4090 = vunpack.c.l.b16 %v3150
    %v4091 = vunpack.c.h.b16 %v3150
    %v4092 = vunpack.c.l.b16 %v3151
    %v4093 = vunpack.c.l.b16 %v3152
    %v4094 = vunpack.c.h.b16 %v3152
    %v4095 = vunpack.c.l.b16 %v3153
    %v4096 = vunpack.c.h.b16 %v3153
    %v4097 = vunpack.c.l.b16 %v3154
    %v4098 = vunpack.c.h.b16 %v3154
    %v4099 = vunpack.c.l.b16 %v3155
    %v4100 = vunpack.c.l.b16 %v3156
    %v4101 = vunpack.c.h.b16 %v3156
    %v4102 = vunpack.c.l.b16 %v3157
    %v4103 = vunpack.c.h.b16 %v3157
    %v4104 = vunpack.c.l.b16 %v3158
    %v4105 = vunpack.c.h.b16 %v3158
    %v4106 = vunpack.c.l.b16 %v3159
    %v4107 = vunpack.c.l.b16 %v3160
    %v4108 = vunpack.c.h.b16 %v3160
    %v4109 = vunpack.c.l.b16 %v3161
    %v4110 = vunpack.c.h.b16 %v3161
    %v4111 = vunpack.c.l.b16 %v3162
    %v4112 = vunpack.c.h.b16 %v3162
    %v4113 = vunpack.c.l.b16 %v3163
    %v4114 = vunpack.c.l.b16 %v3164
    %v4115 = vunpack.c.h.b16 %v3164
    %v4116 = vunpack.c.l.b16 %v3165
    %v4117 = vunpack.c.h.b16 %v3165
    %v4118 = vunpack.c.l.b16 %v3166
    %v4119 = vunpack.c.h.b16 %v3166
    %v4120 = vunpack.c.l.b16 %v3167
    %v4121 = vunpack.c.l.b16 %v3168
    %v4122 = vunpack.c.h.b16 %v3168
    %v4123 = vunpack.c.l.b16 %v3169
    %v4124 = vunpack.c.h.b16 %v3169
    %v4125 = vunpack.c.l.b16 %v3170
    %v4126 = vunpack.c.h.b16 %v3170
    %v4127 = vunpack.c.l.b16 %v3171
    %v4128 = vunpack.c.l.b16 %v3172
    %v4129 = vunpack.c.h.b16 %v3172
    %v4130 = vunpack.c.l.b16 %v3173
    %v4131 = vunpack.c.h.b16 %v3173
    %v4132 = vunpack.c.l.b16 %v3174
    %v4133 = vunpack.c.h.b16 %v3174
    %v4134 = vunpack.c.l.b16 %v3175
    %v4135 = vunpack.c.l.b16 %v3176
    %v4136 = vunpack.c.h.b16 %v3176
    %v4137 = vunpack.c.l.b16 %v3177
    %v4138 = vunpack.c.h.b16 %v3177
    %v4139 = vunpack.c.l.b16 %v3178
    %v4140 = vunpack.c.h.b16 %v3178
    %v4141 = vunpack.c.l.b16 %v3179
    %v4142 = vunpack.c.l.b16 %v3180
    %v4143 = vunpack.c.h.b16 %v3180
    %v4144 = vunpack.c.l.b16 %v3181
    %v4145 = vunpack.c.h.b16 %v3181
    %v4146 = vunpack.c.l.b16 %v3182
    %v4147 = vunpack.c.h.b16 %v3182
    %v4148 = vunpack.c.l.b16 %v3183
    %v4149 = vunpack.c.l.b16 %v3184
    %v4150 = vunpack.c.h.b16 %v3184
    %v4151 = vunpack.c.l.b16 %v3185
    %v4152 = vunpack.c.h.b16 %v3185
    %v4153 = vunpack.c.l.b16 %v3186
    %v4154 = vunpack.c.h.b16 %v3186
    %v4155 = vunpack.c.l.b16 %v3187
    %v4156 = vunpack.c.l.b16 %v3188
    %v4157 = vunpack.c.h.b16 %v3188
    %v4158 = vunpack.c.l.b16 %v3189
    %v4159 = vunpack.c.h.b16 %v3189
    %v4160 = vunpack.c.l.b16 %v3190
    %v4161 = vunpack.c.h.b16 %v3190
    %v4162 = vunpack.c.l.b16 %v3191
    %v4163 = vunpack.c.l.b16 %v3192
    %v4164 = vunpack.c.h.b16 %v3192
    %v4165 = vunpack.c.l.b16 %v3193
    %v4166 = vunpack.c.h.b16 %v3193
    %v4167 = vunpack.c.l.b16 %v3194
    %v4168 = vunpack.c.h.b16 %v3194
    %v4169 = vunpack.c.l.b16 %v3195
    %v4170 = vunpack.c.l.b16 %v3196
    %v4171 = vunpack.c.h.b16 %v3196
    %v4172 = vunpack.c.l.b16 %v3197
    %v4173 = vunpack.c.h.b16 %v3197
    %v4174 = vunpack.c.l.b16 %v3198
    %v4175 = vunpack.c.h.b16 %v3198
    %v4176 = vunpack.c.l.b16 %v3199
    %v4177 = vunpack.c.l.b16 %v3200
    %v4178 = vunpack.c.h.b16 %v3200
    %v4179 = vunpack.c.l.b16 %v3201
    %v4180 = vunpack.c.h.b16 %v3201
    %v4181 = vunpack.c.l.b16 %v3202
    %v4182 = vunpack.c.h.b16 %v3202
    %v4183 = vunpack.c.l.b16 %v3203
    %v4184 = vunpack.c.l.b16 %v3204
    %v4185 = vunpack.c.h.b16 %v3204
    %v4186 = vunpack.c.l.b16 %v3205
    %v4187 = vunpack.c.h.b16 %v3205
    %v4188 = vunpack.c.l.b16 %v3206
    %v4189 = vunpack.c.h.b16 %v3206
    %v4190 = vunpack.c.l.b16 %v3207
    %v4191 = vunpack.c.l.b16 %v3208
    %v4192 = vunpack.c.h.b16 %v3208
    %v4193 = vunpack.c.l.b16 %v3209
    %v4194 = vunpack.c.h.b16 %v3209
    %v4195 = vunpack.c.l.b16 %v3210
    %v4196 = vunpack.c.h.b16 %v3210
    %v4197 = vunpack.c.l.b16 %v3211
    %v4198 = vunpack.c.l.b16 %v3212
    %v4199 = vunpack.c.h.b16 %v3212
    %v4200 = vunpack.c.l.b16 %v3213
    %v4201 = vunpack.c.h.b16 %v3213
    %v4202 = vunpack.c.l.b16 %v3214
    %v4203 = vunpack.c.h.b16 %v3214
    %v4204 = vunpack.c.l.b16 %v3215
    %v4205 = vunpack.c.l.b16 %v3216
    %v4206 = vunpack.c.h.b16 %v3216
    %v4207 = vunpack.c.l.b16 %v3217
    %v4208 = vunpack.c.h.b16 %v3217
    %v4209 = vunpack.c.l.b16 %v3218
    %v4210 = vunpack.c.h.b16 %v3218
    %v4211 = vunpack.c.l.b16 %v3219
    %v4212 = vunpack.c.l.b16 %v3220
    %v4213 = vunpack.c.h.b16 %v3220
    %v4214 = vunpack.c.l.b16 %v3221
    %v4215 = vunpack.c.h.b16 %v3221
    %v4216 = vunpack.c.l.b16 %v3222
    %v4217 = vunpack.c.h.b16 %v3222
    %v4218 = vunpack.c.l.b16 %v3223
    %v4219 = vunpack.c.l.b16 %v3224
    %v4220 = vunpack.c.h.b16 %v3224
    %v4221 = vunpack.c.l.b16 %v3225
    %v4222 = vunpack.c.h.b16 %v3225
    %v4223 = vunpack.c.l.b16 %v3226
    %v4224 = vunpack.c.h.b16 %v3226
    %v4225 = vunpack.c.l.b16 %v3227
    %v4226 = vunpack.c.l.b16 %v3228
    %v4227 = vunpack.c.h.b16 %v3228
    %v4228 = vunpack.c.l.b16 %v3229
    %v4229 = vunpack.c.h.b16 %v3229
    %v4230 = vunpack.c.l.b16 %v3230
    %v4231 = vunpack.c.h.b16 %v3230
    %v4232 = vunpack.c.l.b16 %v3231
    %v4233 = vunpack.c.l.b16 %v3232
    %v4234 = vunpack.c.h.b16 %v3232
    %v4235 = vunpack.c.l.b16 %v3233
    %v4236 = vunpack.c.h.b16 %v3233
    %v4237 = vunpack.c.l.b16 %v3234
    %v4238 = vunpack.c.h.b16 %v3234
    %v4239 = vunpack.c.l.b16 %v3235
    %v4240 = vunpack.c.l.b16 %v3236
    %v4241 = vunpack.c.h.b16 %v3236
    %v4242 = vunpack.c.l.b16 %v3237
    %v4243 = vunpack.c.h.b16 %v3237
    %v4244 = vunpack.c.l.b16 %v3238
    %v4245 = vunpack.c.h.b16 %v3238
    %v4246 = vunpack.c.l.b16 %v3239
    %v4247 = vunpack.c.l.b16 %v3240
    %v4248 = vunpack.c.h.b16 %v3240
    %v4249 = vunpack.c.l.b16 %v3241
    %v4250 = vunpack.c.h.b16 %v3241
    %v4251 = vunpack.c.l.b16 %v3242
    %v4252 = vunpack.c.h.b16 %v3242
    %v4253 = vunpack.c.l.b16 %v3243
    %v4254 = vunpack.c.l.b16 %v3244
    %v4255 = vunpack.c.h.b16 %v3244
    %v4256 = vunpack.c.l.b16 %v3245
    %v4257 = vunpack.c.h.b16 %v3245
    %v4258 = vunpack.c.l.b16 %v3246
    %v4259 = vunpack.c.h.b16 %v3246
    %v4260 = vunpack.c.l.b16 %v3247
    %v4261 = vunpack.c.l.b16 %v3248
    %v4262 = vunpack.c.h.b16 %v3248
    %v4263 = vunpack.c.l.b16 %v3249
    %v4264 = vunpack.c.h.b16 %v3249
    %v4265 = vunpack.c.l.b16 %v3250
    %v4266 = vunpack.c.h.b16 %v3250
    %v4267 = vunpack.c.l.b16 %v3251
    %v4268 = vunpack.c.l.b16 %v3252
    %v4269 = vunpack.c.h.b16 %v3252
    %v4270 = vunpack.c.l.b16 %v3253
    %v4271 = vunpack.c.h.b16 %v3253
    %v4272 = vunpack.c.l.b16 %v3254
    %v4273 = vunpack.c.h.b16 %v3254
    %v4274 = vunpack.c.l.b16 %v3255
    %v4275 = vunpack.c.l.b16 %v3256
    %v4276 = vunpack.c.h.b16 %v3256
    %v4277 = vunpack.c.l.b16 %v3257
    %v4278 = vunpack.c.h.b16 %v3257
    %v4279 = vunpack.c.l.b16 %v3258
    %v4280 = vunpack.c.h.b16 %v3258
    %v4281 = vunpack.c.l.b16 %v3259
    %v4282 = vunpack.c.l.b16 %v3260
    %v4283 = vunpack.c.h.b16 %v3260
    %v4284 = vunpack.c.l.b16 %v3261
    %v4285 = vunpack.c.h.b16 %v3261
    %v4286 = vunpack.c.l.b16 %v3262
    %v4287 = vunpack.c.h.b16 %v3262
    %v4288 = vunpack.c.l.b16 %v3263
    %v4289 = vunpack.c.l.b16 %v3264
    %v4290 = vunpack.c.h.b16 %v3264
    %v4291 = vunpack.c.l.b16 %v3265
    %v4292 = vunpack.c.h.b16 %v3265
    %v4293 = vunpack.c.l.b16 %v3266
    %v4294 = vunpack.c.h.b16 %v3266
    %v4295 = vunpack.c.l.b16 %v3267
    %v4296 = vunpack.c.l.b16 %v3268
    %v4297 = vunpack.c.h.b16 %v3268
    %v4298 = vunpack.c.l.b16 %v3269
    %v4299 = vunpack.c.h.b16 %v3269
    %v4300 = vunpack.c.l.b16 %v3270
    %v4301 = vunpack.c.h.b16 %v3270
    %v4302 = vunpack.c.l.b16 %v3271
    %v4303 = vunpack.c.l.b16 %v3272
    %v4304 = vunpack.c.h.b16 %v3272
    %v4305 = vunpack.c.l.b16 %v3273
    %v4306 = vunpack.c.h.b16 %v3273
    %v4307 = vunpack.c.l.b16 %v3274
    %v4308 = vunpack.c.h.b16 %v3274
    %v4309 = vunpack.c.l.b16 %v3275
    %v4310 = vunpack.c.l.b16 %v3276
    %v4311 = vunpack.c.h.b16 %v3276
    %v4312 = vunpack.c.l.b16 %v3277
    %v4313 = vunpack.c.h.b16 %v3277
    %v4314 = vunpack.c.l.b16 %v3278
    %v4315 = vunpack.c.h.b16 %v3278
    %v4316 = vunpack.c.l.b16 %v3279
    %v4317 = vunpack.c.l.b16 %v3280
    %v4318 = vunpack.c.h.b16 %v3280
    %v4319 = vunpack.c.l.b16 %v3281
    %v4320 = vunpack.c.h.b16 %v3281
    %v4321 = vunpack.c.l.b16 %v3282
    %v4322 = vunpack.c.h.b16 %v3282
    %v4323 = vunpack.c.l.b16 %v3283
    %v4324 = vunpack.c.l.b16 %v3284
    %v4325 = vunpack.c.h.b16 %v3284
    %v4326 = vunpack.c.l.b16 %v3285
    %v4327 = vunpack.c.h.b16 %v3285
    %v4328 = vunpack.c.l.b16 %v3286
    %v4329 = vunpack.c.h.b16 %v3286
    %v4330 = vunpack.c.l.b16 %v3287
    %v4331 = vunpack.c.l.b16 %v3288
    %v4332 = vunpack.c.h.b16 %v3288
    %v4333 = vunpack.c.l.b16 %v3289
    %v4334 = vunpack.c.h.b16 %v3289
    %v4335 = vunpack.c.l.b16 %v3290
    %v4336 = vunpack.c.h.b16 %v3290
    %v4337 = vunpack.c.l.b16 %v3291
    %v4338 = vunpack.c.l.b16 %v3292
    %v4339 = vunpack.c.h.b16 %v3292
    %v4340 = vunpack.c.l.b16 %v3293
    %v4341 = vunpack.c.h.b16 %v3293
    %v4342 = vunpack.c.l.b16 %v3294
    %v4343 = vunpack.c.h.b16 %v3294
    %v4344 = vunpack.c.l.b16 %v3295
    %v4345 = vunpack.c.l.b16 %v3296
    %v4346 = vunpack.c.h.b16 %v3296
    %v4347 = vunpack.c.l.b16 %v3297
    %v4348 = vunpack.c.h.b16 %v3297
    %v4349 = vunpack.c.l.b16 %v3298
    %v4350 = vunpack.c.h.b16 %v3298
    %v4351 = vunpack.c.l.b16 %v3299
    %v4352 = vunpack.c.l.b16 %v3300
    %v4353 = vunpack.c.h.b16 %v3300
    %v4354 = vunpack.c.l.b16 %v3301
    %v4355 = vunpack.c.h.b16 %v3301
    %v4356 = vunpack.c.l.b16 %v3302
    %v4357 = vunpack.c.h.b16 %v3302
    %v4358 = vunpack.c.l.b16 %v3303
    %v4359 = vunpack.c.l.b16 %v3304
    %v4360 = vunpack.c.h.b16 %v3304
    %v4361 = vunpack.c.l.b16 %v3305
    %v4362 = vunpack.c.h.b16 %v3305
    %v4363 = vunpack.c.l.b16 %v3306
    %v4364 = vunpack.c.h.b16 %v3306
    %v4365 = vunpack.c.l.b16 %v3307
    %v4366 = vunpack.c.l.b16 %v3308
    %v4367 = vunpack.c.h.b16 %v3308
    %v4368 = vunpack.c.l.b16 %v3309
    %v4369 = vunpack.c.h.b16 %v3309
    %v4370 = vunpack.c.l.b16 %v3310
    %v4371 = vunpack.c.h.b16 %v3310
    %v4372 = vunpack.c.l.b16 %v3311
    %v4373 = vunpack.c.l.b16 %v3312
    %v4374 = vunpack.c.h.b16 %v3312
    %v4375 = vunpack.c.l.b16 %v3313
    %v4376 = vunpack.c.h.b16 %v3313
    %v4377 = vunpack.c.l.b16 %v3314
    %v4378 = vunpack.c.h.b16 %v3314
    %v4379 = vunpack.c.l.b16 %v3315
    %v4380 = vunpack.c.l.b16 %v3316
    %v4381 = vunpack.c.h.b16 %v3316
    %v4382 = vunpack.c.l.b16 %v3317
    %v4383 = vunpack.c.h.b16 %v3317
    %v4384 = vunpack.c.l.b16 %v3318
    %v4385 = vunpack.c.h.b16 %v3318
    %v4386 = vunpack.c.l.b16 %v3319
    %v4387 = vunpack.c.l.b16 %v3320
    %v4388 = vunpack.c.h.b16 %v3320
    %v4389 = vunpack.c.l.b16 %v3321
    %v4390 = vunpack.c.h.b16 %v3321
    %v4391 = vunpack.c.l.b16 %v3322
    %v4392 = vunpack.c.h.b16 %v3322
    %v4393 = vunpack.c.l.b16 %v3323
    %v4394 = vunpack.c.l.b16 %v3324
    %v4395 = vunpack.c.h.b16 %v3324
    %v4396 = vunpack.c.l.b16 %v3325
    %v4397 = vunpack.c.h.b16 %v3325
    %v4398 = vunpack.c.l.b16 %v3326
    %v4399 = vunpack.c.h.b16 %v3326
    %v4400 = vunpack.c.l.b16 %v3327
    %v4401 = vunpack.c.l.b16 %v3328
    %v4402 = vunpack.c.h.b16 %v3328
    %v4403 = vunpack.c.l.b16 %v3329
    %v4404 = vunpack.c.h.b16 %v3329
    %v4405 = vunpack.c.l.b16 %v3330
    %v4406 = vunpack.c.h.b16 %v3330
    %v4407 = vunpack.c.l.b16 %v3331
    %v4408 = vunpack.c.l.b16 %v3332
    %v4409 = vunpack.c.h.b16 %v3332
    %v4410 = vunpack.c.l.b16 %v3333
    %v4411 = vunpack.c.h.b16 %v3333
    %v4412 = vunpack.c.l.b16 %v3334
    %v4413 = vunpack.c.h.b16 %v3334
    %v4414 = vunpack.c.l.b16 %v3335
    %v4415 = vunpack.c.l.b16 %v3336
    %v4416 = vunpack.c.h.b16 %v3336
    %v4417 = vunpack.c.l.b16 %v3337
    %v4418 = vunpack.c.h.b16 %v3337
    %v4419 = vunpack.c.l.b16 %v3338
    %v4420 = vunpack.c.h.b16 %v3338
    %v4421 = vunpack.c.l.b16 %v3339
    %v4422 = vunpack.c.l.b16 %v3340
    %v4423 = vunpack.c.h.b16 %v3340
    %v4424 = vunpack.c.l.b16 %v3341
    %v4425 = vunpack.c.h.b16 %v3341
    %v4426 = vunpack.c.l.b16 %v3342
    %v4427 = vunpack.c.h.b16 %v3342
    %v4428 = vunpack.c.l.b16 %v3343
    %v4429 = vunpack.c.l.b16 %v3344
    %v4430 = vunpack.c.h.b16 %v3344
    %v4431 = vunpack.c.l.b16 %v3345
    %v4432 = vunpack.c.h.b16 %v3345
    %v4433 = vunpack.c.l.b16 %v3346
    %v4434 = vunpack.c.h.b16 %v3346
    %v4435 = vunpack.c.l.b16 %v3347
    %v4436 = vunpack.c.l.b16 %v3348
    %v4437 = vunpack.c.h.b16 %v3348
    %v4438 = vunpack.c.l.b16 %v3349
    %v4439 = vunpack.c.h.b16 %v3349
    %v4440 = vunpack.c.l.b16 %v3350
    %v4441 = vunpack.c.h.b16 %v3350
    %v4442 = vunpack.c.l.b16 %v3351
    %v4443 = vunpack.c.l.b16 %v3352
    %v4444 = vunpack.c.h.b16 %v3352
    %v4445 = vunpack.c.l.b16 %v3353
    %v4446 = vunpack.c.h.b16 %v3353
    %v4447 = vunpack.c.l.b16 %v3354
    %v4448 = vunpack.c.h.b16 %v3354
    %v4449 = vunpack.c.l.b16 %v3355
    %v4450 = vunpack.c.l.b16 %v3356
    %v4451 = vunpack.c.h.b16 %v3356
    %v4452 = vunpack.c.l.b16 %v3357
    %v4453 = vunpack.c.h.b16 %v3357
    %v4454 = vunpack.c.l.b16 %v3358
    %v4455 = vunpack.c.h.b16 %v3358
    %v4456 = vunpack.c.l.b16 %v3359
    %v4457 = vunpack.c.l.b16 %v3360
    %v4458 = vunpack.c.h.b16 %v3360
    %v4459 = vunpack.c.l.b16 %v3361
    %v4460 = vunpack.c.h.b16 %v3361
    %v4461 = vunpack.c.l.b16 %v3362
    %v4462 = vunpack.c.h.b16 %v3362
    %v4463 = vunpack.c.l.b16 %v3363
    %v4464 = vunpack.c.l.b16 %v3364
    %v4465 = vunpack.c.h.b16 %v3364
    %v4466 = vunpack.c.l.b16 %v3365
    %v4467 = vunpack.c.h.b16 %v3365
    %v4468 = vunpack.c.l.b16 %v3366
    %v4469 = vunpack.c.h.b16 %v3366
    %v4470 = vunpack.c.l.b16 %v3367
    %v4471 = vunpack.c.l.b16 %v3368
    %v4472 = vunpack.c.h.b16 %v3368
    %v4473 = vunpack.c.l.b16 %v3369
    %v4474 = vunpack.c.h.b16 %v3369
    %v4475 = vunpack.c.l.b16 %v3370
    %v4476 = vunpack.c.h.b16 %v3370
    %v4477 = vunpack.c.l.b16 %v3371
    %v4478 = vunpack.c.l.b16 %v3372
    %v4479 = vunpack.c.h.b16 %v3372
    %v4480 = vunpack.c.l.b16 %v3373
    %v4481 = vunpack.c.h.b16 %v3373
    %v4482 = vunpack.c.l.b16 %v3374
    %v4483 = vunpack.c.h.b16 %v3374
    %v4484 = vunpack.c.l.b16 %v3375
    %v4485 = vunpack.c.l.b16 %v3376
    %v4486 = vunpack.c.h.b16 %v3376
    %v4487 = vunpack.c.l.b16 %v3377
    %v4488 = vunpack.c.h.b16 %v3377
    %v4489 = vunpack.c.l.b16 %v3378
    %v4490 = vunpack.c.h.b16 %v3378
    %v4491 = vunpack.c.l.b16 %v3379
    %v4492 = vunpack.c.l.b16 %v3380
    %v4493 = vunpack.c.h.b16 %v3380
    %v4494 = vunpack.c.l.b16 %v3381
    %v4495 = vunpack.c.h.b16 %v3381
    %v4496 = vunpack.c.l.b16 %v3382
    %v4497 = vunpack.c.h.b16 %v3382
    %v4498 = vunpack.c.l.b16 %v3383
    %v4499 = vpack.c.b16 %v3820, %v3813
    %v4500 = vpack.c.b16 %v3821, %v3814
    %v4501 = vpack.c.b16 %v3822, %v3815
    %v4502 = vpack.c.b16 %v3823, %v3816
    %v4503 = vpack.c.b16 %v3824, %v3817
    %v4504 = vpack.c.b16 %v3825, %v3818
    %v4505 = vpack.c.b16 %v3826, %v3819
    %v4506 = vpack.c.b16 %v3834, %v3827
    %v4507 = vpack.c.b16 %v3835, %v3828
    %v4508 = vpack.c.b16 %v3836, %v3829
    %v4509 = vpack.c.b16 %v3837, %v3830
    %v4510 = vpack.c.b16 %v3838, %v3831
    %v4511 = vpack.c.b16 %v3839, %v3832
    %v4512 = vpack.c.b16 %v3840, %v3833
    %v4513 = vpack.c.b16 %v3848, %v3841
    %v4514 = vpack.c.b16 %v3849, %v3842
    %v4515 = vpack.c.b16 %v3850, %v3843
    %v4516 = vpack.c.b16 %v3851, %v3844
    %v4517 = vpack.c.b16 %v3852, %v3845
    %v4518 = vpack.c.b16 %v3853, %v3846
    %v4519 = vpack.c.b16 %v3854, %v3847
    %v4520 = vpack.c.b16 %v3862, %v3855
    %v4521 = vpack.c.b16 %v3863, %v3856
    %v4522 = vpack.c.b16 %v3864, %v3857
    %v4523 = vpack.c.b16 %v3865, %v3858
    %v4524 = vpack.c.b16 %v3866, %v3859
    %v4525 = vpack.c.b16 %v3867, %v3860
    %v4526 = vpack.c.b16 %v3868, %v3861
    %v4527 = vpack.c.b16 %v3876, %v3869
    %v4528 = vpack.c.b16 %v3877, %v3870
    %v4529 = vpack.c.b16 %v3878, %v3871
    %v4530 = vpack.c.b16 %v3879, %v3872
    %v4531 = vpack.c.b16 %v3880, %v3873
    %v4532 = vpack.c.b16 %v3881, %v3874
    %v4533 = vpack.c.b16 %v3882, %v3875
    %v4534 = vpack.c.b16 %v3890, %v3883
    %v4535 = vpack.c.b16 %v3891, %v3884
    %v4536 = vpack.c.b16 %v3892, %v3885
    %v4537 = vpack.c.b16 %v3893, %v3886
    %v4538 = vpack.c.b16 %v3894, %v3887
    %v4539 = vpack.c.b16 %v3895, %v3888
    %v4540 = vpack.c.b16 %v3896, %v3889
    %v4541 = vpack.c.b16 %v3904, %v3897
    %v4542 = vpack.c.b16 %v3905, %v3898
    %v4543 = vpack.c.b16 %v3906, %v3899
    %v4544 = vpack.c.b16 %v3907, %v3900
    %v4545 = vpack.c.b16 %v3908, %v3901
    %v4546 = vpack.c.b16 %v3909, %v3902
    %v4547 = vpack.c.b16 %v3910, %v3903
    %v4548 = vpack.c.b16 %v3918, %v3911
    %v4549 = vpack.c.b16 %v3919, %v3912
    %v4550 = vpack.c.b16 %v3920, %v3913
    %v4551 = vpack.c.b16 %v3921, %v3914
    %v4552 = vpack.c.b16 %v3922, %v3915
    %v4553 = vpack.c.b16 %v3923, %v3916
    %v4554 = vpack.c.b16 %v3924, %v3917
    %v4555 = vpack.c.b16 %v3932, %v3925
    %v4556 = vpack.c.b16 %v3933, %v3926
    %v4557 = vpack.c.b16 %v3934, %v3927
    %v4558 = vpack.c.b16 %v3935, %v3928
    %v4559 = vpack.c.b16 %v3936, %v3929
    %v4560 = vpack.c.b16 %v3937, %v3930
    %v4561 = vpack.c.b16 %v3938, %v3931
    %v4562 = vpack.c.b16 %v3946, %v3939
    %v4563 = vpack.c.b16 %v3947, %v3940
    %v4564 = vpack.c.b16 %v3948, %v3941
    %v4565 = vpack.c.b16 %v3949, %v3942
    %v4566 = vpack.c.b16 %v3950, %v3943
    %v4567 = vpack.c.b16 %v3951, %v3944
    %v4568 = vpack.c.b16 %v3952, %v3945
    %v4569 = vpack.c.b16 %v3960, %v3953
    %v4570 = vpack.c.b16 %v3961, %v3954
    %v4571 = vpack.c.b16 %v3962, %v3955
    %v4572 = vpack.c.b16 %v3963, %v3956
    %v4573 = vpack.c.b16 %v3964, %v3957
    %v4574 = vpack.c.b16 %v3965, %v3958
    %v4575 = vpack.c.b16 %v3966, %v3959
    %v4576 = vpack.c.b16 %v3974, %v3967
    %v4577 = vpack.c.b16 %v3975, %v3968
    %v4578 = vpack.c.b16 %v3976, %v3969
    %v4579 = vpack.c.b16 %v3977, %v3970
    %v4580 = vpack.c.b16 %v3978, %v3971
    %v4581 = vpack.c.b16 %v3979, %v3972
    %v4582 = vpack.c.b16 %v3980, %v3973
    %v4583 = vpack.c.b16 %v3988, %v3981
    %v4584 = vpack.c.b16 %v3989, %v3982
    %v4585 = vpack.c.b16 %v3990, %v3983
    %v4586 = vpack.c.b16 %v3991, %v3984
    %v4587 = vpack.c.b16 %v3992, %v3985
    %v4588 = vpack.c.b16 %v3993, %v3986
    %v4589 = vpack.c.b16 %v3994, %v3987
    %v4590 = vpack.c.b16 %v4002, %v3995
    %v4591 = vpack.c.b16 %v4003, %v3996
    %v4592 = vpack.c.b16 %v4004, %v3997
    %v4593 = vpack.c.b16 %v4005, %v3998
    %v4594 = vpack.c.b16 %v4006, %v3999
    %v4595 = vpack.c.b16 %v4007, %v4000
    %v4596 = vpack.c.b16 %v4008, %v4001
    %v4597 = vpack.c.b16 %v4016, %v4009
    %v4598 = vpack.c.b16 %v4017, %v4010
    %v4599 = vpack.c.b16 %v4018, %v4011
    %v4600 = vpack.c.b16 %v4019, %v4012
    %v4601 = vpack.c.b16 %v4020, %v4013
    %v4602 = vpack.c.b16 %v4021, %v4014
    %v4603 = vpack.c.b16 %v4022, %v4015
    %v4604 = vpack.c.b16 %v4030, %v4023
    %v4605 = vpack.c.b16 %v4031, %v4024
    %v4606 = vpack.c.b16 %v4032, %v4025
    %v4607 = vpack.c.b16 %v4033, %v4026
    %v4608 = vpack.c.b16 %v4034, %v4027
    %v4609 = vpack.c.b16 %v4035, %v4028
    %v4610 = vpack.c.b16 %v4036, %v4029
    %v4611 = vpack.c.b16 %v4044, %v4037
    %v4612 = vpack.c.b16 %v4045, %v4038
    %v4613 = vpack.c.b16 %v4046, %v4039
    %v4614 = vpack.c.b16 %v4047, %v4040
    %v4615 = vpack.c.b16 %v4048, %v4041
    %v4616 = vpack.c.b16 %v4049, %v4042
    %v4617 = vpack.c.b16 %v4050, %v4043
    %v4618 = vpack.c.b16 %v4058, %v4051
    %v4619 = vpack.c.b16 %v4059, %v4052
    %v4620 = vpack.c.b16 %v4060, %v4053
    %v4621 = vpack.c.b16 %v4061, %v4054
    %v4622 = vpack.c.b16 %v4062, %v4055
    %v4623 = vpack.c.b16 %v4063, %v4056
    %v4624 = vpack.c.b16 %v4064, %v4057
    %v4625 = vpack.c.b16 %v4072, %v4065
    %v4626 = vpack.c.b16 %v4073, %v4066
    %v4627 = vpack.c.b16 %v4074, %v4067
    %v4628 = vpack.c.b16 %v4075, %v4068
    %v4629 = vpack.c.b16 %v4076, %v4069
    %v4630 = vpack.c.b16 %v4077, %v4070
    %v4631 = vpack.c.b16 %v4078, %v4071
    %v4632 = vpack.c.b16 %v4086, %v4079
    %v4633 = vpack.c.b16 %v4087, %v4080
    %v4634 = vpack.c.b16 %v4088, %v4081
    %v4635 = vpack.c.b16 %v4089, %v4082
    %v4636 = vpack.c.b16 %v4090, %v4083
    %v4637 = vpack.c.b16 %v4091, %v4084
    %v4638 = vpack.c.b16 %v4092, %v4085
    %v4639 = vpack.c.b16 %v4100, %v4093
    %v4640 = vpack.c.b16 %v4101, %v4094
    %v4641 = vpack.c.b16 %v4102, %v4095
    %v4642 = vpack.c.b16 %v4103, %v4096
    %v4643 = vpack.c.b16 %v4104, %v4097
    %v4644 = vpack.c.b16 %v4105, %v4098
    %v4645 = vpack.c.b16 %v4106, %v4099
    %v4646 = vpack.c.b16 %v4114, %v4107
    %v4647 = vpack.c.b16 %v4115, %v4108
    %v4648 = vpack.c.b16 %v4116, %v4109
    %v4649 = vpack.c.b16 %v4117, %v4110
    %v4650 = vpack.c.b16 %v4118, %v4111
    %v4651 = vpack.c.b16 %v4119, %v4112
    %v4652 = vpack.c.b16 %v4120, %v4113
    %v4653 = vpack.c.b16 %v4128, %v4121
    %v4654 = vpack.c.b16 %v4129, %v4122
    %v4655 = vpack.c.b16 %v4130, %v4123
    %v4656 = vpack.c.b16 %v4131, %v4124
    %v4657 = vpack.c.b16 %v4132, %v4125
    %v4658 = vpack.c.b16 %v4133, %v4126
    %v4659 = vpack.c.b16 %v4134, %v4127
    %v4660 = vpack.c.b16 %v4142, %v4135
    %v4661 = vpack.c.b16 %v4143, %v4136
    %v4662 = vpack.c.b16 %v4144, %v4137
    %v4663 = vpack.c.b16 %v4145, %v4138
    %v4664 = vpack.c.b16 %v4146, %v4139
    %v4665 = vpack.c.b16 %v4147, %v4140
    %v4666 = vpack.c.b16 %v4148, %v4141
    %v4667 = vpack.c.b16 %v4156, %v4149
    %v4668 = vpack.c.b16 %v4157, %v4150
    %v4669 = vpack.c.b16 %v4158, %v4151
    %v4670 = vpack.c.b16 %v4159, %v4152
    %v4671 = vpack.c.b16 %v4160, %v4153
    %v4672 = vpack.c.b16 %v4161, %v4154
    %v4673 = vpack.c.b16 %v4162, %v4155
    %v4674 = vpack.c.b16 %v4170, %v4163
    %v4675 = vpack.c.b16 %v4171, %v4164
    %v4676 = vpack.c.b16 %v4172, %v4165
    %v4677 = vpack.c.b16 %v4173, %v4166
    %v4678 = vpack.c.b16 %v4174, %v4167
    %v4679 = vpack.c.b16 %v4175, %v4168
    %v4680 = vpack.c.b16 %v4176, %v4169
    %v4681 = vpack.c.b16 %v4184, %v4177
    %v4682 = vpack.c.b16 %v4185, %v4178
    %v4683 = vpack.c.b16 %v4186, %v4179
    %v4684 = vpack.c.b16 %v4187, %v4180
    %v4685 = vpack.c.b16 %v4188, %v4181
    %v4686 = vpack.c.b16 %v4189, %v4182
    %v4687 = vpack.c.b16 %v4190, %v4183
    %v4688 = vpack.c.b16 %v4198, %v4191
    %v4689 = vpack.c.b16 %v4199, %v4192
    %v4690 = vpack.c.b16 %v4200, %v4193
    %v4691 = vpack.c.b16 %v4201, %v4194
    %v4692 = vpack.c.b16 %v4202, %v4195
    %v4693 = vpack.c.b16 %v4203, %v4196
    %v4694 = vpack.c.b16 %v4204, %v4197
    %v4695 = vpack.c.b16 %v4212, %v4205
    %v4696 = vpack.c.b16 %v4213, %v4206
    %v4697 = vpack.c.b16 %v4214, %v4207
    %v4698 = vpack.c.b16 %v4215, %v4208
    %v4699 = vpack.c.b16 %v4216, %v4209
    %v4700 = vpack.c.b16 %v4217, %v4210
    %v4701 = vpack.c.b16 %v4218, %v4211
    %v4702 = vpack.c.b16 %v4226, %v4219
    %v4703 = vpack.c.b16 %v4227, %v4220
    %v4704 = vpack.c.b16 %v4228, %v4221
    %v4705 = vpack.c.b16 %v4229, %v4222
    %v4706 = vpack.c.b16 %v4230, %v4223
    %v4707 = vpack.c.b16 %v4231, %v4224
    %v4708 = vpack.c.b16 %v4232, %v4225
    %v4709 = vpack.c.b16 %v4240, %v4233
    %v4710 = vpack.c.b16 %v4241, %v4234
    %v4711 = vpack.c.b16 %v4242, %v4235
    %v4712 = vpack.c.b16 %v4243, %v4236
    %v4713 = vpack.c.b16 %v4244, %v4237
    %v4714 = vpack.c.b16 %v4245, %v4238
    %v4715 = vpack.c.b16 %v4246, %v4239
    %v4716 = vpack.c.b16 %v4254, %v4247
    %v4717 = vpack.c.b16 %v4255, %v4248
    %v4718 = vpack.c.b16 %v4256, %v4249
    %v4719 = vpack.c.b16 %v4257, %v4250
    %v4720 = vpack.c.b16 %v4258, %v4251
    %v4721 = vpack.c.b16 %v4259, %v4252
    %v4722 = vpack.c.b16 %v4260, %v4253
    %v4723 = vpack.c.b16 %v4268, %v4261
    %v4724 = vpack.c.b16 %v4269, %v4262
    %v4725 = vpack.c.b16 %v4270, %v4263
    %v4726 = vpack.c.b16 %v4271, %v4264
    %v4727 = vpack.c.b16 %v4272, %v4265
    %v4728 = vpack.c.b16 %v4273, %v4266
    %v4729 = vpack.c.b16 %v4274, %v4267
    %v4730 = vpack.c.b16 %v4282, %v4275
    %v4731 = vpack.c.b16 %v4283, %v4276
    %v4732 = vpack.c.b16 %v4284, %v4277
    %v4733 = vpack.c.b16 %v4285, %v4278
    %v4734 = vpack.c.b16 %v4286, %v4279
    %v4735 = vpack.c.b16 %v4287, %v4280
    %v4736 = vpack.c.b16 %v4288, %v4281
    %v4737 = vpack.c.b16 %v4296, %v4289
    %v4738 = vpack.c.b16 %v4297, %v4290
    %v4739 = vpack.c.b16 %v4298, %v4291
    %v4740 = vpack.c.b16 %v4299, %v4292
    %v4741 = vpack.c.b16 %v4300, %v4293
    %v4742 = vpack.c.b16 %v4301, %v4294
    %v4743 = vpack.c.b16 %v4302, %v4295
    %v4744 = vpack.c.b16 %v4310, %v4303
    %v4745 = vpack.c.b16 %v4311, %v4304
    %v4746 = vpack.c.b16 %v4312, %v4305
    %v4747 = vpack.c.b16 %v4313, %v4306
    %v4748 = vpack.c.b16 %v4314, %v4307
    %v4749 = vpack.c.b16 %v4315, %v4308
    %v4750 = vpack.c.b16 %v4316, %v4309
    %v4751 = vpack.c.b16 %v4324, %v4317
    %v4752 = vpack.c.b16 %v4325, %v4318
    %v4753 = vpack.c.b16 %v4326, %v4319
    %v4754 = vpack.c.b16 %v4327, %v4320
    %v4755 = vpack.c.b16 %v4328, %v4321
    %v4756 = vpack.c.b16 %v4329, %v4322
    %v4757 = vpack.c.b16 %v4330, %v4323
    %v4758 = vpack.c.b16 %v4338, %v4331
    %v4759 = vpack.c.b16 %v4339, %v4332
    %v4760 = vpack.c.b16 %v4340, %v4333
    %v4761 = vpack.c.b16 %v4341, %v4334
    %v4762 = vpack.c.b16 %v4342, %v4335
    %v4763 = vpack.c.b16 %v4343, %v4336
    %v4764 = vpack.c.b16 %v4344, %v4337
    %v4765 = vpack.c.b16 %v4352, %v4345
    %v4766 = vpack.c.b16 %v4353, %v4346
    %v4767 = vpack.c.b16 %v4354, %v4347
    %v4768 = vpack.c.b16 %v4355, %v4348
    %v4769 = vpack.c.b16 %v4356, %v4349
    %v4770 = vpack.c.b16 %v4357, %v4350
    %v4771 = vpack.c.b16 %v4358, %v4351
    %v4772 = vpack.c.b16 %v4366, %v4359
    %v4773 = vpack.c.b16 %v4367, %v4360
    %v4774 = vpack.c.b16 %v4368, %v4361
    %v4775 = vpack.c.b16 %v4369, %v4362
    %v4776 = vpack.c.b16 %v4370, %v4363
    %v4777 = vpack.c.b16 %v4371, %v4364
    %v4778 = vpack.c.b16 %v4372, %v4365
    %v4779 = vpack.c.b16 %v4380, %v4373
    %v4780 = vpack.c.b16 %v4381, %v4374
    %v4781 = vpack.c.b16 %v4382, %v4375
    %v4782 = vpack.c.b16 %v4383, %v4376
    %v4783 = vpack.c.b16 %v4384, %v4377
    %v4784 = vpack.c.b16 %v4385, %v4378
    %v4785 = vpack.c.b16 %v4386, %v4379
    %v4786 = vpack.c.b16 %v4394, %v4387
    %v4787 = vpack.c.b16 %v4395, %v4388
    %v4788 = vpack.c.b16 %v4396, %v4389
    %v4789 = vpack.c.b16 %v4397, %v4390
    %v4790 = vpack.c.b16 %v4398, %v4391
    %v4791 = vpack.c.b16 %v4399, %v4392
    %v4792 = vpack.c.b16 %v4400, %v4393
    %v4793 = vpack.c.b16 %v4408, %v4401
    %v4794 = vpack.c.b16 %v4409, %v4402
    %v4795 = vpack.c.b16 %v4410, %v4403
    %v4796 = vpack.c.b16 %v4411, %v4404
    %v4797 = vpack.c.b16 %v4412, %v4405
    %v4798 = vpack.c.b16 %v4413, %v4406
    %v4799 = vpack.c.b16 %v4414, %v4407
    %v4800 = vpack.c.b16 %v4422, %v4415
    %v4801 = vpack.c.b16 %v4423, %v4416
    %v4802 = vpack.c.b16 %v4424, %v4417
    %v4803 = vpack.c.b16 %v4425, %v4418
    %v4804 = vpack.c.b16 %v4426, %v4419
    %v4805 = vpack.c.b16 %v4427, %v4420
    %v4806 = vpack.c.b16 %v4428, %v4421
    %v4807 = vpack.c.b16 %v4436, %v4429
    %v4808 = vpack.c.b16 %v4437, %v4430
    %v4809 = vpack.c.b16 %v4438, %v4431
    %v4810 = vpack.c.b16 %v4439, %v4432
    %v4811 = vpack.c.b16 %v4440, %v4433
    %v4812 = vpack.c.b16 %v4441, %v4434
    %v4813 = vpack.c.b16 %v4442, %v4435
    %v4814 = vpack.c.b16 %v4450, %v4443
    %v4815 = vpack.c.b16 %v4451, %v4444
    %v4816 = vpack.c.b16 %v4452, %v4445
    %v4817 = vpack.c.b16 %v4453, %v4446
    %v4818 = vpack.c.b16 %v4454, %v4447
    %v4819 = vpack.c.b16 %v4455, %v4448
    %v4820 = vpack.c.b16 %v4456, %v4449
    %v4821 = vpack.c.b16 %v4464, %v4457
    %v4822 = vpack.c.b16 %v4465, %v4458
    %v4823 = vpack.c.b16 %v4466, %v4459
    %v4824 = vpack.c.b16 %v4467, %v4460
    %v4825 = vpack.c.b16 %v4468, %v4461
    %v4826 = vpack.c.b16 %v4469, %v4462
    %v4827 = vpack.c.b16 %v4470, %v4463
    %v4828 = vpack.c.b16 %v4478, %v4471
    %v4829 = vpack.c.b16 %v4479, %v4472
    %v4830 = vpack.c.b16 %v4480, %v4473
    %v4831 = vpack.c.b16 %v4481, %v4474
    %v4832 = vpack.c.b16 %v4482, %v4475
    %v4833 = vpack.c.b16 %v4483, %v4476
    %v4834 = vpack.c.b16 %v4484, %v4477
    %v4835 = vpack.c.b16 %v4492, %v4485
    %v4836 = vpack.c.b16 %v4493, %v4486
    %v4837 = vpack.c.b16 %v4494, %v4487
    %v4838 = vpack.c.b16 %v4495, %v4488
    %v4839 = vpack.c.b16 %v4496, %v4489
    %v4840 = vpack.c.b16 %v4497, %v4490
    %v4841 = vpack.c.b16 %v4498, %v4491
    %v5186 = vsel %vm2322, %v2991, 0
    %5188 = vmatprep.subr.bf16.mxu0 %v4549
    %5189 = vmatpush1.bf16.msra.mxu0 %v4548
    %5190 = vmatprep.subr.bf16.mxu0 %v4542
    %5191 = vmatpush1.bf16.msra.mxu0 %v4541
    %5192 = vmatprep.subr.bf16.mxu0 %v4535
    %5193 = vmatpush1.bf16.msra.mxu0 %v4534
    %5194 = vmatprep.subr.bf16.mxu0 %v4528
    %5195 = vmatpush1.bf16.msra.mxu0 %v4527
    %5196 = vmatprep.subr.bf16.mxu0 %v4521
    %5197 = vmatpush1.bf16.msra.mxu0 %v4520
    %5198 = vmatprep.subr.bf16.mxu0 %v4514
    %5199 = vmatpush1.bf16.msra.mxu0 %v4513
    %5200 = vmatprep.subr.bf16.mxu0 %v4507
    %5201 = vmatpush1.bf16.msra.mxu0 %v4506
    %5202 = vmatprep.subr.bf16.mxu0 %v4500
    %5203 = vmatpush1.bf16.msra.mxu0 %v4499
    %5204 = vmatprep.subr.bf16.mxu0 %v4605
    %5205 = vmatpush2.bf16.msra.mxu0 %v4604
    %5206 = vmatprep.subr.bf16.mxu0 %v4598
    %5207 = vmatpush2.bf16.msra.mxu0 %v4597
    %5208 = vmatprep.subr.bf16.mxu0 %v4591
    %5209 = vmatpush2.bf16.msra.mxu0 %v4590
    %5210 = vmatprep.subr.bf16.mxu0 %v4584
    %5211 = vmatpush2.bf16.msra.mxu0 %v4583
    %5212 = vmatprep.subr.bf16.mxu0 %v4577
    %5213 = vmatpush2.bf16.msra.mxu0 %v4576
    %5214 = vmatprep.subr.bf16.mxu0 %v4570
    %5215 = vmatpush2.bf16.msra.mxu0 %v4569
    %5216 = vmatprep.subr.bf16.mxu0 %v4563
    %5217 = vmatpush2.bf16.msra.mxu0 %v4562
    %5218 = vmatprep.subr.bf16.mxu0 %v4556
    %5219 = vmatpush2.bf16.msra.mxu0 %v4555
    %5220 = vmatprep.mubr.bf16.mxu0 %v2986
    %5221 = vmatmul.mubr.bf16.gmra.mxu0 %v2985
    %v5222 = vpop.f32.mrf.mxu0
    %v5223 = vadd.f32 %v3389, %v5222
    %v5224 = vpop.f32.mrf.mxu0
    %v5225 = vadd.f32 %v3393, %v5224
    %v5226 = vpop.f32.mrf.mxu0
    %v5227 = vpop.f32.mrf.mxu0
    %5228 = vdwg.mxu0
    %5229 = vmatprep.subr.bf16.mxu0 %v4661
    %5230 = vmatpush1.bf16.msra.mxu0 %v4660
    %5231 = vmatprep.subr.bf16.mxu0 %v4654
    %5232 = vmatpush1.bf16.msra.mxu0 %v4653
    %5233 = vmatprep.subr.bf16.mxu0 %v4647
    %5234 = vmatpush1.bf16.msra.mxu0 %v4646
    %5235 = vmatprep.subr.bf16.mxu0 %v4640
    %5236 = vmatpush1.bf16.msra.mxu0 %v4639
    %5237 = vmatprep.subr.bf16.mxu0 %v4633
    %5238 = vmatpush1.bf16.msra.mxu0 %v4632
    %5239 = vmatprep.subr.bf16.mxu0 %v4626
    %5240 = vmatpush1.bf16.msra.mxu0 %v4625
    %5241 = vmatprep.subr.bf16.mxu0 %v4619
    %5242 = vmatpush1.bf16.msra.mxu0 %v4618
    %5243 = vmatprep.subr.bf16.mxu0 %v4612
    %5244 = vmatpush1.bf16.msra.mxu0 %v4611
    %5245 = vmatprep.subr.bf16.mxu0 %v4717
    %5246 = vmatpush2.bf16.msra.mxu0 %v4716
    %5247 = vmatprep.subr.bf16.mxu0 %v4710
    %5248 = vmatpush2.bf16.msra.mxu0 %v4709
    %5249 = vmatprep.subr.bf16.mxu0 %v4703
    %5250 = vmatpush2.bf16.msra.mxu0 %v4702
    %5251 = vmatprep.subr.bf16.mxu0 %v4696
    %5252 = vmatpush2.bf16.msra.mxu0 %v4695
    %5253 = vmatprep.subr.bf16.mxu0 %v4689
    %5254 = vmatpush2.bf16.msra.mxu0 %v4688
    %5255 = vmatprep.subr.bf16.mxu0 %v4682
    %5256 = vmatpush2.bf16.msra.mxu0 %v4681
    %5257 = vmatprep.subr.bf16.mxu0 %v4675
    %5258 = vmatpush2.bf16.msra.mxu0 %v4674
    %5259 = vmatprep.subr.bf16.mxu0 %v4668
    %5260 = vmatpush2.bf16.msra.mxu0 %v4667
    %5261 = vmatprep.mubr.bf16.mxu0 %v2988
    %5262 = vmatmul.mubr.bf16.gmra.mxu0 %v2987
    %v5263 = vpop.f32.mrf.mxu0
    %v5264 = vadd.f32 %v5223, %v5263
    %v5265 = vpop.f32.mrf.mxu0
    %v5266 = vadd.f32 %v5225, %v5265
    %v5267 = vpop.f32.mrf.mxu0
    %v5268 = vpop.f32.mrf.mxu0
    %5269 = vdwg.mxu0
    %5270 = vmatprep.subr.bf16.mxu0 %v4773
    %5271 = vmatpush1.bf16.msra.mxu0 %v4772
    %5272 = vmatprep.subr.bf16.mxu0 %v4766
    %5273 = vmatpush1.bf16.msra.mxu0 %v4765
    %5274 = vmatprep.subr.bf16.mxu0 %v4759
    %5275 = vmatpush1.bf16.msra.mxu0 %v4758
    %5276 = vmatprep.subr.bf16.mxu0 %v4752
    %5277 = vmatpush1.bf16.msra.mxu0 %v4751
    %5278 = vmatprep.subr.bf16.mxu0 %v4745
    %5279 = vmatpush1.bf16.msra.mxu0 %v4744
    %5280 = vmatprep.subr.bf16.mxu0 %v4738
    %5281 = vmatpush1.bf16.msra.mxu0 %v4737
    %5282 = vmatprep.subr.bf16.mxu0 %v4731
    %5283 = vmatpush1.bf16.msra.mxu0 %v4730
    %5284 = vmatprep.subr.bf16.mxu0 %v4724
    %5285 = vmatpush1.bf16.msra.mxu0 %v4723
    %5286 = vmatprep.subr.bf16.mxu0 %v4829
    %5287 = vmatpush2.bf16.msra.mxu0 %v4828
    %5288 = vmatprep.subr.bf16.mxu0 %v4822
    %5289 = vmatpush2.bf16.msra.mxu0 %v4821
    %5290 = vmatprep.subr.bf16.mxu0 %v4815
    %5291 = vmatpush2.bf16.msra.mxu0 %v4814
    %5292 = vmatprep.subr.bf16.mxu0 %v4808
    %5293 = vmatpush2.bf16.msra.mxu0 %v4807
    %5294 = vmatprep.subr.bf16.mxu0 %v4801
    %5295 = vmatpush2.bf16.msra.mxu0 %v4800
    %5296 = vmatprep.subr.bf16.mxu0 %v4794
    %5297 = vmatpush2.bf16.msra.mxu0 %v4793
    %5298 = vmatprep.subr.bf16.mxu0 %v4787
    %5299 = vmatpush2.bf16.msra.mxu0 %v4786
    %5300 = vmatprep.subr.bf16.mxu0 %v4780
    %5301 = vmatpush2.bf16.msra.mxu0 %v4779
    %5302 = vmatprep.mubr.bf16.mxu0 %v2990
    %5303 = vmatmul.mubr.bf16.gmra.mxu0 %v2989
    %v5304 = vpop.f32.mrf.mxu0
    %v5305 = vadd.f32 %v5264, %v5304
    %v5306 = vpop.f32.mrf.mxu0
    %v5307 = vadd.f32 %v5266, %v5306
    %v5308 = vpop.f32.mrf.mxu0
    %v5309 = vpop.f32.mrf.mxu0
    %5310 = vdwg.mxu0
    %5311 = vmatprep.subr.bf16.mxu0 0
    %5312 = vmatpush1.bf16.msra.mxu0 0
    %5313 = vmatprep.subr.bf16.mxu0 0
    %5314 = vmatpush1.bf16.msra.mxu0 0
    %5315 = vmatprep.subr.bf16.mxu0 0
    %5316 = vmatpush1.bf16.msra.mxu0 0
    %5317 = vmatprep.subr.bf16.mxu0 0
    %5318 = vmatpush1.bf16.msra.mxu0 0
    %5319 = vmatprep.subr.bf16.mxu0 0
    %5320 = vmatpush1.bf16.msra.mxu0 0
    %5321 = vmatprep.subr.bf16.mxu0 0
    %5322 = vmatpush1.bf16.msra.mxu0 0
    %5323 = vmatprep.subr.bf16.mxu0 0
    %5324 = vmatpush1.bf16.msra.mxu0 0
    %5325 = vmatprep.subr.bf16.mxu0 %v4836
    %5326 = vmatpush1.bf16.msra.mxu0 %v4835
    %5327 = vmatprep.subr.bf16.mxu0 0
    %5328 = vmatpush2.bf16.msra.mxu0 0
    %5329 = vmatprep.subr.bf16.mxu0 0
    %5330 = vmatpush2.bf16.msra.mxu0 0
    %5331 = vmatprep.subr.bf16.mxu0 0
    %5332 = vmatpush2.bf16.msra.mxu0 0
    %5333 = vmatprep.subr.bf16.mxu0 0
    %5334 = vmatpush2.bf16.msra.mxu0 0
    %5335 = vmatprep.subr.bf16.mxu0 0
    %5336 = vmatpush2.bf16.msra.mxu0 0
    %5337 = vmatprep.subr.bf16.mxu0 0
    %5338 = vmatpush2.bf16.msra.mxu0 0
    %5339 = vmatprep.subr.bf16.mxu0 0
    %5340 = vmatpush2.bf16.msra.mxu0 0
    %5341 = vmatprep.subr.bf16.mxu0 0
    %5342 = vmatpush2.bf16.msra.mxu0 0
    %5343 = vmatprep.mubr.bf16.mxu0 0
    %5344 = vmatmul.mubr.bf16.gmra.mxu0 %v5186
    %v5345 = vpop.f32.mrf.mxu0
    %v5346 = vadd.f32 %v5305, %v5345
    %v5347 = vpop.f32.mrf.mxu0
    %v5348 = vadd.f32 %v5307, %v5347
    %v5349 = vpop.f32.mrf.mxu0
    %v5350 = vpop.f32.mrf.mxu0
    %5351 = vdwg.mxu0
    %5352 = vmatprep.subr.bf16.mxu0 %v4551
    %5353 = vmatpush1.bf16.msra.mxu0 %v4550
    %5354 = vmatprep.subr.bf16.mxu0 %v4544
    %5355 = vmatpush1.bf16.msra.mxu0 %v4543
    %5356 = vmatprep.subr.bf16.mxu0 %v4537
    %5357 = vmatpush1.bf16.msra.mxu0 %v4536
    %5358 = vmatprep.subr.bf16.mxu0 %v4530
    %5359 = vmatpush1.bf16.msra.mxu0 %v4529
    %5360 = vmatprep.subr.bf16.mxu0 %v4523
    %5361 = vmatpush1.bf16.msra.mxu0 %v4522
    %5362 = vmatprep.subr.bf16.mxu0 %v4516
    %5363 = vmatpush1.bf16.msra.mxu0 %v4515
    %5364 = vmatprep.subr.bf16.mxu0 %v4509
    %5365 = vmatpush1.bf16.msra.mxu0 %v4508
    %5366 = vmatprep.subr.bf16.mxu0 %v4502
    %5367 = vmatpush1.bf16.msra.mxu0 %v4501
    %5368 = vmatprep.subr.bf16.mxu0 %v4607
    %5369 = vmatpush2.bf16.msra.mxu0 %v4606
    %5370 = vmatprep.subr.bf16.mxu0 %v4600
    %5371 = vmatpush2.bf16.msra.mxu0 %v4599
    %5372 = vmatprep.subr.bf16.mxu0 %v4593
    %5373 = vmatpush2.bf16.msra.mxu0 %v4592
    %5374 = vmatprep.subr.bf16.mxu0 %v4586
    %5375 = vmatpush2.bf16.msra.mxu0 %v4585
    %5376 = vmatprep.subr.bf16.mxu0 %v4579
    %5377 = vmatpush2.bf16.msra.mxu0 %v4578
    %5378 = vmatprep.subr.bf16.mxu0 %v4572
    %5379 = vmatpush2.bf16.msra.mxu0 %v4571
    %5380 = vmatprep.subr.bf16.mxu0 %v4565
    %5381 = vmatpush2.bf16.msra.mxu0 %v4564
    %5382 = vmatprep.subr.bf16.mxu0 %v4558
    %5383 = vmatpush2.bf16.msra.mxu0 %v4557
    %5384 = vmatprep.mubr.bf16.mxu0 %v2986
    %5385 = vmatmul.mubr.bf16.gmra.mxu0 %v2985
    %v5386 = vpop.f32.mrf.mxu0
    %v5387 = vadd.f32 %v3397, %v5386
    %v5388 = vpop.f32.mrf.mxu0
    %v5389 = vadd.f32 %v3401, %v5388
    %v5390 = vpop.f32.mrf.mxu0
    %v5391 = vpop.f32.mrf.mxu0
    %5392 = vdwg.mxu0
    %5393 = vmatprep.subr.bf16.mxu0 %v4663
    %5394 = vmatpush1.bf16.msra.mxu0 %v4662
    %5395 = vmatprep.subr.bf16.mxu0 %v4656
    %5396 = vmatpush1.bf16.msra.mxu0 %v4655
    %5397 = vmatprep.subr.bf16.mxu0 %v4649
    %5398 = vmatpush1.bf16.msra.mxu0 %v4648
    %5399 = vmatprep.subr.bf16.mxu0 %v4642
    %5400 = vmatpush1.bf16.msra.mxu0 %v4641
    %5401 = vmatprep.subr.bf16.mxu0 %v4635
    %5402 = vmatpush1.bf16.msra.mxu0 %v4634
    %5403 = vmatprep.subr.bf16.mxu0 %v4628
    %5404 = vmatpush1.bf16.msra.mxu0 %v4627
    %5405 = vmatprep.subr.bf16.mxu0 %v4621
    %5406 = vmatpush1.bf16.msra.mxu0 %v4620
    %5407 = vmatprep.subr.bf16.mxu0 %v4614
    %5408 = vmatpush1.bf16.msra.mxu0 %v4613
    %5409 = vmatprep.subr.bf16.mxu0 %v4719
    %5410 = vmatpush2.bf16.msra.mxu0 %v4718
    %5411 = vmatprep.subr.bf16.mxu0 %v4712
    %5412 = vmatpush2.bf16.msra.mxu0 %v4711
    %5413 = vmatprep.subr.bf16.mxu0 %v4705
    %5414 = vmatpush2.bf16.msra.mxu0 %v4704
    %5415 = vmatprep.subr.bf16.mxu0 %v4698
    %5416 = vmatpush2.bf16.msra.mxu0 %v4697
    %5417 = vmatprep.subr.bf16.mxu0 %v4691
    %5418 = vmatpush2.bf16.msra.mxu0 %v4690
    %5419 = vmatprep.subr.bf16.mxu0 %v4684
    %5420 = vmatpush2.bf16.msra.mxu0 %v4683
    %5421 = vmatprep.subr.bf16.mxu0 %v4677
    %5422 = vmatpush2.bf16.msra.mxu0 %v4676
    %5423 = vmatprep.subr.bf16.mxu0 %v4670
    %5424 = vmatpush2.bf16.msra.mxu0 %v4669
    %5425 = vmatprep.mubr.bf16.mxu0 %v2988
    %5426 = vmatmul.mubr.bf16.gmra.mxu0 %v2987
    %v5427 = vpop.f32.mrf.mxu0
    %v5428 = vadd.f32 %v5387, %v5427
    %v5429 = vpop.f32.mrf.mxu0
    %v5430 = vadd.f32 %v5389, %v5429
    %v5431 = vpop.f32.mrf.mxu0
    %v5432 = vpop.f32.mrf.mxu0
    %5433 = vdwg.mxu0
    %5434 = vmatprep.subr.bf16.mxu0 %v4775
    %5435 = vmatpush1.bf16.msra.mxu0 %v4774
    %5436 = vmatprep.subr.bf16.mxu0 %v4768
    %5437 = vmatpush1.bf16.msra.mxu0 %v4767
    %5438 = vmatprep.subr.bf16.mxu0 %v4761
    %5439 = vmatpush1.bf16.msra.mxu0 %v4760
    %5440 = vmatprep.subr.bf16.mxu0 %v4754
    %5441 = vmatpush1.bf16.msra.mxu0 %v4753
    %5442 = vmatprep.subr.bf16.mxu0 %v4747
    %5443 = vmatpush1.bf16.msra.mxu0 %v4746
    %5444 = vmatprep.subr.bf16.mxu0 %v4740
    %5445 = vmatpush1.bf16.msra.mxu0 %v4739
    %5446 = vmatprep.subr.bf16.mxu0 %v4733
    %5447 = vmatpush1.bf16.msra.mxu0 %v4732
    %5448 = vmatprep.subr.bf16.mxu0 %v4726
    %5449 = vmatpush1.bf16.msra.mxu0 %v4725
    %5450 = vmatprep.subr.bf16.mxu0 %v4831
    %5451 = vmatpush2.bf16.msra.mxu0 %v4830
    %5452 = vmatprep.subr.bf16.mxu0 %v4824
    %5453 = vmatpush2.bf16.msra.mxu0 %v4823
    %5454 = vmatprep.subr.bf16.mxu0 %v4817
    %5455 = vmatpush2.bf16.msra.mxu0 %v4816
    %5456 = vmatprep.subr.bf16.mxu0 %v4810
    %5457 = vmatpush2.bf16.msra.mxu0 %v4809
    %5458 = vmatprep.subr.bf16.mxu0 %v4803
    %5459 = vmatpush2.bf16.msra.mxu0 %v4802
    %5460 = vmatprep.subr.bf16.mxu0 %v4796
    %5461 = vmatpush2.bf16.msra.mxu0 %v4795
    %5462 = vmatprep.subr.bf16.mxu0 %v4789
    %5463 = vmatpush2.bf16.msra.mxu0 %v4788
    %5464 = vmatprep.subr.bf16.mxu0 %v4782
    %5465 = vmatpush2.bf16.msra.mxu0 %v4781
    %5466 = vmatprep.mubr.bf16.mxu0 %v2990
    %5467 = vmatmul.mubr.bf16.gmra.mxu0 %v2989
    %v5468 = vpop.f32.mrf.mxu0
    %v5469 = vadd.f32 %v5428, %v5468
    %v5470 = vpop.f32.mrf.mxu0
    %v5471 = vadd.f32 %v5430, %v5470
    %v5472 = vpop.f32.mrf.mxu0
    %v5473 = vpop.f32.mrf.mxu0
    %5474 = vdwg.mxu0
    %5475 = vmatprep.subr.bf16.mxu0 0
    %5476 = vmatpush1.bf16.msra.mxu0 0
    %5477 = vmatprep.subr.bf16.mxu0 0
    %5478 = vmatpush1.bf16.msra.mxu0 0
    %5479 = vmatprep.subr.bf16.mxu0 0
    %5480 = vmatpush1.bf16.msra.mxu0 0
    %5481 = vmatprep.subr.bf16.mxu0 0
    %5482 = vmatpush1.bf16.msra.mxu0 0
    %5483 = vmatprep.subr.bf16.mxu0 0
    %5484 = vmatpush1.bf16.msra.mxu0 0
    %5485 = vmatprep.subr.bf16.mxu0 0
    %5486 = vmatpush1.bf16.msra.mxu0 0
    %5487 = vmatprep.subr.bf16.mxu0 0
    %5488 = vmatpush1.bf16.msra.mxu0 0
    %5489 = vmatprep.subr.bf16.mxu0 %v4838
    %5490 = vmatpush1.bf16.msra.mxu0 %v4837
    %5491 = vmatprep.subr.bf16.mxu0 0
    %5492 = vmatpush2.bf16.msra.mxu0 0
    %5493 = vmatprep.subr.bf16.mxu0 0
    %5494 = vmatpush2.bf16.msra.mxu0 0
    %5495 = vmatprep.subr.bf16.mxu0 0
    %5496 = vmatpush2.bf16.msra.mxu0 0
    %5497 = vmatprep.subr.bf16.mxu0 0
    %5498 = vmatpush2.bf16.msra.mxu0 0
    %5499 = vmatprep.subr.bf16.mxu0 0
    %5500 = vmatpush2.bf16.msra.mxu0 0
    %5501 = vmatprep.subr.bf16.mxu0 0
    %5502 = vmatpush2.bf16.msra.mxu0 0
    %5503 = vmatprep.subr.bf16.mxu0 0
    %5504 = vmatpush2.bf16.msra.mxu0 0
    %5505 = vmatprep.subr.bf16.mxu0 0
    %5506 = vmatpush2.bf16.msra.mxu0 0
    %5507 = vmatprep.mubr.bf16.mxu0 0
    %5508 = vmatmul.mubr.bf16.gmra.mxu0 %v5186
    %v5509 = vpop.f32.mrf.mxu0
    %v5510 = vadd.f32 %v5469, %v5509
    %v5511 = vpop.f32.mrf.mxu0
    %v5512 = vadd.f32 %v5471, %v5511
    %v5513 = vpop.f32.mrf.mxu0
    %v5514 = vpop.f32.mrf.mxu0
    %5515 = vdwg.mxu0
    %5516 = vmatprep.subr.bf16.mxu0 %v4553
    %5517 = vmatpush1.bf16.msra.mxu0 %v4552
    %5518 = vmatprep.subr.bf16.mxu0 %v4546
    %5519 = vmatpush1.bf16.msra.mxu0 %v4545
    %5520 = vmatprep.subr.bf16.mxu0 %v4539
    %5521 = vmatpush1.bf16.msra.mxu0 %v4538
    %5522 = vmatprep.subr.bf16.mxu0 %v4532
    %5523 = vmatpush1.bf16.msra.mxu0 %v4531
    %5524 = vmatprep.subr.bf16.mxu0 %v4525
    %5525 = vmatpush1.bf16.msra.mxu0 %v4524
    %5526 = vmatprep.subr.bf16.mxu0 %v4518
    %5527 = vmatpush1.bf16.msra.mxu0 %v4517
    %5528 = vmatprep.subr.bf16.mxu0 %v4511
    %5529 = vmatpush1.bf16.msra.mxu0 %v4510
    %5530 = vmatprep.subr.bf16.mxu0 %v4504
    %5531 = vmatpush1.bf16.msra.mxu0 %v4503
    %5532 = vmatprep.subr.bf16.mxu0 %v4609
    %5533 = vmatpush2.bf16.msra.mxu0 %v4608
    %5534 = vmatprep.subr.bf16.mxu0 %v4602
    %5535 = vmatpush2.bf16.msra.mxu0 %v4601
    %5536 = vmatprep.subr.bf16.mxu0 %v4595
    %5537 = vmatpush2.bf16.msra.mxu0 %v4594
    %5538 = vmatprep.subr.bf16.mxu0 %v4588
    %5539 = vmatpush2.bf16.msra.mxu0 %v4587
    %5540 = vmatprep.subr.bf16.mxu0 %v4581
    %5541 = vmatpush2.bf16.msra.mxu0 %v4580
    %5542 = vmatprep.subr.bf16.mxu0 %v4574
    %5543 = vmatpush2.bf16.msra.mxu0 %v4573
    %5544 = vmatprep.subr.bf16.mxu0 %v4567
    %5545 = vmatpush2.bf16.msra.mxu0 %v4566
    %5546 = vmatprep.subr.bf16.mxu0 %v4560
    %5547 = vmatpush2.bf16.msra.mxu0 %v4559
    %5548 = vmatprep.mubr.bf16.mxu0 %v2986
    %5549 = vmatmul.mubr.bf16.gmra.mxu0 %v2985
    %v5550 = vpop.f32.mrf.mxu0
    %v5551 = vadd.f32 %v3405, %v5550
    %v5552 = vpop.f32.mrf.mxu0
    %v5553 = vadd.f32 %v3409, %v5552
    %v5554 = vpop.f32.mrf.mxu0
    %v5555 = vpop.f32.mrf.mxu0
    %5556 = vdwg.mxu0
    %5557 = vmatprep.subr.bf16.mxu0 %v4665
    %5558 = vmatpush1.bf16.msra.mxu0 %v4664
    %5559 = vmatprep.subr.bf16.mxu0 %v4658
    %5560 = vmatpush1.bf16.msra.mxu0 %v4657
    %5561 = vmatprep.subr.bf16.mxu0 %v4651
    %5562 = vmatpush1.bf16.msra.mxu0 %v4650
    %5563 = vmatprep.subr.bf16.mxu0 %v4644
    %5564 = vmatpush1.bf16.msra.mxu0 %v4643
    %5565 = vmatprep.subr.bf16.mxu0 %v4637
    %5566 = vmatpush1.bf16.msra.mxu0 %v4636
    %5567 = vmatprep.subr.bf16.mxu0 %v4630
    %5568 = vmatpush1.bf16.msra.mxu0 %v4629
    %5569 = vmatprep.subr.bf16.mxu0 %v4623
    %5570 = vmatpush1.bf16.msra.mxu0 %v4622
    %5571 = vmatprep.subr.bf16.mxu0 %v4616
    %5572 = vmatpush1.bf16.msra.mxu0 %v4615
    %5573 = vmatprep.subr.bf16.mxu0 %v4721
    %5574 = vmatpush2.bf16.msra.mxu0 %v4720
    %5575 = vmatprep.subr.bf16.mxu0 %v4714
    %5576 = vmatpush2.bf16.msra.mxu0 %v4713
    %5577 = vmatprep.subr.bf16.mxu0 %v4707
    %5578 = vmatpush2.bf16.msra.mxu0 %v4706
    %5579 = vmatprep.subr.bf16.mxu0 %v4700
    %5580 = vmatpush2.bf16.msra.mxu0 %v4699
    %5581 = vmatprep.subr.bf16.mxu0 %v4693
    %5582 = vmatpush2.bf16.msra.mxu0 %v4692
    %5583 = vmatprep.subr.bf16.mxu0 %v4686
    %5584 = vmatpush2.bf16.msra.mxu0 %v4685
    %5585 = vmatprep.subr.bf16.mxu0 %v4679
    %5586 = vmatpush2.bf16.msra.mxu0 %v4678
    %5587 = vmatprep.subr.bf16.mxu0 %v4672
    %5588 = vmatpush2.bf16.msra.mxu0 %v4671
    %5589 = vmatprep.mubr.bf16.mxu0 %v2988
    %5590 = vmatmul.mubr.bf16.gmra.mxu0 %v2987
    %v5591 = vpop.f32.mrf.mxu0
    %v5592 = vadd.f32 %v5551, %v5591
    %v5593 = vpop.f32.mrf.mxu0
    %v5594 = vadd.f32 %v5553, %v5593
    %v5595 = vpop.f32.mrf.mxu0
    %v5596 = vpop.f32.mrf.mxu0
    %5597 = vdwg.mxu0
    %5598 = vmatprep.subr.bf16.mxu0 %v4777
    %5599 = vmatpush1.bf16.msra.mxu0 %v4776
    %5600 = vmatprep.subr.bf16.mxu0 %v4770
    %5601 = vmatpush1.bf16.msra.mxu0 %v4769
    %5602 = vmatprep.subr.bf16.mxu0 %v4763
    %5603 = vmatpush1.bf16.msra.mxu0 %v4762
    %5604 = vmatprep.subr.bf16.mxu0 %v4756
    %5605 = vmatpush1.bf16.msra.mxu0 %v4755
    %5606 = vmatprep.subr.bf16.mxu0 %v4749
    %5607 = vmatpush1.bf16.msra.mxu0 %v4748
    %5608 = vmatprep.subr.bf16.mxu0 %v4742
    %5609 = vmatpush1.bf16.msra.mxu0 %v4741
    %5610 = vmatprep.subr.bf16.mxu0 %v4735
    %5611 = vmatpush1.bf16.msra.mxu0 %v4734
    %5612 = vmatprep.subr.bf16.mxu0 %v4728
    %5613 = vmatpush1.bf16.msra.mxu0 %v4727
    %5614 = vmatprep.subr.bf16.mxu0 %v4833
    %5615 = vmatpush2.bf16.msra.mxu0 %v4832
    %5616 = vmatprep.subr.bf16.mxu0 %v4826
    %5617 = vmatpush2.bf16.msra.mxu0 %v4825
    %5618 = vmatprep.subr.bf16.mxu0 %v4819
    %5619 = vmatpush2.bf16.msra.mxu0 %v4818
    %5620 = vmatprep.subr.bf16.mxu0 %v4812
    %5621 = vmatpush2.bf16.msra.mxu0 %v4811
    %5622 = vmatprep.subr.bf16.mxu0 %v4805
    %5623 = vmatpush2.bf16.msra.mxu0 %v4804
    %5624 = vmatprep.subr.bf16.mxu0 %v4798
    %5625 = vmatpush2.bf16.msra.mxu0 %v4797
    %5626 = vmatprep.subr.bf16.mxu0 %v4791
    %5627 = vmatpush2.bf16.msra.mxu0 %v4790
    %5628 = vmatprep.subr.bf16.mxu0 %v4784
    %5629 = vmatpush2.bf16.msra.mxu0 %v4783
    %5630 = vmatprep.mubr.bf16.mxu0 %v2990
    %5631 = vmatmul.mubr.bf16.gmra.mxu0 %v2989
    %v5632 = vpop.f32.mrf.mxu0
    %v5633 = vadd.f32 %v5592, %v5632
    %v5634 = vpop.f32.mrf.mxu0
    %v5635 = vadd.f32 %v5594, %v5634
    %v5636 = vpop.f32.mrf.mxu0
    %v5637 = vpop.f32.mrf.mxu0
    %5638 = vdwg.mxu0
    %5639 = vmatprep.subr.bf16.mxu0 0
    %5640 = vmatpush1.bf16.msra.mxu0 0
    %5641 = vmatprep.subr.bf16.mxu0 0
    %5642 = vmatpush1.bf16.msra.mxu0 0
    %5643 = vmatprep.subr.bf16.mxu0 0
    %5644 = vmatpush1.bf16.msra.mxu0 0
    %5645 = vmatprep.subr.bf16.mxu0 0
    %5646 = vmatpush1.bf16.msra.mxu0 0
    %5647 = vmatprep.subr.bf16.mxu0 0
    %5648 = vmatpush1.bf16.msra.mxu0 0
    %5649 = vmatprep.subr.bf16.mxu0 0
    %5650 = vmatpush1.bf16.msra.mxu0 0
    %5651 = vmatprep.subr.bf16.mxu0 0
    %5652 = vmatpush1.bf16.msra.mxu0 0
    %5653 = vmatprep.subr.bf16.mxu0 %v4840
    %5654 = vmatpush1.bf16.msra.mxu0 %v4839
    %5655 = vmatprep.subr.bf16.mxu0 0
    %5656 = vmatpush2.bf16.msra.mxu0 0
    %5657 = vmatprep.subr.bf16.mxu0 0
    %5658 = vmatpush2.bf16.msra.mxu0 0
    %5659 = vmatprep.subr.bf16.mxu0 0
    %5660 = vmatpush2.bf16.msra.mxu0 0
    %5661 = vmatprep.subr.bf16.mxu0 0
    %5662 = vmatpush2.bf16.msra.mxu0 0
    %5663 = vmatprep.subr.bf16.mxu0 0
    %5664 = vmatpush2.bf16.msra.mxu0 0
    %5665 = vmatprep.subr.bf16.mxu0 0
    %5666 = vmatpush2.bf16.msra.mxu0 0
    %5667 = vmatprep.subr.bf16.mxu0 0
    %5668 = vmatpush2.bf16.msra.mxu0 0
    %5669 = vmatprep.subr.bf16.mxu0 0
    %5670 = vmatpush2.bf16.msra.mxu0 0
    %5671 = vmatprep.mubr.bf16.mxu0 0
    %5672 = vmatmul.mubr.bf16.gmra.mxu0 %v5186
    %v5673 = vpop.f32.mrf.mxu0
    %v5674 = vadd.f32 %v5633, %v5673
    %v5675 = vpop.f32.mrf.mxu0
    %v5676 = vadd.f32 %v5635, %v5675
    %v5677 = vpop.f32.mrf.mxu0
    %v5678 = vpop.f32.mrf.mxu0
    %5679 = vdwg.mxu0
    %5680 = vmatprep.subr.bf16.mxu0 0
    %5681 = vmatpush1.bf16.msra.mxu0 %v4554
    %5682 = vmatprep.subr.bf16.mxu0 0
    %5683 = vmatpush1.bf16.msra.mxu0 %v4547
    %5684 = vmatprep.subr.bf16.mxu0 0
    %5685 = vmatpush1.bf16.msra.mxu0 %v4540
    %5686 = vmatprep.subr.bf16.mxu0 0
    %5687 = vmatpush1.bf16.msra.mxu0 %v4533
    %5688 = vmatprep.subr.bf16.mxu0 0
    %5689 = vmatpush1.bf16.msra.mxu0 %v4526
    %5690 = vmatprep.subr.bf16.mxu0 0
    %5691 = vmatpush1.bf16.msra.mxu0 %v4519
    %5692 = vmatprep.subr.bf16.mxu0 0
    %5693 = vmatpush1.bf16.msra.mxu0 %v4512
    %5694 = vmatprep.subr.bf16.mxu0 0
    %5695 = vmatpush1.bf16.msra.mxu0 %v4505
    %5696 = vmatprep.subr.bf16.mxu0 0
    %5697 = vmatpush2.bf16.msra.mxu0 %v4610
    %5698 = vmatprep.subr.bf16.mxu0 0
    %5699 = vmatpush2.bf16.msra.mxu0 %v4603
    %5700 = vmatprep.subr.bf16.mxu0 0
    %5701 = vmatpush2.bf16.msra.mxu0 %v4596
    %5702 = vmatprep.subr.bf16.mxu0 0
    %5703 = vmatpush2.bf16.msra.mxu0 %v4589
    %5704 = vmatprep.subr.bf16.mxu0 0
    %5705 = vmatpush2.bf16.msra.mxu0 %v4582
    %5706 = vmatprep.subr.bf16.mxu0 0
    %5707 = vmatpush2.bf16.msra.mxu0 %v4575
    %5708 = vmatprep.subr.bf16.mxu0 0
    %5709 = vmatpush2.bf16.msra.mxu0 %v4568
    %5710 = vmatprep.subr.bf16.mxu0 0
    %5711 = vmatpush2.bf16.msra.mxu0 %v4561
    %5712 = vmatprep.mubr.bf16.mxu0 %v2986
    %5713 = vmatmul.mubr.bf16.gmra.mxu0 %v2985
    %v5714 = vpop.f32.mrf.mxu0
    %v5715 = vadd.f32 %v3413, %v5714
    %v5716 = vpop.f32.mrf.mxu0
    %v5717 = vpop.f32.mrf.mxu0
    %v5718 = vpop.f32.mrf.mxu0
    %5719 = vdwg.mxu0
    %5720 = vmatprep.subr.bf16.mxu0 0
    %5721 = vmatpush1.bf16.msra.mxu0 %v4666
    %5722 = vmatprep.subr.bf16.mxu0 0
    %5723 = vmatpush1.bf16.msra.mxu0 %v4659
    %5724 = vmatprep.subr.bf16.mxu0 0
    %5725 = vmatpush1.bf16.msra.mxu0 %v4652
    %5726 = vmatprep.subr.bf16.mxu0 0
    %5727 = vmatpush1.bf16.msra.mxu0 %v4645
    %5728 = vmatprep.subr.bf16.mxu0 0
    %5729 = vmatpush1.bf16.msra.mxu0 %v4638
    %5730 = vmatprep.subr.bf16.mxu0 0
    %5731 = vmatpush1.bf16.msra.mxu0 %v4631
    %5732 = vmatprep.subr.bf16.mxu0 0
    %5733 = vmatpush1.bf16.msra.mxu0 %v4624
    %5734 = vmatprep.subr.bf16.mxu0 0
    %5735 = vmatpush1.bf16.msra.mxu0 %v4617
    %5736 = vmatprep.subr.bf16.mxu0 0
    %5737 = vmatpush2.bf16.msra.mxu0 %v4722
    %5738 = vmatprep.subr.bf16.mxu0 0
    %5739 = vmatpush2.bf16.msra.mxu0 %v4715
    %5740 = vmatprep.subr.bf16.mxu0 0
    %5741 = vmatpush2.bf16.msra.mxu0 %v4708
    %5742 = vmatprep.subr.bf16.mxu0 0
    %5743 = vmatpush2.bf16.msra.mxu0 %v4701
    %5744 = vmatprep.subr.bf16.mxu0 0
    %5745 = vmatpush2.bf16.msra.mxu0 %v4694
    %5746 = vmatprep.subr.bf16.mxu0 0
    %5747 = vmatpush2.bf16.msra.mxu0 %v4687
    %5748 = vmatprep.subr.bf16.mxu0 0
    %5749 = vmatpush2.bf16.msra.mxu0 %v4680
    %5750 = vmatprep.subr.bf16.mxu0 0
    %5751 = vmatpush2.bf16.msra.mxu0 %v4673
    %5752 = vmatprep.mubr.bf16.mxu0 %v2988
    %5753 = vmatmul.mubr.bf16.gmra.mxu0 %v2987
    %v5754 = vpop.f32.mrf.mxu0
    %v5755 = vadd.f32 %v5715, %v5754
    %v5756 = vpop.f32.mrf.mxu0
    %v5757 = vpop.f32.mrf.mxu0
    %v5758 = vpop.f32.mrf.mxu0
    %5759 = vdwg.mxu0
    %5760 = vmatprep.subr.bf16.mxu0 0
    %5761 = vmatpush1.bf16.msra.mxu0 %v4778
    %5762 = vmatprep.subr.bf16.mxu0 0
    %5763 = vmatpush1.bf16.msra.mxu0 %v4771
    %5764 = vmatprep.subr.bf16.mxu0 0
    %5765 = vmatpush1.bf16.msra.mxu0 %v4764
    %5766 = vmatprep.subr.bf16.mxu0 0
    %5767 = vmatpush1.bf16.msra.mxu0 %v4757
    %5768 = vmatprep.subr.bf16.mxu0 0
    %5769 = vmatpush1.bf16.msra.mxu0 %v4750
    %5770 = vmatprep.subr.bf16.mxu0 0
    %5771 = vmatpush1.bf16.msra.mxu0 %v4743
    %5772 = vmatprep.subr.bf16.mxu0 0
    %5773 = vmatpush1.bf16.msra.mxu0 %v4736
    %5774 = vmatprep.subr.bf16.mxu0 0
    %5775 = vmatpush1.bf16.msra.mxu0 %v4729
    %5776 = vmatprep.subr.bf16.mxu0 0
    %5777 = vmatpush2.bf16.msra.mxu0 %v4834
    %5778 = vmatprep.subr.bf16.mxu0 0
    %5779 = vmatpush2.bf16.msra.mxu0 %v4827
    %5780 = vmatprep.subr.bf16.mxu0 0
    %5781 = vmatpush2.bf16.msra.mxu0 %v4820
    %5782 = vmatprep.subr.bf16.mxu0 0
    %5783 = vmatpush2.bf16.msra.mxu0 %v4813
    %5784 = vmatprep.subr.bf16.mxu0 0
    %5785 = vmatpush2.bf16.msra.mxu0 %v4806
    %5786 = vmatprep.subr.bf16.mxu0 0
    %5787 = vmatpush2.bf16.msra.mxu0 %v4799
    %5788 = vmatprep.subr.bf16.mxu0 0
    %5789 = vmatpush2.bf16.msra.mxu0 %v4792
    %5790 = vmatprep.subr.bf16.mxu0 0
    %5791 = vmatpush2.bf16.msra.mxu0 %v4785
    %5792 = vmatprep.mubr.bf16.mxu0 %v2990
    %5793 = vmatmul.mubr.bf16.gmra.mxu0 %v2989
    %v5794 = vpop.f32.mrf.mxu0
    %v5795 = vadd.f32 %v5755, %v5794
    %v5796 = vpop.f32.mrf.mxu0
    %v5797 = vpop.f32.mrf.mxu0
    %v5798 = vpop.f32.mrf.mxu0
    %5799 = vdwg.mxu0
    %5800 = vmatprep.subr.bf16.mxu0 0
    %5801 = vmatpush1.bf16.msra.mxu0 0
    %5802 = vmatprep.subr.bf16.mxu0 0
    %5803 = vmatpush1.bf16.msra.mxu0 0
    %5804 = vmatprep.subr.bf16.mxu0 0
    %5805 = vmatpush1.bf16.msra.mxu0 0
    %5806 = vmatprep.subr.bf16.mxu0 0
    %5807 = vmatpush1.bf16.msra.mxu0 0
    %5808 = vmatprep.subr.bf16.mxu0 0
    %5809 = vmatpush1.bf16.msra.mxu0 0
    %5810 = vmatprep.subr.bf16.mxu0 0
    %5811 = vmatpush1.bf16.msra.mxu0 0
    %5812 = vmatprep.subr.bf16.mxu0 0
    %5813 = vmatpush1.bf16.msra.mxu0 0
    %5814 = vmatprep.subr.bf16.mxu0 0
    %5815 = vmatpush1.bf16.msra.mxu0 %v4841
    %5816 = vmatprep.subr.bf16.mxu0 0
    %5817 = vmatpush2.bf16.msra.mxu0 0
    %5818 = vmatprep.subr.bf16.mxu0 0
    %5819 = vmatpush2.bf16.msra.mxu0 0
    %5820 = vmatprep.subr.bf16.mxu0 0
    %5821 = vmatpush2.bf16.msra.mxu0 0
    %5822 = vmatprep.subr.bf16.mxu0 0
    %5823 = vmatpush2.bf16.msra.mxu0 0
    %5824 = vmatprep.subr.bf16.mxu0 0
    %5825 = vmatpush2.bf16.msra.mxu0 0
    %5826 = vmatprep.subr.bf16.mxu0 0
    %5827 = vmatpush2.bf16.msra.mxu0 0
    %5828 = vmatprep.subr.bf16.mxu0 0
    %5829 = vmatpush2.bf16.msra.mxu0 0
    %5830 = vmatprep.subr.bf16.mxu0 0
    %5831 = vmatpush2.bf16.msra.mxu0 0
    %5832 = vmatprep.mubr.bf16.mxu0 0
    %5833 = vmatmul.mubr.bf16.gmra.mxu0 %v5186
    %v5834 = vpop.f32.mrf.mxu0
    %v5835 = vadd.f32 %v5795, %v5834
    %v5836 = vpop.f32.mrf.mxu0
    %v5837 = vpop.f32.mrf.mxu0
    %v5838 = vpop.f32.mrf.mxu0
    %5839 = vdwg.mxu0
    %v5840 = vadd.f32 %v5346, %v115
    %v5841 = vadd.f32 %v5348, %v116
    %v5842 = vadd.f32 %v5510, %v117
    %v5843 = vadd.f32 %v5512, %v118
    %v5844 = vadd.f32 %v5674, %v119
    %v5845 = vadd.f32 %v5676, %v120
    %v5846 = vadd.f32 %v5835, %v121
    %v5847 = vmax.f32 %v5840, 0.0
    %v5848 = vmax.f32 %v5841, 0.0
    %v5849 = vmax.f32 %v5842, 0.0
    %v5850 = vmax.f32 %v5843, 0.0
    %v5851 = vmax.f32 %v5844, 0.0
    %v5852 = vmax.f32 %v5845, 0.0
    %v5853 = vmax.f32 %v5846, 0.0
    %v5854 = vpack.c.bf16 %v5847, %v5847
    %v5855 = vpack.c.bf16 %v5848, %v5848
    %v5856 = vpack.c.bf16 %v5849, %v5849
    %v5857 = vpack.c.bf16 %v5850, %v5850
    %v5858 = vpack.c.bf16 %v5851, %v5851
    %v5859 = vpack.c.bf16 %v5852, %v5852
    %v5860 = vpack.c.bf16 %v5853, %v5853
    %v5861 = vld [vmem:[#allocation11] sm:$0xf]
    %v5862 = vld [vmem:[#allocation11 + $0x4] sm:$0xf]
    %v5863 = vld [vmem:[#allocation11 + $0x8] sm:$0xf]
    %v5864 = vld [vmem:[#allocation11 + $0xc] sm:$0xf]
    %v5865 = vld [vmem:[#allocation11 + $0x10] sm:$0xf]
    %v5866 = vld [vmem:[#allocation11 + $0x14] sm:$0xf]
    %v5867 = vld [vmem:[#allocation11 + $0x18] sm:$0xf]
    %v5868 = vld [vmem:[#allocation11 + $0x1c] sm:$0xf]
    %v5869 = vld [vmem:[#allocation11 + $0x20] sm:$0xf]
    %v5870 = vld [vmem:[#allocation11 + $0x24] sm:$0xf]
    %v5871 = vld [vmem:[#allocation11 + $0x28] sm:$0xf]
    %v5872 = vld [vmem:[#allocation11 + $0x2c] sm:$0xf]
    %v5873 = vld [vmem:[#allocation11 + $0x30] sm:$0xf]
    %v5874 = vld [vmem:[#allocation11 + $0x34] sm:$0xf]
    %v5875 = vld [vmem:[#allocation11 + $0x38] sm:$0xf]
    %v5876 = vld [vmem:[#allocation11 + $0x3c] sm:$0xf]
    %v5877 = vld [vmem:[#allocation11 + $0x40] sm:$0xf]
    %v5878 = vld [vmem:[#allocation11 + $0x44] sm:$0xf]
    %v5879 = vld [vmem:[#allocation11 + $0x48] sm:$0xf]
    %v5880 = vld [vmem:[#allocation11 + $0x4c] sm:$0xf]
    %v5881 = vld [vmem:[#allocation11 + $0x50] sm:$0xf]
    %v5882 = vld [vmem:[#allocation11 + $0x54] sm:$0xf]
    %v5883 = vld [vmem:[#allocation11 + $0x58] sm:$0xf]
    %v5884 = vld [vmem:[#allocation11 + $0x5c] sm:$0xf]
    %v5885 = vld [vmem:[#allocation11 + $0x60] sm:$0xf]
    %v5886 = vld [vmem:[#allocation11 + $0x64] sm:$0xf]
    %v5887 = vld [vmem:[#allocation11 + $0x68] sm:$0xf]
    %v5888 = vld [vmem:[#allocation11 + $0x6c] sm:$0xf]
    %v5889 = vld [vmem:[#allocation11 + $0x70] sm:$0xf]
    %v5890 = vld [vmem:[#allocation11 + $0x74] sm:$0xf]
    %v5891 = vld [vmem:[#allocation11 + $0x78] sm:$0xf]
    %v5892 = vld [vmem:[#allocation11 + $0x7c] sm:$0xf]
    %v5893 = vld [vmem:[#allocation11 + $0x80] sm:$0xf]
    %v5894 = vld [vmem:[#allocation11 + $0x84] sm:$0xf]
    %v5895 = vld [vmem:[#allocation11 + $0x88] sm:$0xf]
    %v5896 = vld [vmem:[#allocation11 + $0x8c] sm:$0xf]
    %v5897 = vld [vmem:[#allocation11 + $0x90] sm:$0xf]
    %v5898 = vld [vmem:[#allocation11 + $0x94] sm:$0xf]
    %v5899 = vld [vmem:[#allocation11 + $0x98] sm:$0xf]
    %v5900 = vld [vmem:[#allocation11 + $0x9c] sm:$0xf]
    %v5901 = vld [vmem:[#allocation11 + $0xa0] sm:$0xf]
    %v5902 = vld [vmem:[#allocation11 + $0xa4] sm:$0xf]
    %v5903 = vld [vmem:[#allocation11 + $0xa8] sm:$0xf]
    %v5904 = vld [vmem:[#allocation11 + $0xac] sm:$0xf]
    %v5905 = vld [vmem:[#allocation11 + $0xb0] sm:$0xf]
    %v5906 = vld [vmem:[#allocation11 + $0xb4] sm:$0xf]
    %v5907 = vld [vmem:[#allocation11 + $0xb8] sm:$0xf]
    %v5908 = vld [vmem:[#allocation11 + $0xbc] sm:$0xf]
    %v5909 = vld [vmem:[#allocation11 + $0xc0] sm:$0xf]
    %v5910 = vld [vmem:[#allocation11 + $0xc4] sm:$0xf]
    %v5911 = vld [vmem:[#allocation11 + $0xc8] sm:$0xf]
    %v5912 = vld [vmem:[#allocation11 + $0xcc] sm:$0xf]
    %v5913 = vld [vmem:[#allocation11 + $0xd0] sm:$0xf]
    %v5914 = vld [vmem:[#allocation11 + $0xd4] sm:$0xf]
    %v5915 = vld [vmem:[#allocation11 + $0xd8] sm:$0xf]
    %v5916 = vld [vmem:[#allocation11 + $0xdc] sm:$0xf]
    %v5917 = vld [vmem:[#allocation11 + $0xe0] sm:$0xf]
    %v5918 = vld [vmem:[#allocation11 + $0xe4] sm:$0xf]
    %v5919 = vld [vmem:[#allocation11 + $0xe8] sm:$0xf]
    %v5920 = vld [vmem:[#allocation11 + $0xec] sm:$0xf]
    %v5921 = vld [vmem:[#allocation11 + $0xf0] sm:$0xf]
    %v5922 = vld [vmem:[#allocation11 + $0xf4] sm:$0xf]
    %v5923 = vld [vmem:[#allocation11 + $0xf8] sm:$0xf]
    %v5924 = vld [vmem:[#allocation11 + $0xfc] sm:$0xf]
    %v5925 = vld [vmem:[#allocation11 + $0x100] sm:$0xf]
    %v5926 = vld [vmem:[#allocation11 + $0x104] sm:$0xf]
    %v5927 = vld [vmem:[#allocation11 + $0x108] sm:$0xf]
    %v5928 = vld [vmem:[#allocation11 + $0x10c] sm:$0xf]
    %v5929 = vld [vmem:[#allocation11 + $0x110] sm:$0xf]
    %v5930 = vld [vmem:[#allocation11 + $0x114] sm:$0xf]
    %v5931 = vld [vmem:[#allocation11 + $0x118] sm:$0xf]
    %v5932 = vld [vmem:[#allocation11 + $0x11c] sm:$0xf]
    %v5933 = vld [vmem:[#allocation11 + $0x120] sm:$0xf]
    %v5934 = vld [vmem:[#allocation11 + $0x124] sm:$0xf]
    %v5935 = vld [vmem:[#allocation11 + $0x128] sm:$0xf]
    %v5936 = vld [vmem:[#allocation11 + $0x12c] sm:$0xf]
    %v5937 = vld [vmem:[#allocation11 + $0x130] sm:$0xf]
    %v5938 = vld [vmem:[#allocation11 + $0x134] sm:$0xf]
    %v5939 = vld [vmem:[#allocation11 + $0x138] sm:$0xf]
    %v5940 = vld [vmem:[#allocation11 + $0x13c] sm:$0xf]
    %v5941 = vld [vmem:[#allocation11 + $0x140] sm:$0xf]
    %v5942 = vld [vmem:[#allocation11 + $0x144] sm:$0xf]
    %v5943 = vld [vmem:[#allocation11 + $0x148] sm:$0xf]
    %v5944 = vld [vmem:[#allocation11 + $0x14c] sm:$0xf]
    %v5945 = vld [vmem:[#allocation11 + $0x150] sm:$0xf]
    %v5946 = vld [vmem:[#allocation11 + $0x154] sm:$0xf]
    %v5947 = vld [vmem:[#allocation11 + $0x158] sm:$0xf]
    %v5948 = vld [vmem:[#allocation11 + $0x15c] sm:$0xf]
    %v5949 = vld [vmem:[#allocation11 + $0x160] sm:$0xf]
    %v5950 = vld [vmem:[#allocation11 + $0x164] sm:$0xf]
    %v5951 = vld [vmem:[#allocation11 + $0x168] sm:$0xf]
    %v5952 = vld [vmem:[#allocation11 + $0x16c] sm:$0xf]
    %v5953 = vld [vmem:[#allocation11 + $0x170] sm:$0xf]
    %v5954 = vld [vmem:[#allocation11 + $0x174] sm:$0xf]
    %v5955 = vld [vmem:[#allocation11 + $0x178] sm:$0xf]
    %v5956 = vld [vmem:[#allocation11 + $0x17c] sm:$0xf]
    %v5957 = vld [vmem:[#allocation11 + $0x180] sm:$0xf]
    %v5958 = vld [vmem:[#allocation11 + $0x184] sm:$0xf]
    %v5959 = vld [vmem:[#allocation13] sm:$0x1]
    %v5961 = vlaneseq
    %v5962 = vshrl.u32 %v5961, 7
    %v5963 = vsub.s32 0, %v5962
    %v5964 = vrot.slane %v5959, %v5963
    %v6064 = vunpack.c.l.b16 %v5861
    %v6065 = vunpack.c.l.b16 %v5862
    %v6066 = vunpack.c.l.b16 %v5863
    %v6067 = vunpack.c.l.b16 %v5864
    %v6068 = vunpack.c.l.b16 %v5865
    %v6069 = vunpack.c.l.b16 %v5866
    %v6070 = vunpack.c.l.b16 %v5867
    %v6071 = vunpack.c.l.b16 %v5868
    %v6072 = vunpack.c.l.b16 %v5869
    %v6073 = vunpack.c.l.b16 %v5870
    %v6074 = vunpack.c.l.b16 %v5871
    %v6075 = vunpack.c.l.b16 %v5872
    %v6076 = vunpack.c.l.b16 %v5873
    %v6077 = vunpack.c.l.b16 %v5874
    %v6078 = vunpack.c.l.b16 %v5875
    %v6079 = vunpack.c.l.b16 %v5876
    %v6080 = vunpack.c.l.b16 %v5877
    %v6081 = vunpack.c.l.b16 %v5878
    %v6082 = vunpack.c.l.b16 %v5879
    %v6083 = vunpack.c.l.b16 %v5880
    %v6084 = vunpack.c.l.b16 %v5881
    %v6085 = vunpack.c.l.b16 %v5882
    %v6086 = vunpack.c.l.b16 %v5883
    %v6087 = vunpack.c.l.b16 %v5884
    %v6088 = vunpack.c.l.b16 %v5885
    %v6089 = vunpack.c.l.b16 %v5886
    %v6090 = vunpack.c.l.b16 %v5887
    %v6091 = vunpack.c.l.b16 %v5888
    %v6092 = vunpack.c.l.b16 %v5889
    %v6093 = vunpack.c.l.b16 %v5890
    %v6094 = vunpack.c.l.b16 %v5891
    %v6095 = vunpack.c.l.b16 %v5892
    %v6096 = vunpack.c.l.b16 %v5893
    %v6097 = vunpack.c.l.b16 %v5894
    %v6098 = vunpack.c.l.b16 %v5895
    %v6099 = vunpack.c.l.b16 %v5896
    %v6100 = vunpack.c.l.b16 %v5897
    %v6101 = vunpack.c.l.b16 %v5898
    %v6102 = vunpack.c.l.b16 %v5899
    %v6103 = vunpack.c.l.b16 %v5900
    %v6104 = vunpack.c.l.b16 %v5901
    %v6105 = vunpack.c.l.b16 %v5902
    %v6106 = vunpack.c.l.b16 %v5903
    %v6107 = vunpack.c.l.b16 %v5904
    %v6108 = vunpack.c.l.b16 %v5905
    %v6109 = vunpack.c.l.b16 %v5906
    %v6110 = vunpack.c.l.b16 %v5907
    %v6111 = vunpack.c.l.b16 %v5908
    %v6112 = vunpack.c.l.b16 %v5909
    %v6113 = vunpack.c.l.b16 %v5910
    %v6114 = vunpack.c.l.b16 %v5911
    %v6115 = vunpack.c.l.b16 %v5912
    %v6116 = vunpack.c.l.b16 %v5913
    %v6117 = vunpack.c.l.b16 %v5914
    %v6118 = vunpack.c.l.b16 %v5915
    %v6119 = vunpack.c.l.b16 %v5916
    %v6120 = vunpack.c.l.b16 %v5917
    %v6121 = vunpack.c.l.b16 %v5918
    %v6122 = vunpack.c.l.b16 %v5919
    %v6123 = vunpack.c.l.b16 %v5920
    %v6124 = vunpack.c.l.b16 %v5921
    %v6125 = vunpack.c.l.b16 %v5922
    %v6126 = vunpack.c.l.b16 %v5923
    %v6127 = vunpack.c.l.b16 %v5924
    %v6128 = vunpack.c.l.b16 %v5925
    %v6129 = vunpack.c.l.b16 %v5926
    %v6130 = vunpack.c.l.b16 %v5927
    %v6131 = vunpack.c.l.b16 %v5928
    %v6132 = vunpack.c.l.b16 %v5929
    %v6133 = vunpack.c.l.b16 %v5930
    %v6134 = vunpack.c.l.b16 %v5931
    %v6135 = vunpack.c.l.b16 %v5932
    %v6136 = vunpack.c.l.b16 %v5933
    %v6137 = vunpack.c.l.b16 %v5934
    %v6138 = vunpack.c.l.b16 %v5935
    %v6139 = vunpack.c.l.b16 %v5936
    %v6140 = vunpack.c.l.b16 %v5937
    %v6141 = vunpack.c.l.b16 %v5938
    %v6142 = vunpack.c.l.b16 %v5939
    %v6143 = vunpack.c.l.b16 %v5940
    %v6144 = vunpack.c.l.b16 %v5941
    %v6145 = vunpack.c.l.b16 %v5942
    %v6146 = vunpack.c.l.b16 %v5943
    %v6147 = vunpack.c.l.b16 %v5944
    %v6148 = vunpack.c.l.b16 %v5945
    %v6149 = vunpack.c.l.b16 %v5946
    %v6150 = vunpack.c.l.b16 %v5947
    %v6151 = vunpack.c.l.b16 %v5948
    %v6152 = vunpack.c.l.b16 %v5949
    %v6153 = vunpack.c.l.b16 %v5950
    %v6154 = vunpack.c.l.b16 %v5951
    %v6155 = vunpack.c.l.b16 %v5952
    %v6156 = vunpack.c.l.b16 %v5953
    %v6157 = vunpack.c.l.b16 %v5954
    %v6158 = vunpack.c.l.b16 %v5955
    %v6159 = vunpack.c.l.b16 %v5956
    %v6160 = vunpack.c.l.b16 %v5957
    %v6161 = vunpack.c.l.b16 %v5958
    %v6162 = vpack.c.b16 %v6065, %v6064
    %v6163 = vpack.c.b16 %v6067, %v6066
    %v6164 = vpack.c.b16 %v6069, %v6068
    %v6165 = vpack.c.b16 %v6071, %v6070
    %v6166 = vpack.c.b16 %v6073, %v6072
    %v6167 = vpack.c.b16 %v6075, %v6074
    %v6168 = vpack.c.b16 %v6077, %v6076
    %v6169 = vpack.c.b16 %v6079, %v6078
    %v6170 = vpack.c.b16 %v6081, %v6080
    %v6171 = vpack.c.b16 %v6083, %v6082
    %v6172 = vpack.c.b16 %v6085, %v6084
    %v6173 = vpack.c.b16 %v6087, %v6086
    %v6174 = vpack.c.b16 %v6089, %v6088
    %v6175 = vpack.c.b16 %v6091, %v6090
    %v6176 = vpack.c.b16 %v6093, %v6092
    %v6177 = vpack.c.b16 %v6095, %v6094
    %v6178 = vpack.c.b16 %v6097, %v6096
    %v6179 = vpack.c.b16 %v6099, %v6098
    %v6180 = vpack.c.b16 %v6101, %v6100
    %v6181 = vpack.c.b16 %v6103, %v6102
    %v6182 = vpack.c.b16 %v6105, %v6104
    %v6183 = vpack.c.b16 %v6107, %v6106
    %v6184 = vpack.c.b16 %v6109, %v6108
    %v6185 = vpack.c.b16 %v6111, %v6110
    %v6186 = vpack.c.b16 %v6113, %v6112
    %v6187 = vpack.c.b16 %v6115, %v6114
    %v6188 = vpack.c.b16 %v6117, %v6116
    %v6189 = vpack.c.b16 %v6119, %v6118
    %v6190 = vpack.c.b16 %v6121, %v6120
    %v6191 = vpack.c.b16 %v6123, %v6122
    %v6192 = vpack.c.b16 %v6125, %v6124
    %v6193 = vpack.c.b16 %v6127, %v6126
    %v6194 = vpack.c.b16 %v6129, %v6128
    %v6195 = vpack.c.b16 %v6131, %v6130
    %v6196 = vpack.c.b16 %v6133, %v6132
    %v6197 = vpack.c.b16 %v6135, %v6134
    %v6198 = vpack.c.b16 %v6137, %v6136
    %v6199 = vpack.c.b16 %v6139, %v6138
    %v6200 = vpack.c.b16 %v6141, %v6140
    %v6201 = vpack.c.b16 %v6143, %v6142
    %v6202 = vpack.c.b16 %v6145, %v6144
    %v6203 = vpack.c.b16 %v6147, %v6146
    %v6204 = vpack.c.b16 %v6149, %v6148
    %v6205 = vpack.c.b16 %v6151, %v6150
    %v6206 = vpack.c.b16 %v6153, %v6152
    %v6207 = vpack.c.b16 %v6155, %v6154
    %v6208 = vpack.c.b16 %v6157, %v6156
    %v6209 = vpack.c.b16 %v6159, %v6158
    %v6210 = vpack.c.b16 %v6161, %v6160
    %v6261 = vsel %vm2322, %v5860, 0
    %6263 = vmatprep.subr.bf16.mxu0 0
    %6264 = vmatpush1.bf16.msra.mxu0 %v6169
    %6265 = vmatprep.subr.bf16.mxu0 0
    %6266 = vmatpush1.bf16.msra.mxu0 %v6168
    %6267 = vmatprep.subr.bf16.mxu0 0
    %6268 = vmatpush1.bf16.msra.mxu0 %v6167
    %6269 = vmatprep.subr.bf16.mxu0 0
    %6270 = vmatpush1.bf16.msra.mxu0 %v6166
    %6271 = vmatprep.subr.bf16.mxu0 0
    %6272 = vmatpush1.bf16.msra.mxu0 %v6165
    %6273 = vmatprep.subr.bf16.mxu0 0
    %6274 = vmatpush1.bf16.msra.mxu0 %v6164
    %6275 = vmatprep.subr.bf16.mxu0 0
    %6276 = vmatpush1.bf16.msra.mxu0 %v6163
    %6277 = vmatprep.subr.bf16.mxu0 0
    %6278 = vmatpush1.bf16.msra.mxu0 %v6162
    %6279 = vmatprep.subr.bf16.mxu0 0
    %6280 = vmatpush2.bf16.msra.mxu0 %v6177
    %6281 = vmatprep.subr.bf16.mxu0 0
    %6282 = vmatpush2.bf16.msra.mxu0 %v6176
    %6283 = vmatprep.subr.bf16.mxu0 0
    %6284 = vmatpush2.bf16.msra.mxu0 %v6175
    %6285 = vmatprep.subr.bf16.mxu0 0
    %6286 = vmatpush2.bf16.msra.mxu0 %v6174
    %6287 = vmatprep.subr.bf16.mxu0 0
    %6288 = vmatpush2.bf16.msra.mxu0 %v6173
    %6289 = vmatprep.subr.bf16.mxu0 0
    %6290 = vmatpush2.bf16.msra.mxu0 %v6172
    %6291 = vmatprep.subr.bf16.mxu0 0
    %6292 = vmatpush2.bf16.msra.mxu0 %v6171
    %6293 = vmatprep.subr.bf16.mxu0 0
    %6294 = vmatpush2.bf16.msra.mxu0 %v6170
    %6295 = vmatprep.mubr.bf16.mxu0 %v5855
    %6296 = vmatmul.mubr.bf16.gmra.mxu0 %v5854
    %v6297 = vpop.f32.mrf.mxu0
    %v6298 = vadd.f32 %v5964, %v6297
    %v6299 = vpop.f32.mrf.mxu0
    %v6300 = vpop.f32.mrf.mxu0
    %v6301 = vpop.f32.mrf.mxu0
    %6302 = vdwg.mxu0
    %6303 = vmatprep.subr.bf16.mxu0 0
    %6304 = vmatpush1.bf16.msra.mxu0 %v6185
    %6305 = vmatprep.subr.bf16.mxu0 0
    %6306 = vmatpush1.bf16.msra.mxu0 %v6184
    %6307 = vmatprep.subr.bf16.mxu0 0
    %6308 = vmatpush1.bf16.msra.mxu0 %v6183
    %6309 = vmatprep.subr.bf16.mxu0 0
    %6310 = vmatpush1.bf16.msra.mxu0 %v6182
    %6311 = vmatprep.subr.bf16.mxu0 0
    %6312 = vmatpush1.bf16.msra.mxu0 %v6181
    %6313 = vmatprep.subr.bf16.mxu0 0
    %6314 = vmatpush1.bf16.msra.mxu0 %v6180
    %6315 = vmatprep.subr.bf16.mxu0 0
    %6316 = vmatpush1.bf16.msra.mxu0 %v6179
    %6317 = vmatprep.subr.bf16.mxu0 0
    %6318 = vmatpush1.bf16.msra.mxu0 %v6178
    %6319 = vmatprep.subr.bf16.mxu0 0
    %6320 = vmatpush2.bf16.msra.mxu0 %v6193
    %6321 = vmatprep.subr.bf16.mxu0 0
    %6322 = vmatpush2.bf16.msra.mxu0 %v6192
    %6323 = vmatprep.subr.bf16.mxu0 0
    %6324 = vmatpush2.bf16.msra.mxu0 %v6191
    %6325 = vmatprep.subr.bf16.mxu0 0
    %6326 = vmatpush2.bf16.msra.mxu0 %v6190
    %6327 = vmatprep.subr.bf16.mxu0 0
    %6328 = vmatpush2.bf16.msra.mxu0 %v6189
    %6329 = vmatprep.subr.bf16.mxu0 0
    %6330 = vmatpush2.bf16.msra.mxu0 %v6188
    %6331 = vmatprep.subr.bf16.mxu0 0
    %6332 = vmatpush2.bf16.msra.mxu0 %v6187
    %6333 = vmatprep.subr.bf16.mxu0 0
    %6334 = vmatpush2.bf16.msra.mxu0 %v6186
    %6335 = vmatprep.mubr.bf16.mxu0 %v5857
    %6336 = vmatmul.mubr.bf16.gmra.mxu0 %v5856
    %v6337 = vpop.f32.mrf.mxu0
    %v6338 = vadd.f32 %v6298, %v6337
    %v6339 = vpop.f32.mrf.mxu0
    %v6340 = vpop.f32.mrf.mxu0
    %v6341 = vpop.f32.mrf.mxu0
    %6342 = vdwg.mxu0
    %6343 = vmatprep.subr.bf16.mxu0 0
    %6344 = vmatpush1.bf16.msra.mxu0 %v6201
    %6345 = vmatprep.subr.bf16.mxu0 0
    %6346 = vmatpush1.bf16.msra.mxu0 %v6200
    %6347 = vmatprep.subr.bf16.mxu0 0
    %6348 = vmatpush1.bf16.msra.mxu0 %v6199
    %6349 = vmatprep.subr.bf16.mxu0 0
    %6350 = vmatpush1.bf16.msra.mxu0 %v6198
    %6351 = vmatprep.subr.bf16.mxu0 0
    %6352 = vmatpush1.bf16.msra.mxu0 %v6197
    %6353 = vmatprep.subr.bf16.mxu0 0
    %6354 = vmatpush1.bf16.msra.mxu0 %v6196
    %6355 = vmatprep.subr.bf16.mxu0 0
    %6356 = vmatpush1.bf16.msra.mxu0 %v6195
    %6357 = vmatprep.subr.bf16.mxu0 0
    %6358 = vmatpush1.bf16.msra.mxu0 %v6194
    %6359 = vmatprep.subr.bf16.mxu0 0
    %6360 = vmatpush2.bf16.msra.mxu0 %v6209
    %6361 = vmatprep.subr.bf16.mxu0 0
    %6362 = vmatpush2.bf16.msra.mxu0 %v6208
    %6363 = vmatprep.subr.bf16.mxu0 0
    %6364 = vmatpush2.bf16.msra.mxu0 %v6207
    %6365 = vmatprep.subr.bf16.mxu0 0
    %6366 = vmatpush2.bf16.msra.mxu0 %v6206
    %6367 = vmatprep.subr.bf16.mxu0 0
    %6368 = vmatpush2.bf16.msra.mxu0 %v6205
    %6369 = vmatprep.subr.bf16.mxu0 0
    %6370 = vmatpush2.bf16.msra.mxu0 %v6204
    %6371 = vmatprep.subr.bf16.mxu0 0
    %6372 = vmatpush2.bf16.msra.mxu0 %v6203
    %6373 = vmatprep.subr.bf16.mxu0 0
    %6374 = vmatpush2.bf16.msra.mxu0 %v6202
    %6375 = vmatprep.mubr.bf16.mxu0 %v5859
    %6376 = vmatmul.mubr.bf16.gmra.mxu0 %v5858
    %v6377 = vpop.f32.mrf.mxu0
    %v6378 = vadd.f32 %v6338, %v6377
    %v6379 = vpop.f32.mrf.mxu0
    %v6380 = vpop.f32.mrf.mxu0
    %v6381 = vpop.f32.mrf.mxu0
    %6382 = vdwg.mxu0
    %6383 = vmatprep.subr.bf16.mxu0 0
    %6384 = vmatpush1.bf16.msra.mxu0 0
    %6385 = vmatprep.subr.bf16.mxu0 0
    %6386 = vmatpush1.bf16.msra.mxu0 0
    %6387 = vmatprep.subr.bf16.mxu0 0
    %6388 = vmatpush1.bf16.msra.mxu0 0
    %6389 = vmatprep.subr.bf16.mxu0 0
    %6390 = vmatpush1.bf16.msra.mxu0 0
    %6391 = vmatprep.subr.bf16.mxu0 0
    %6392 = vmatpush1.bf16.msra.mxu0 0
    %6393 = vmatprep.subr.bf16.mxu0 0
    %6394 = vmatpush1.bf16.msra.mxu0 0
    %6395 = vmatprep.subr.bf16.mxu0 0
    %6396 = vmatpush1.bf16.msra.mxu0 0
    %6397 = vmatprep.subr.bf16.mxu0 0
    %6398 = vmatpush1.bf16.msra.mxu0 %v6210
    %6399 = vmatprep.subr.bf16.mxu0 0
    %6400 = vmatpush2.bf16.msra.mxu0 0
    %6401 = vmatprep.subr.bf16.mxu0 0
    %6402 = vmatpush2.bf16.msra.mxu0 0
    %6403 = vmatprep.subr.bf16.mxu0 0
    %6404 = vmatpush2.bf16.msra.mxu0 0
    %6405 = vmatprep.subr.bf16.mxu0 0
    %6406 = vmatpush2.bf16.msra.mxu0 0
    %6407 = vmatprep.subr.bf16.mxu0 0
    %6408 = vmatpush2.bf16.msra.mxu0 0
    %6409 = vmatprep.subr.bf16.mxu0 0
    %6410 = vmatpush2.bf16.msra.mxu0 0
    %6411 = vmatprep.subr.bf16.mxu0 0
    %6412 = vmatpush2.bf16.msra.mxu0 0
    %6413 = vmatprep.subr.bf16.mxu0 0
    %6414 = vmatpush2.bf16.msra.mxu0 0
    %6415 = vmatprep.mubr.bf16.mxu0 0
    %6416 = vmatmul.mubr.bf16.gmra.mxu0 %v6261
    %v6417 = vpop.f32.mrf.mxu0
    %v6418 = vadd.f32 %v6378, %v6417
    %v6419 = vpop.f32.mrf.mxu0
    %v6420 = vpop.f32.mrf.mxu0
    %v6421 = vpop.f32.mrf.mxu0
    %6422 = vdwg.mxu0
    %6423 = vst [vmem:[#allocation14] sm:$0xff] %v6418
    // Predicated region
    $region58: #{tpu_custom_call.1} parent=1 // pred_check
      _
    $region59: #{tpu_custom_call.1} parent=1 // pred_check_branch
      %6425 = sbr.rel (0) target = $region61
    $region60: #{tpu_custom_call.1} parent=1 // pred_region
      %s6427 = ssub.s32 128, 128
      %6428 = vsyncadd [#allocation4], %s6427
      %s6430 = sshll.u32 [#allocation14], 4
      %s6431 = int_to_ptr.vmem [resolvable:$true] %s6430
      %6433 = dma.vmem_to_hbm [thread:$0]  %s6431, 128, %s7, [#allocation4]
    $region61: #{tpu_custom_call.1} parent=1 // pred_fallthru
      _
    // Predicated region
    $region62: #{tpu_custom_call.1} parent=1 // pred_check
      _
    $region63: #{tpu_custom_call.1} parent=1 // pred_check_branch
      %6435 = sbr.rel (0) target = $region65
    $region64: #{tpu_custom_call.1} parent=1 // pred_region
      %6436 = dma.done [#allocation4], 128
    $region65: #{tpu_custom_call.1} parent=1 // pred_fallthru
      _
    %6437 = vsyncpa [#allocation3], 1
    %6438 = vsyncpa [#allocation6], 1
    %6439 = vsyncpa [#allocation9], 1
    %6440 = vsyncpa [#allocation12], 1
    %6441 = vsyncpa [#allocation4], 1

</llo_original>
